<compile_context>
chip_gen: v6e
topology: v6e:2x2x1
jax: 0.10.0
libtpu: 0.0.40
codegen_flags: <defaults>
</compile_context>

<pallas_src>
import math

import jax
import jax.numpy as jnp
from jax import lax
from jax.experimental import pallas as pl
from jax.experimental.pallas import tpu as pltpu

EMBED = 32                      # embed_dim (small demo size)
N_HEAD = 4                      # num_heads
HEAD_DIM = EMBED // N_HEAD
PADDED_HEADS = 8                # head axis padded to one sublane tile

# Row offsets of the fused weight slab (all sections start on 8-row boundaries).
R_DEP = 0                       # W_ctx (depot part),   E rows
R_CUR = EMBED                   # W_ctx (cur-pos part), E rows
R_SCAL = 2 * EMBED              # [ra, rc, cost, maxd, remd, 0,0,0] rows, 8 rows
R_Q = 2 * EMBED + 8             # W_q,                  E rows
R_ATTK = 3 * EMBED + 8          # W_kv (K half) / sqrt(hd), E rows
R_ATTV = 4 * EMBED + 8          # W_kv (V half)^T,      E rows
R_OUT = 5 * EMBED + 8           # W_out,                E rows
R_KSHA = 6 * EMBED + 8          # W_k / sqrt(E),        E rows
R_HSEL = 7 * EMBED + 8          # head-selector mask,   PADDED_HEADS rows
SLAB_ROWS = R_HSEL + PADDED_HEADS   # 240


def _round_up(x, m):
    return ((x + m - 1) // m) * m


def city_decoder_kernel(idx_ref, smalls_ref, ce_ref, mask_ref, slab_ref, out_ref,
                        depot_scr, cur_scr):
    Bt, Np, E = ce_ref.shape
    HP = PADDED_HEADS
    f32 = jnp.float32

    # --- depot / cur-pos gather: SMEM-prefetched indices + dynamic row slices -------
    base = pl.program_id(0) * Bt
    for b in range(Bt):
        d = idx_ref[2 * (base + b)]
        c = idx_ref[2 * (base + b) + 1]
        depot_scr[pl.ds(b, 1), :] = ce_ref[b, pl.ds(d, 1), :]
        cur_scr[pl.ds(b, 1), :] = ce_ref[b, pl.ds(c, 1), :]

    ce = ce_ref[...]                                   # (Bt, Np, E)
    mask = mask_ref[...]                               # (Bt, Np)   1.0 == masked
    slab = slab_ref[...]                               # (240, E)   fused weights
    graph = smalls_ref[:, 0:E]                         # (Bt, E)
    scal = smalls_ref[:, E:E + 8]                      # (Bt, 8)

    # --- fused project_step_context + dis_embed + graph_embed -----------------------
    q = (jnp.dot(depot_scr[...], slab[R_DEP:R_DEP + E, :], preferred_element_type=f32)
         + jnp.dot(cur_scr[...], slab[R_CUR:R_CUR + E, :], preferred_element_type=f32)
         + jnp.dot(scal, slab[R_SCAL:R_SCAL + 8, :], preferred_element_type=f32)
         + graph)                                      # (Bt, E)

    # --- multi-head cross attention; K/V projections folded onto the query side -----
    hsel = slab[R_HSEL:R_HSEL + HP, :]                 # (HP, E), rows >= n_head are 0
    Q = jnp.dot(q, slab[R_Q:R_Q + E, :], preferred_element_type=f32)        # (Bt, E)
    qhm = Q[:, None, :] * hsel[None, :, :]             # (Bt, HP, E)
    qk = jnp.dot(qhm.reshape(Bt * HP, E), slab[R_ATTK:R_ATTK + E, :],
                 preferred_element_type=f32).reshape(Bt, HP, E)             # (Bt, HP, E)
    s = jnp.einsum('bhf,bnf->bhn', qk, ce, preferred_element_type=f32)      # (Bt, HP, Np)
    s = jnp.where(mask[:, None, :] > 0.5, -jnp.inf, s)
    m = jnp.max(s, axis=-1, keepdims=True)
    ex = jnp.exp(s - m)
    p = ex / jnp.sum(ex, axis=-1, keepdims=True)
    # TODO(synk): attention dropout (p=0.1) is identity here (eval mode).
    pc = jnp.einsum('bhn,bnf->bhf', p, ce, preferred_element_type=f32)      # (Bt, HP, E)
    ctxf = jnp.dot(pc.reshape(Bt * HP, E), slab[R_ATTV:R_ATTV + E, :],
                   preferred_element_type=f32).reshape(Bt, HP, E)
    ctx = jnp.sum(ctxf * hsel[None, :, :], axis=1)                          # (Bt, E)
    q2 = jnp.dot(ctx, slab[R_OUT:R_OUT + E, :], preferred_element_type=f32)

    # --- single-head pointer logits (K_sha folded into the query; VPU reduce) -------
    qk2 = jnp.dot(q2, slab[R_KSHA:R_KSHA + E, :], preferred_element_type=f32)  # (Bt, E)
    lg = jnp.sum(qk2[:, None, :] * ce, axis=-1)                             # (Bt, Np)
    lg = jnp.tanh(lg) * 10.0
    out_ref[...] = jnp.where(mask > 0.5, -jnp.inf, lg)


def city_decoder_forward(city_embed, graph_embed, mask_bool,
                         agent_id, cur_pos, remain_agent_ratio, remain_city_ratio,
                         agent_cost, max_distance, remain_max_distance, params,
                         block_b=64):
    B, N, E = city_embed.shape
    assert E == EMBED
    f32 = jnp.float32
    hd = HEAD_DIM

    Bt = _round_up(min(block_b, _round_up(B, 8)), 8)   # batch tile (multiple of 8)
    Bp = _round_up(B, Bt)                              # padded batch
    Np = _round_up(N, 128)                             # lane-dense key / logit axis
    assert Bp % Bt == 0

    # --- padded data inputs (padded cities masked; padded batch rows discarded) -----
    ce = jnp.zeros((Bp, Np, E), f32).at[:B, :N, :].set(city_embed.astype(f32))
    mask = jnp.zeros((Bp, Np), f32)
    mask = mask.at[:B, N:].set(1.0)
    mask = mask.at[:B, :N].set(mask_bool.astype(f32))

    smalls = jnp.zeros((Bp, E + 8), f32)               # [graph | ra rc cost maxd remd 0 0 0]
    smalls = smalls.at[:B, :E].set(graph_embed[:, 0, :].astype(f32))
    smalls = smalls.at[:B, E + 0].set(remain_agent_ratio.astype(f32))
    smalls = smalls.at[:B, E + 1].set(remain_city_ratio.astype(f32))
    smalls = smalls.at[:B, E + 2].set(agent_cost.astype(f32))
    smalls = smalls.at[:B, E + 3].set(max_distance.astype(f32))
    smalls = smalls.at[:B, E + 4].set(remain_max_distance.astype(f32))

    idx = jnp.zeros((Bp, 2), jnp.int32)
    idx = idx.at[:B, 0].set(agent_id.astype(jnp.int32) + 1)   # depot index
    idx = idx.at[:B, 1].set(cur_pos.astype(jnp.int32))        # current position
    idx_flat = idx.reshape(-1)                                # SMEM scalar prefetch

    # --- one fused weight slab (torch Linear weights are (out, in)) ------------------
    W_ctx, W_dis, W_kv, W_q, W_out, W_k = (params[k].astype(f32) for k in
                                           ("W_ctx", "W_dis", "W_kv", "W_q", "W_out", "W_k"))
    hsel = (jnp.arange(E)[None, :] // hd == jnp.arange(PADDED_HEADS)[:, None]).astype(f32)
    w_scal = jnp.concatenate([W_ctx[:, 2 * E:2 * E + 2].T,      # [ra; rc]
                              W_dis.T,                          # [cost; maxd; remd]
                              jnp.zeros((3, E), f32)], axis=0)  # padding rows
    slab = jnp.concatenate([
        W_ctx[:, :E].T,                  # R_DEP
        W_ctx[:, E:2 * E].T,             # R_CUR
        w_scal,                          # R_SCAL (8 rows)
        W_q.T,                           # R_Q
        W_kv[:E, :] / math.sqrt(hd),     # R_ATTK  (score scale folded in)
        W_kv[E:, :].T,                   # R_ATTV
        W_out.T,                         # R_OUT
        W_k / math.sqrt(E),              # R_KSHA  (pointer scale folded in)
        hsel,                            # R_HSEL (8 rows, last 4 zero)
    ], axis=0)                           # (240, E)
    assert slab.shape == (SLAB_ROWS, E)

    gm2 = lambda i, idx_ref: (i, 0)
    gm3 = lambda i, idx_ref: (i, 0, 0)
    wm = lambda i, idx_ref: (0, 0)

    grid_spec = pltpu.PrefetchScalarGridSpec(
        num_scalar_prefetch=1,
        grid=(Bp // Bt,),
        in_specs=[
            pl.BlockSpec((Bt, E + 8), gm2),        # merged graph | scalars
            pl.BlockSpec((Bt, Np, E), gm3),        # city_embed
            pl.BlockSpec((Bt, Np), gm2),           # mask (1.0 = masked)
            pl.BlockSpec((SLAB_ROWS, E), wm),      # fused weight slab
        ],
        out_specs=pl.BlockSpec((Bt, Np), gm2),     # lane/sublane-dense 2-D store
        scratch_shapes=[pltpu.VMEM((Bt, E), f32),  # gathered depot rows
                        pltpu.VMEM((Bt, E), f32)], # gathered cur-pos rows
    )

    out = pl.pallas_call(
        city_decoder_kernel,
        out_shape=jax.ShapeDtypeStruct((Bp, Np), jnp.float32),
        grid_spec=grid_spec,
        compiler_params=pltpu.CompilerParams(
            dimension_semantics=("parallel",),
            vmem_limit_bytes=32 * 1024 * 1024),
    )(idx_flat, smalls, ce, mask, slab)
    return out[:B, None, :N]


def reference_forward(city_embed, graph_embed, mask_bool, agent_id, cur_pos,
                      ra, rc, cost, maxd, remd, params):
    """Pure-JAX mirror of the PyTorch forward (eval-mode dropout)."""
    B, N, E = city_embed.shape
    hd = E // N_HEAD
    bidx = jnp.arange(B)
    depot = city_embed[bidx, agent_id + 1]
    cur = city_embed[bidx, cur_pos]
    xcat = jnp.concatenate([depot, cur, ra[:, None], rc[:, None]], axis=-1)
    step_ctx = xcat @ params["W_ctx"].T
    dcat = jnp.stack([cost, maxd, remd], axis=-1)
    dis = dcat @ params["W_dis"].T
    q = step_ctx[:, None, :] + graph_embed + dis[:, None, :]
    KV = city_embed @ params["W_kv"].T
    K, V = KV[..., :E], KV[..., E:]
    Q = q @ params["W_q"].T
    Qh = Q.reshape(B, 1, N_HEAD, hd).transpose(0, 2, 1, 3)
    Kh = K.reshape(B, N, N_HEAD, hd).transpose(0, 2, 3, 1)
    Vh = V.reshape(B, N, N_HEAD, hd).transpose(0, 2, 1, 3)
    score = (Qh @ Kh) / math.sqrt(hd)
    score = jnp.where(mask_bool[:, None, None, :], -jnp.inf, score)
    p = jax.nn.softmax(score, axis=-1)
    ctx = (p @ Vh).transpose(0, 2, 1, 3).reshape(B, 1, E)
    q2 = ctx @ params["W_out"].T
    Ksha = city_embed @ params["W_k"].T
    logits = jnp.einsum("bqe,bne->bqn", q2, Ksha) / math.sqrt(E)
    logits = jnp.tanh(logits) * 10.0
    logits = jnp.where(mask_bool[:, None, :], -jnp.inf, logits)
    return logits


if __name__ == "__main__":
    B, N, E = 2, 8, EMBED
    key = jax.random.PRNGKey(0)
    ks = jax.random.split(key, 16)

    def init_w(k, out_dim, in_dim):
        return (jax.random.normal(k, (out_dim, in_dim), jnp.float32)
                / math.sqrt(in_dim))

    params = {
        "W_ctx": init_w(ks[0], E, 2 * E + 2),   # project_step_context
        "W_dis": init_w(ks[1], E, 3),           # dis_embed
        "W_kv":  init_w(ks[2], 2 * E, E),       # cross_att.W_kv
        "W_q":   init_w(ks[3], E, E),           # cross_att.W_q
        "W_out": init_w(ks[4], E, E),           # cross_att.out
        "W_k":   init_w(ks[5], E, E),           # out.W_k (single-head)
    }

    city_embed = jax.random.normal(ks[6], (B, N, E), jnp.float32)
    graph_embed = jax.random.normal(ks[7], (B, 1, E), jnp.float32)
    agent_id = jnp.array([0, 2], jnp.int32)          # depot index = agent_id + 1 < N
    cur_pos = jnp.array([3, 5], jnp.int32)
    remain_agent_ratio = jax.random.uniform(ks[8], (B,), jnp.float32)
    remain_city_ratio = jax.random.uniform(ks[9], (B,), jnp.float32)
    agent_cost = jax.random.uniform(ks[10], (B,), jnp.float32)
    max_distance = jax.random.uniform(ks[11], (B,), jnp.float32) + 1.0
    remain_max_distance = jax.random.uniform(ks[12], (B,), jnp.float32)
    mask_bool = jnp.zeros((B, N), bool).at[0, 1].set(True).at[1, 3].set(True).at[1, 5].set(True)

    out = city_decoder_forward(city_embed, graph_embed, mask_bool,
                               agent_id, cur_pos, remain_agent_ratio, remain_city_ratio,
                               agent_cost, max_distance, remain_max_distance, params)
    out = jax.block_until_ready(out)

    ref = reference_forward(city_embed, graph_embed, mask_bool, agent_id, cur_pos,
                            remain_agent_ratio, remain_city_ratio,
                            agent_cost, max_distance, remain_max_distance, params)
    ref = jax.block_until_ready(ref)

    finite = jnp.isfinite(ref)
    close = jnp.abs(out - ref) <= (1e-3 + 1e-3 * jnp.abs(ref))
    ok = bool(jnp.all(jnp.where(finite, close, out == ref)))
    if not ok:
        raise AssertionError("Pallas kernel does not match reference")
    print("KERNEL_OK")
</pallas_src>

<mosaic_0001>
module attributes {stable_mosaic.version = 11 : i64} {
  func.func @city_decoder_kernel(%arg0: i32, %arg1: memref<16xi32, #tpu.memory_space<smem>>, %arg2: memref<8x40xf32, #tpu.memory_space<vmem>>, %arg3: memref<8x128x32xf32, #tpu.memory_space<vmem>>, %arg4: memref<8x128xf32, #tpu.memory_space<vmem>>, %arg5: memref<240x32xf32, #tpu.memory_space<vmem>>, %arg6: memref<8x128xf32, #tpu.memory_space<vmem>>, %arg7: memref<8x32xf32, #tpu.memory_space<vmem>>, %arg8: memref<8x32xf32, #tpu.memory_space<vmem>>) attributes {dimension_semantics = [#tpu.dimension_semantics<parallel>], iteration_bounds = array<i64: 1>, scalar_prefetch = 1 : i64, scratch_operands = 2 : i64, tpu.core_type = #tpu.core_type<tc>, window_params = [{transform_indices = @transform_0, window_bounds = array<i64: 8, 40>}, {transform_indices = @transform_1, window_bounds = array<i64: 8, 128, 32>}, {transform_indices = @transform_2, window_bounds = array<i64: 8, 128>}, {pipeline_mode = #tpu.pipeline_mode<synchronous>, transform_indices = @transform_3, window_bounds = array<i64: 240, 32>}, {transform_indices = @transform_4, window_bounds = array<i64: 8, 128>}]} {
    %c8_i32 = arith.constant 8 : i32
    %0 = arith.muli %arg0, %c8_i32 : i32
    %c0_i32 = arith.constant 0 : i32
    %1 = arith.addi %0, %c0_i32 : i32
    %c2_i32 = arith.constant 2 : i32
    %2 = arith.muli %c2_i32, %1 : i32
    %3 = arith.index_cast %2 : i32 to index
    %4 = memref.load %arg1[%3] : memref<16xi32, #tpu.memory_space<smem>>
    %c0_i32_0 = arith.constant 0 : i32
    %5 = arith.addi %0, %c0_i32_0 : i32
    %c2_i32_1 = arith.constant 2 : i32
    %6 = arith.muli %c2_i32_1, %5 : i32
    %c1_i32 = arith.constant 1 : i32
    %7 = arith.addi %6, %c1_i32 : i32
    %8 = arith.index_cast %7 : i32 to index
    %9 = memref.load %arg1[%8] : memref<16xi32, #tpu.memory_space<smem>>
    %c0 = arith.constant 0 : index
    %10 = arith.index_cast %4 : i32 to index
    %c0_2 = arith.constant 0 : index
    %11 = vector.load %arg3[%c0, %10, %c0_2] : memref<8x128x32xf32, #tpu.memory_space<vmem>>, vector<1x1x32xf32>
    %12 = vector.shape_cast %11 : vector<1x1x32xf32> to vector<1x32xf32>
    %c0_3 = arith.constant 0 : index
    %c0_4 = arith.constant 0 : index
    %13 = vector.load %arg7[%c0_3, %c0_4] : memref<8x32xf32, #tpu.memory_space<vmem>>, vector<1x32xf32>
    tpu.vector_store %arg7[%c0_3, %c0_4], %12 {strides = array<i32>} : memref<8x32xf32, #tpu.memory_space<vmem>>, vector<1x32xf32>,
    %c0_5 = arith.constant 0 : index
    %14 = arith.index_cast %9 : i32 to index
    %c0_6 = arith.constant 0 : index
    %15 = vector.load %arg3[%c0_5, %14, %c0_6] : memref<8x128x32xf32, #tpu.memory_space<vmem>>, vector<1x1x32xf32>
    %16 = vector.shape_cast %15 : vector<1x1x32xf32> to vector<1x32xf32>
    %c0_7 = arith.constant 0 : index
    %c0_8 = arith.constant 0 : index
    %17 = vector.load %arg8[%c0_7, %c0_8] : memref<8x32xf32, #tpu.memory_space<vmem>>, vector<1x32xf32>
    tpu.vector_store %arg8[%c0_7, %c0_8], %16 {strides = array<i32>} : memref<8x32xf32, #tpu.memory_space<vmem>>, vector<1x32xf32>,
    %c1_i32_9 = arith.constant 1 : i32
    %18 = arith.addi %0, %c1_i32_9 : i32
    %c2_i32_10 = arith.constant 2 : i32
    %19 = arith.muli %c2_i32_10, %18 : i32
    %20 = arith.index_cast %19 : i32 to index
    %21 = memref.load %arg1[%20] : memref<16xi32, #tpu.memory_space<smem>>
    %c1_i32_11 = arith.constant 1 : i32
    %22 = arith.addi %0, %c1_i32_11 : i32
    %c2_i32_12 = arith.constant 2 : i32
    %23 = arith.muli %c2_i32_12, %22 : i32
    %c1_i32_13 = arith.constant 1 : i32
    %24 = arith.addi %23, %c1_i32_13 : i32
    %25 = arith.index_cast %24 : i32 to index
    %26 = memref.load %arg1[%25] : memref<16xi32, #tpu.memory_space<smem>>
    %c1 = arith.constant 1 : index
    %27 = arith.index_cast %21 : i32 to index
    %c0_14 = arith.constant 0 : index
    %28 = vector.load %arg3[%c1, %27, %c0_14] : memref<8x128x32xf32, #tpu.memory_space<vmem>>, vector<1x1x32xf32>
    %29 = vector.shape_cast %28 : vector<1x1x32xf32> to vector<1x32xf32>
    %c1_15 = arith.constant 1 : index
    %c0_16 = arith.constant 0 : index
    %30 = vector.load %arg7[%c1_15, %c0_16] : memref<8x32xf32, #tpu.memory_space<vmem>>, vector<1x32xf32>
    tpu.vector_store %arg7[%c1_15, %c0_16], %29 {strides = array<i32>} : memref<8x32xf32, #tpu.memory_space<vmem>>, vector<1x32xf32>,
    %c1_17 = arith.constant 1 : index
    %31 = arith.index_cast %26 : i32 to index
    %c0_18 = arith.constant 0 : index
    %32 = vector.load %arg3[%c1_17, %31, %c0_18] : memref<8x128x32xf32, #tpu.memory_space<vmem>>, vector<1x1x32xf32>
    %33 = vector.shape_cast %32 : vector<1x1x32xf32> to vector<1x32xf32>
    %c1_19 = arith.constant 1 : index
    %c0_20 = arith.constant 0 : index
    %34 = vector.load %arg8[%c1_19, %c0_20] : memref<8x32xf32, #tpu.memory_space<vmem>>, vector<1x32xf32>
    tpu.vector_store %arg8[%c1_19, %c0_20], %33 {strides = array<i32>} : memref<8x32xf32, #tpu.memory_space<vmem>>, vector<1x32xf32>,
    %c2_i32_21 = arith.constant 2 : i32
    %35 = arith.addi %0, %c2_i32_21 : i32
    %c2_i32_22 = arith.constant 2 : i32
    %36 = arith.muli %c2_i32_22, %35 : i32
    %37 = arith.index_cast %36 : i32 to index
    %38 = memref.load %arg1[%37] : memref<16xi32, #tpu.memory_space<smem>>
    %c2_i32_23 = arith.constant 2 : i32
    %39 = arith.addi %0, %c2_i32_23 : i32
    %c2_i32_24 = arith.constant 2 : i32
    %40 = arith.muli %c2_i32_24, %39 : i32
    %c1_i32_25 = arith.constant 1 : i32
    %41 = arith.addi %40, %c1_i32_25 : i32
    %42 = arith.index_cast %41 : i32 to index
    %43 = memref.load %arg1[%42] : memref<16xi32, #tpu.memory_space<smem>>
    %c2 = arith.constant 2 : index
    %44 = arith.index_cast %38 : i32 to index
    %c0_26 = arith.constant 0 : index
    %45 = vector.load %arg3[%c2, %44, %c0_26] : memref<8x128x32xf32, #tpu.memory_space<vmem>>, vector<1x1x32xf32>
    %46 = vector.shape_cast %45 : vector<1x1x32xf32> to vector<1x32xf32>
    %c2_27 = arith.constant 2 : index
    %c0_28 = arith.constant 0 : index
    %47 = vector.load %arg7[%c2_27, %c0_28] : memref<8x32xf32, #tpu.memory_space<vmem>>, vector<1x32xf32>
    tpu.vector_store %arg7[%c2_27, %c0_28], %46 {strides = array<i32>} : memref<8x32xf32, #tpu.memory_space<vmem>>, vector<1x32xf32>,
    %c2_29 = arith.constant 2 : index
    %48 = arith.index_cast %43 : i32 to index
    %c0_30 = arith.constant 0 : index
    %49 = vector.load %arg3[%c2_29, %48, %c0_30] : memref<8x128x32xf32, #tpu.memory_space<vmem>>, vector<1x1x32xf32>
    %50 = vector.shape_cast %49 : vector<1x1x32xf32> to vector<1x32xf32>
    %c2_31 = arith.constant 2 : index
    %c0_32 = arith.constant 0 : index
    %51 = vector.load %arg8[%c2_31, %c0_32] : memref<8x32xf32, #tpu.memory_space<vmem>>, vector<1x32xf32>
    tpu.vector_store %arg8[%c2_31, %c0_32], %50 {strides = array<i32>} : memref<8x32xf32, #tpu.memory_space<vmem>>, vector<1x32xf32>,
    %c3_i32 = arith.constant 3 : i32
    %52 = arith.addi %0, %c3_i32 : i32
    %c2_i32_33 = arith.constant 2 : i32
    %53 = arith.muli %c2_i32_33, %52 : i32
    %54 = arith.index_cast %53 : i32 to index
    %55 = memref.load %arg1[%54] : memref<16xi32, #tpu.memory_space<smem>>
    %c3_i32_34 = arith.constant 3 : i32
    %56 = arith.addi %0, %c3_i32_34 : i32
    %c2_i32_35 = arith.constant 2 : i32
    %57 = arith.muli %c2_i32_35, %56 : i32
    %c1_i32_36 = arith.constant 1 : i32
    %58 = arith.addi %57, %c1_i32_36 : i32
    %59 = arith.index_cast %58 : i32 to index
    %60 = memref.load %arg1[%59] : memref<16xi32, #tpu.memory_space<smem>>
    %c3 = arith.constant 3 : index
    %61 = arith.index_cast %55 : i32 to index
    %c0_37 = arith.constant 0 : index
    %62 = vector.load %arg3[%c3, %61, %c0_37] : memref<8x128x32xf32, #tpu.memory_space<vmem>>, vector<1x1x32xf32>
    %63 = vector.shape_cast %62 : vector<1x1x32xf32> to vector<1x32xf32>
    %c3_38 = arith.constant 3 : index
    %c0_39 = arith.constant 0 : index
    %64 = vector.load %arg7[%c3_38, %c0_39] : memref<8x32xf32, #tpu.memory_space<vmem>>, vector<1x32xf32>
    tpu.vector_store %arg7[%c3_38, %c0_39], %63 {strides = array<i32>} : memref<8x32xf32, #tpu.memory_space<vmem>>, vector<1x32xf32>,
    %c3_40 = arith.constant 3 : index
    %65 = arith.index_cast %60 : i32 to index
    %c0_41 = arith.constant 0 : index
    %66 = vector.load %arg3[%c3_40, %65, %c0_41] : memref<8x128x32xf32, #tpu.memory_space<vmem>>, vector<1x1x32xf32>
    %67 = vector.shape_cast %66 : vector<1x1x32xf32> to vector<1x32xf32>
    %c3_42 = arith.constant 3 : index
    %c0_43 = arith.constant 0 : index
    %68 = vector.load %arg8[%c3_42, %c0_43] : memref<8x32xf32, #tpu.memory_space<vmem>>, vector<1x32xf32>
    tpu.vector_store %arg8[%c3_42, %c0_43], %67 {strides = array<i32>} : memref<8x32xf32, #tpu.memory_space<vmem>>, vector<1x32xf32>,
    %c4_i32 = arith.constant 4 : i32
    %69 = arith.addi %0, %c4_i32 : i32
    %c2_i32_44 = arith.constant 2 : i32
    %70 = arith.muli %c2_i32_44, %69 : i32
    %71 = arith.index_cast %70 : i32 to index
    %72 = memref.load %arg1[%71] : memref<16xi32, #tpu.memory_space<smem>>
    %c4_i32_45 = arith.constant 4 : i32
    %73 = arith.addi %0, %c4_i32_45 : i32
    %c2_i32_46 = arith.constant 2 : i32
    %74 = arith.muli %c2_i32_46, %73 : i32
    %c1_i32_47 = arith.constant 1 : i32
    %75 = arith.addi %74, %c1_i32_47 : i32
    %76 = arith.index_cast %75 : i32 to index
    %77 = memref.load %arg1[%76] : memref<16xi32, #tpu.memory_space<smem>>
    %c4 = arith.constant 4 : index
    %78 = arith.index_cast %72 : i32 to index
    %c0_48 = arith.constant 0 : index
    %79 = vector.load %arg3[%c4, %78, %c0_48] : memref<8x128x32xf32, #tpu.memory_space<vmem>>, vector<1x1x32xf32>
    %80 = vector.shape_cast %79 : vector<1x1x32xf32> to vector<1x32xf32>
    %c4_49 = arith.constant 4 : index
    %c0_50 = arith.constant 0 : index
    %81 = vector.load %arg7[%c4_49, %c0_50] : memref<8x32xf32, #tpu.memory_space<vmem>>, vector<1x32xf32>
    tpu.vector_store %arg7[%c4_49, %c0_50], %80 {strides = array<i32>} : memref<8x32xf32, #tpu.memory_space<vmem>>, vector<1x32xf32>,
    %c4_51 = arith.constant 4 : index
    %82 = arith.index_cast %77 : i32 to index
    %c0_52 = arith.constant 0 : index
    %83 = vector.load %arg3[%c4_51, %82, %c0_52] : memref<8x128x32xf32, #tpu.memory_space<vmem>>, vector<1x1x32xf32>
    %84 = vector.shape_cast %83 : vector<1x1x32xf32> to vector<1x32xf32>
    %c4_53 = arith.constant 4 : index
    %c0_54 = arith.constant 0 : index
    %85 = vector.load %arg8[%c4_53, %c0_54] : memref<8x32xf32, #tpu.memory_space<vmem>>, vector<1x32xf32>
    tpu.vector_store %arg8[%c4_53, %c0_54], %84 {strides = array<i32>} : memref<8x32xf32, #tpu.memory_space<vmem>>, vector<1x32xf32>,
    %c5_i32 = arith.constant 5 : i32
    %86 = arith.addi %0, %c5_i32 : i32
    %c2_i32_55 = arith.constant 2 : i32
    %87 = arith.muli %c2_i32_55, %86 : i32
    %88 = arith.index_cast %87 : i32 to index
    %89 = memref.load %arg1[%88] : memref<16xi32, #tpu.memory_space<smem>>
    %c5_i32_56 = arith.constant 5 : i32
    %90 = arith.addi %0, %c5_i32_56 : i32
    %c2_i32_57 = arith.constant 2 : i32
    %91 = arith.muli %c2_i32_57, %90 : i32
    %c1_i32_58 = arith.constant 1 : i32
    %92 = arith.addi %91, %c1_i32_58 : i32
    %93 = arith.index_cast %92 : i32 to index
    %94 = memref.load %arg1[%93] : memref<16xi32, #tpu.memory_space<smem>>
    %c5 = arith.constant 5 : index
    %95 = arith.index_cast %89 : i32 to index
    %c0_59 = arith.constant 0 : index
    %96 = vector.load %arg3[%c5, %95, %c0_59] : memref<8x128x32xf32, #tpu.memory_space<vmem>>, vector<1x1x32xf32>
    %97 = vector.shape_cast %96 : vector<1x1x32xf32> to vector<1x32xf32>
    %c5_60 = arith.constant 5 : index
    %c0_61 = arith.constant 0 : index
    %98 = vector.load %arg7[%c5_60, %c0_61] : memref<8x32xf32, #tpu.memory_space<vmem>>, vector<1x32xf32>
    tpu.vector_store %arg7[%c5_60, %c0_61], %97 {strides = array<i32>} : memref<8x32xf32, #tpu.memory_space<vmem>>, vector<1x32xf32>,
    %c5_62 = arith.constant 5 : index
    %99 = arith.index_cast %94 : i32 to index
    %c0_63 = arith.constant 0 : index
    %100 = vector.load %arg3[%c5_62, %99, %c0_63] : memref<8x128x32xf32, #tpu.memory_space<vmem>>, vector<1x1x32xf32>
    %101 = vector.shape_cast %100 : vector<1x1x32xf32> to vector<1x32xf32>
    %c5_64 = arith.constant 5 : index
    %c0_65 = arith.constant 0 : index
    %102 = vector.load %arg8[%c5_64, %c0_65] : memref<8x32xf32, #tpu.memory_space<vmem>>, vector<1x32xf32>
    tpu.vector_store %arg8[%c5_64, %c0_65], %101 {strides = array<i32>} : memref<8x32xf32, #tpu.memory_space<vmem>>, vector<1x32xf32>,
    %c6_i32 = arith.constant 6 : i32
    %103 = arith.addi %0, %c6_i32 : i32
    %c2_i32_66 = arith.constant 2 : i32
    %104 = arith.muli %c2_i32_66, %103 : i32
    %105 = arith.index_cast %104 : i32 to index
    %106 = memref.load %arg1[%105] : memref<16xi32, #tpu.memory_space<smem>>
    %c6_i32_67 = arith.constant 6 : i32
    %107 = arith.addi %0, %c6_i32_67 : i32
    %c2_i32_68 = arith.constant 2 : i32
    %108 = arith.muli %c2_i32_68, %107 : i32
    %c1_i32_69 = arith.constant 1 : i32
    %109 = arith.addi %108, %c1_i32_69 : i32
    %110 = arith.index_cast %109 : i32 to index
    %111 = memref.load %arg1[%110] : memref<16xi32, #tpu.memory_space<smem>>
    %c6 = arith.constant 6 : index
    %112 = arith.index_cast %106 : i32 to index
    %c0_70 = arith.constant 0 : index
    %113 = vector.load %arg3[%c6, %112, %c0_70] : memref<8x128x32xf32, #tpu.memory_space<vmem>>, vector<1x1x32xf32>
    %114 = vector.shape_cast %113 : vector<1x1x32xf32> to vector<1x32xf32>
    %c6_71 = arith.constant 6 : index
    %c0_72 = arith.constant 0 : index
    %115 = vector.load %arg7[%c6_71, %c0_72] : memref<8x32xf32, #tpu.memory_space<vmem>>, vector<1x32xf32>
    tpu.vector_store %arg7[%c6_71, %c0_72], %114 {strides = array<i32>} : memref<8x32xf32, #tpu.memory_space<vmem>>, vector<1x32xf32>,
    %c6_73 = arith.constant 6 : index
    %116 = arith.index_cast %111 : i32 to index
    %c0_74 = arith.constant 0 : index
    %117 = vector.load %arg3[%c6_73, %116, %c0_74] : memref<8x128x32xf32, #tpu.memory_space<vmem>>, vector<1x1x32xf32>
    %118 = vector.shape_cast %117 : vector<1x1x32xf32> to vector<1x32xf32>
    %c6_75 = arith.constant 6 : index
    %c0_76 = arith.constant 0 : index
    %119 = vector.load %arg8[%c6_75, %c0_76] : memref<8x32xf32, #tpu.memory_space<vmem>>, vector<1x32xf32>
    tpu.vector_store %arg8[%c6_75, %c0_76], %118 {strides = array<i32>} : memref<8x32xf32, #tpu.memory_space<vmem>>, vector<1x32xf32>,
    %c7_i32 = arith.constant 7 : i32
    %120 = arith.addi %0, %c7_i32 : i32
    %c2_i32_77 = arith.constant 2 : i32
    %121 = arith.muli %c2_i32_77, %120 : i32
    %122 = arith.index_cast %121 : i32 to index
    %123 = memref.load %arg1[%122] : memref<16xi32, #tpu.memory_space<smem>>
    %c7_i32_78 = arith.constant 7 : i32
    %124 = arith.addi %0, %c7_i32_78 : i32
    %c2_i32_79 = arith.constant 2 : i32
    %125 = arith.muli %c2_i32_79, %124 : i32
    %c1_i32_80 = arith.constant 1 : i32
    %126 = arith.addi %125, %c1_i32_80 : i32
    %127 = arith.index_cast %126 : i32 to index
    %128 = memref.load %arg1[%127] : memref<16xi32, #tpu.memory_space<smem>>
    %c7 = arith.constant 7 : index
    %129 = arith.index_cast %123 : i32 to index
    %c0_81 = arith.constant 0 : index
    %130 = vector.load %arg3[%c7, %129, %c0_81] : memref<8x128x32xf32, #tpu.memory_space<vmem>>, vector<1x1x32xf32>
    %131 = vector.shape_cast %130 : vector<1x1x32xf32> to vector<1x32xf32>
    %c7_82 = arith.constant 7 : index
    %c0_83 = arith.constant 0 : index
    %132 = vector.load %arg7[%c7_82, %c0_83] : memref<8x32xf32, #tpu.memory_space<vmem>>, vector<1x32xf32>
    tpu.vector_store %arg7[%c7_82, %c0_83], %131 {strides = array<i32>} : memref<8x32xf32, #tpu.memory_space<vmem>>, vector<1x32xf32>,
    %c7_84 = arith.constant 7 : index
    %133 = arith.index_cast %128 : i32 to index
    %c0_85 = arith.constant 0 : index
    %134 = vector.load %arg3[%c7_84, %133, %c0_85] : memref<8x128x32xf32, #tpu.memory_space<vmem>>, vector<1x1x32xf32>
    %135 = vector.shape_cast %134 : vector<1x1x32xf32> to vector<1x32xf32>
    %c7_86 = arith.constant 7 : index
    %c0_87 = arith.constant 0 : index
    %136 = vector.load %arg8[%c7_86, %c0_87] : memref<8x32xf32, #tpu.memory_space<vmem>>, vector<1x32xf32>
    tpu.vector_store %arg8[%c7_86, %c0_87], %135 {strides = array<i32>} : memref<8x32xf32, #tpu.memory_space<vmem>>, vector<1x32xf32>,
    %c0_88 = arith.constant 0 : index
    %c0_89 = arith.constant 0 : index
    %c0_90 = arith.constant 0 : index
    %137 = vector.load %arg3[%c0_88, %c0_89, %c0_90] : memref<8x128x32xf32, #tpu.memory_space<vmem>>, vector<8x128x32xf32>
    %c0_91 = arith.constant 0 : index
    %c0_92 = arith.constant 0 : index
    %138 = vector.load %arg4[%c0_91, %c0_92] : memref<8x128xf32, #tpu.memory_space<vmem>>, vector<8x128xf32>
    %c0_93 = arith.constant 0 : index
    %c0_94 = arith.constant 0 : index
    %139 = vector.load %arg5[%c0_93, %c0_94] : memref<240x32xf32, #tpu.memory_space<vmem>>, vector<240x32xf32>
    %c0_95 = arith.constant 0 : index
    %c0_96 = arith.constant 0 : index
    %140 = vector.load %arg2[%c0_95, %c0_96] : memref<8x40xf32, #tpu.memory_space<vmem>>, vector<8x32xf32>
    %c0_97 = arith.constant 0 : index
    %c32 = arith.constant 32 : index
    %141 = vector.load %arg2[%c0_97, %c32] : memref<8x40xf32, #tpu.memory_space<vmem>>, vector<8x8xf32>
    %c0_98 = arith.constant 0 : index
    %c0_99 = arith.constant 0 : index
    %142 = vector.load %arg7[%c0_98, %c0_99] : memref<8x32xf32, #tpu.memory_space<vmem>>, vector<8x32xf32>
    %143 = vector.extract_strided_slice %139 {offsets = [0, 0], sizes = [32, 32], strides = [1, 1]} : vector<240x32xf32> to vector<32x32xf32>
    %cst = arith.constant dense<0.000000e+00> : vector<8x32xf32>
    %144 = tpu.matmul %142, %143, %cst {dimension_numbers = #tpu.dot_dimension_numbers<[1], [0], [0], [1], [0, 0, 1, 1], [], []>} : vector<8x32xf32>, vector<32x32xf32>, vector<8x32xf32> -> vector<8x32xf32>
    %c0_100 = arith.constant 0 : index
    %c0_101 = arith.constant 0 : index
    %145 = vector.load %arg8[%c0_100, %c0_101] : memref<8x32xf32, #tpu.memory_space<vmem>>, vector<8x32xf32>
    %146 = vector.extract_strided_slice %139 {offsets = [32, 0], sizes = [32, 32], strides = [1, 1]} : vector<240x32xf32> to vector<32x32xf32>
    %cst_102 = arith.constant dense<0.000000e+00> : vector<8x32xf32>
    %147 = tpu.matmul %145, %146, %cst_102 {dimension_numbers = #tpu.dot_dimension_numbers<[1], [0], [0], [1], [0, 0, 1, 1], [], []>} : vector<8x32xf32>, vector<32x32xf32>, vector<8x32xf32> -> vector<8x32xf32>
    %148 = arith.addf %144, %147 : vector<8x32xf32>
    %149 = vector.extract_strided_slice %139 {offsets = [64, 0], sizes = [8, 32], strides = [1, 1]} : vector<240x32xf32> to vector<8x32xf32>
    %cst_103 = arith.constant dense<0.000000e+00> : vector<8x32xf32>
    %150 = tpu.matmul %141, %149, %cst_103 {dimension_numbers = #tpu.dot_dimension_numbers<[1], [0], [0], [1], [0, 0, 1, 1], [], []>} : vector<8x8xf32>, vector<8x32xf32>, vector<8x32xf32> -> vector<8x32xf32>
    %151 = arith.addf %148, %150 : vector<8x32xf32>
    %152 = arith.addf %151, %140 : vector<8x32xf32>
    %153 = vector.extract_strided_slice %139 {offsets = [232, 0], sizes = [8, 32], strides = [1, 1]} : vector<240x32xf32> to vector<8x32xf32>
    %154 = vector.extract_strided_slice %139 {offsets = [72, 0], sizes = [32, 32], strides = [1, 1]} : vector<240x32xf32> to vector<32x32xf32>
    %cst_104 = arith.constant dense<0.000000e+00> : vector<8x32xf32>
    %155 = tpu.matmul %152, %154, %cst_104 {dimension_numbers = #tpu.dot_dimension_numbers<[1], [0], [0], [1], [0, 0, 1, 1], [], []>} : vector<8x32xf32>, vector<32x32xf32>, vector<8x32xf32> -> vector<8x32xf32>
    %156 = vector.shape_cast %155 : vector<8x32xf32> to vector<8x1x32xf32>
    %157 = vector.shape_cast %153 : vector<8x32xf32> to vector<1x8x32xf32>
    %158 = vector.broadcast %156 : vector<8x1x32xf32> to vector<8x8x32xf32>
    %159 = vector.broadcast %157 : vector<1x8x32xf32> to vector<8x8x32xf32>
    %160 = arith.mulf %158, %159 : vector<8x8x32xf32>
    %161 = vector.shape_cast %160 : vector<8x8x32xf32> to vector<64x32xf32>
    %162 = vector.extract_strided_slice %139 {offsets = [104, 0], sizes = [32, 32], strides = [1, 1]} : vector<240x32xf32> to vector<32x32xf32>
    %cst_105 = arith.constant dense<0.000000e+00> : vector<64x32xf32>
    %163 = tpu.matmul %161, %162, %cst_105 {dimension_numbers = #tpu.dot_dimension_numbers<[1], [0], [0], [1], [0, 0, 1, 1], [], []>} : vector<64x32xf32>, vector<32x32xf32>, vector<64x32xf32> -> vector<64x32xf32>
    %164 = vector.shape_cast %163 : vector<64x32xf32> to vector<8x8x32xf32>
    "tpu.trace_start"() <{level = 10 : i32, message = "bhf,bnf->bhn"}> : () -> ()
    %cst_106 = arith.constant dense<0.000000e+00> : vector<8x8x128xf32>
    %165 = tpu.matmul %164, %137, %cst_106 {dimension_numbers = #tpu.dot_dimension_numbers<[2], [2], [1], [1], [0, 0, 0, 1, 1, 1], [0], [0]>} : vector<8x8x32xf32>, vector<8x128x32xf32>, vector<8x8x128xf32> -> vector<8x8x128xf32>
    "tpu.trace_stop"() : () -> ()
    %166 = vector.shape_cast %138 : vector<8x128xf32> to vector<8x1x128xf32>
    %cst_107 = arith.constant 5.000000e-01 : f32
    %167 = vector.broadcast %cst_107 : f32 to vector<8x1x128xf32>
    %168 = arith.cmpf ogt, %166, %167 : vector<8x1x128xf32>
    %cst_108 = arith.constant 0xFF800000 : f32
    %169 = vector.shape_cast %168 : vector<8x1x128xi1> to vector<8x1x128xi1>
    %170 = vector.broadcast %169 : vector<8x1x128xi1> to vector<8x8x128xi1>
    %171 = vector.broadcast %cst_108 : f32 to vector<8x8x128xf32>
    %172 = arith.select %170, %171, %165 : vector<8x8x128xi1>, vector<8x8x128xf32>
    %cst_109 = arith.constant dense<0xFF800000> : vector<8x8xf32>
    %173 = vector.multi_reduction <maximumf>, %172, %cst_109 [2] : vector<8x8x128xf32> to vector<8x8xf32>
    %174 = vector.shape_cast %173 : vector<8x8xf32> to vector<8x8x1xf32>
    %175 = vector.broadcast %174 : vector<8x8x1xf32> to vector<8x8x128xf32>
    %176 = arith.subf %172, %175 : vector<8x8x128xf32>
    %177 = math.exp %176 : vector<8x8x128xf32>
    %cst_110 = arith.constant dense<0.000000e+00> : vector<8x8xf32>
    %178 = vector.multi_reduction <add>, %177, %cst_110 [2] : vector<8x8x128xf32> to vector<8x8xf32>
    %179 = vector.shape_cast %178 : vector<8x8xf32> to vector<8x8x1xf32>
    %180 = vector.broadcast %179 : vector<8x8x1xf32> to vector<8x8x128xf32>
    %181 = arith.divf %177, %180 : vector<8x8x128xf32>
    "tpu.trace_start"() <{level = 10 : i32, message = "bhn,bnf->bhf"}> : () -> ()
    %cst_111 = arith.constant dense<0.000000e+00> : vector<8x8x32xf32>
    %182 = tpu.matmul %181, %137, %cst_111 {dimension_numbers = #tpu.dot_dimension_numbers<[2], [1], [1], [2], [0, 0, 0, 1, 1, 2], [0], [0]>} : vector<8x8x128xf32>, vector<8x128x32xf32>, vector<8x8x32xf32> -> vector<8x8x32xf32>
    "tpu.trace_stop"() : () -> ()
    %183 = vector.shape_cast %182 : vector<8x8x32xf32> to vector<64x32xf32>
    %184 = vector.extract_strided_slice %139 {offsets = [136, 0], sizes = [32, 32], strides = [1, 1]} : vector<240x32xf32> to vector<32x32xf32>
    %cst_112 = arith.constant dense<0.000000e+00> : vector<64x32xf32>
    %185 = tpu.matmul %183, %184, %cst_112 {dimension_numbers = #tpu.dot_dimension_numbers<[1], [0], [0], [1], [0, 0, 1, 1], [], []>} : vector<64x32xf32>, vector<32x32xf32>, vector<64x32xf32> -> vector<64x32xf32>
    %186 = vector.shape_cast %185 : vector<64x32xf32> to vector<8x8x32xf32>
    %187 = vector.shape_cast %153 : vector<8x32xf32> to vector<1x8x32xf32>
    %188 = vector.broadcast %187 : vector<1x8x32xf32> to vector<8x8x32xf32>
    %189 = arith.mulf %186, %188 : vector<8x8x32xf32>
    %cst_113 = arith.constant dense<0.000000e+00> : vector<8x32xf32>
    %190 = vector.multi_reduction <add>, %189, %cst_113 [1] : vector<8x8x32xf32> to vector<8x32xf32>
    %191 = vector.extract_strided_slice %139 {offsets = [168, 0], sizes = [32, 32], strides = [1, 1]} : vector<240x32xf32> to vector<32x32xf32>
    %cst_114 = arith.constant dense<0.000000e+00> : vector<8x32xf32>
    %192 = tpu.matmul %190, %191, %cst_114 {dimension_numbers = #tpu.dot_dimension_numbers<[1], [0], [0], [1], [0, 0, 1, 1], [], []>} : vector<8x32xf32>, vector<32x32xf32>, vector<8x32xf32> -> vector<8x32xf32>
    %193 = vector.extract_strided_slice %139 {offsets = [200, 0], sizes = [32, 32], strides = [1, 1]} : vector<240x32xf32> to vector<32x32xf32>
    %cst_115 = arith.constant dense<0.000000e+00> : vector<8x32xf32>
    %194 = tpu.matmul %192, %193, %cst_115 {dimension_numbers = #tpu.dot_dimension_numbers<[1], [0], [0], [1], [0, 0, 1, 1], [], []>} : vector<8x32xf32>, vector<32x32xf32>, vector<8x32xf32> -> vector<8x32xf32>
    %195 = vector.shape_cast %194 : vector<8x32xf32> to vector<8x1x32xf32>
    %196 = vector.broadcast %195 : vector<8x1x32xf32> to vector<8x128x32xf32>
    %197 = arith.mulf %196, %137 : vector<8x128x32xf32>
    %cst_116 = arith.constant dense<0.000000e+00> : vector<8x128xf32>
    %198 = vector.multi_reduction <add>, %197, %cst_116 [2] : vector<8x128x32xf32> to vector<8x128xf32>
    %199 = math.tanh %198 : vector<8x128xf32>
    %cst_117 = arith.constant 1.000000e+01 : f32
    %200 = vector.broadcast %cst_117 : f32 to vector<8x128xf32>
    %201 = arith.mulf %199, %200 : vector<8x128xf32>
    %cst_118 = arith.constant 5.000000e-01 : f32
    %202 = vector.broadcast %cst_118 : f32 to vector<8x128xf32>
    %203 = arith.cmpf ogt, %138, %202 : vector<8x128xf32>
    %cst_119 = arith.constant 0xFF800000 : f32
    %204 = vector.broadcast %cst_119 : f32 to vector<8x128xf32>
    %205 = arith.select %203, %204, %201 : vector<8x128xi1>, vector<8x128xf32>
    %c0_120 = arith.constant 0 : index
    %c0_121 = arith.constant 0 : index
    %206 = vector.load %arg6[%c0_120, %c0_121] : memref<8x128xf32, #tpu.memory_space<vmem>>, vector<8x128xf32>
    tpu.vector_store %arg6[%c0_120, %c0_121], %205 {strides = array<i32>} : memref<8x128xf32, #tpu.memory_space<vmem>>, vector<8x128xf32>,
    return
  }
  func.func @transform_0(%arg0: i32, %arg1: memref<16xi32, #tpu.memory_space<smem>>) -> (i32, i32) {
    %c0_i32 = arith.constant 0 : i32
    %c0_i32_0 = arith.constant 0 : i32
    return %arg0, %c0_i32 : i32, i32
  }
  func.func @transform_1(%arg0: i32, %arg1: memref<16xi32, #tpu.memory_space<smem>>) -> (i32, i32, i32) {
    %c0_i32 = arith.constant 0 : i32
    %c0_i32_0 = arith.constant 0 : i32
    %c0_i32_1 = arith.constant 0 : i32
    return %arg0, %c0_i32, %c0_i32_0 : i32, i32, i32
  }
  func.func @transform_2(%arg0: i32, %arg1: memref<16xi32, #tpu.memory_space<smem>>) -> (i32, i32) {
    %c0_i32 = arith.constant 0 : i32
    %c0_i32_0 = arith.constant 0 : i32
    return %arg0, %c0_i32 : i32, i32
  }
  func.func @transform_3(%arg0: i32, %arg1: memref<16xi32, #tpu.memory_space<smem>>) -> (i32, i32) {
    %c0_i32 = arith.constant 0 : i32
    %c0_i32_0 = arith.constant 0 : i32
    %c0_i32_1 = arith.constant 0 : i32
    return %c0_i32, %c0_i32_0 : i32, i32
  }
  func.func @transform_4(%arg0: i32, %arg1: memref<16xi32, #tpu.memory_space<smem>>) -> (i32, i32) {
    %c0_i32 = arith.constant 0 : i32
    %c0_i32_0 = arith.constant 0 : i32
    return %arg0, %c0_i32 : i32, i32
  }
}

</mosaic_0001>

<llo_original>
// kernel: tpu_custom_call.1
$region0: #{tpu_custom_call.1}
  #allocation0 [shape = 'u32[]', space=smem, size = 0x4, offset = 0x4, fixed_abs, tag = 'smem constant byte address 0x4 - core index']
  #allocation1 [shape = 'u32[144,128]{1,0:T(1,128)}', space=vmem, size = 0x12000, scoped, tag = 'internal scratch']
  #allocation2 [shape = 'f32[8,32]{1,0:T(8,128)}', space=vmem, size = 0x1000, scoped, tag = 'scratch operand']
  #allocation3 [shape = 'f32[8,32]{1,0:T(8,128)}', space=vmem, size = 0x1000, scoped, tag = 'scratch operand']
  #allocation4 [shape = 's32[1]{0}', space=sflag, size = 0x4, scoped, tag = 'scoped memory for tpu_custom_call.1']
  #allocation5 [shape = 'u8[512]{0}', space=smem, size = 0x200, scoped, tag = 'prefetched SMEM operand 0']
  %s0 = inlined_call_operand.vmem [shape: s32[16], index: 0, kind: input, shape index: {}]
  %s1 = inlined_call_operand.vmem [shape: f32[8,40], index: 1, kind: input, shape index: {}]
  %s2 = inlined_call_operand.vmem [shape: f32[8,128,32], index: 2, kind: input, shape index: {}]
  %s3 = inlined_call_operand.vmem [shape: f32[8,128], index: 3, kind: input, shape index: {}]
  %s4 = inlined_call_operand.vmem [shape: f32[240,32], index: 4, kind: input, shape index: {}]
  %s5 = inlined_call_operand.hbm [shape: f32[8,128], index: 5, kind: output, shape index: {}]
  %s6 = sld [smem:[#allocation0]]
  $region26: #{tpu_custom_call.1} parent=0
    _
  %s8 = ssub.s32 1, %s6
  %s9 = scalar_select 0, %s8, %s6
  %s10 = sshll.u32 %s0, 4
  %s11 = int_to_ptr.vmem [resolvable:$true] %s10
  %13 = dma.vmem_to_smem %s11, 16, [#allocation5], [#allocation4]
  %14 = dma.done [#allocation4], 16
  %15 = sfence
  $region1: #{tpu_custom_call.1} parent=0
    #allocation6 [shape = 'u8[4096]{0}', space=vmem, size = 0x1000, scoped, tag = 'output window, operand 0, single buffered']
    #allocation7 [shape = 's32[1]{0}', space=sflag, size = 0x4, scoped, tag = 'scoped memory for tpu_custom_call.1']
    %16 = vsyncpa [#allocation7], 0
    // Predicated region
    $region2: #{tpu_custom_call.1} parent=1 // pred_check
      _
    $region3: #{tpu_custom_call.1} parent=1 // pred_check_branch
      %18 = sbr.rel (0) target = $region5
    $region4: #{tpu_custom_call.1} parent=1 // pred_region
      _
    $region5: #{tpu_custom_call.1} parent=1 // pred_fallthru
      _
    // Predicated region
    $region6: #{tpu_custom_call.1} parent=1 // pred_check
      _
    $region7: #{tpu_custom_call.1} parent=1 // pred_check_branch
      %20 = sbr.rel (0) target = $region9
    $region8: #{tpu_custom_call.1} parent=1 // pred_region
      _
    $region9: #{tpu_custom_call.1} parent=1 // pred_fallthru
      _
    // Predicated region
    $region10: #{tpu_custom_call.1} parent=1 // pred_check
      _
    $region11: #{tpu_custom_call.1} parent=1 // pred_check_branch
      %22 = sbr.rel (0) target = $region13
    $region12: #{tpu_custom_call.1} parent=1 // pred_region
      _
    $region13: #{tpu_custom_call.1} parent=1 // pred_fallthru
      _
    // Predicated region
    $region14: #{tpu_custom_call.1} parent=1 // pred_check
      _
    $region15: #{tpu_custom_call.1} parent=1 // pred_check_branch
      %24 = sbr.rel (0) target = $region17
    $region16: #{tpu_custom_call.1} parent=1 // pred_region
      _
    $region17: #{tpu_custom_call.1} parent=1 // pred_fallthru
      _
    %s25 = smul.u32 0, 8
    %s26 = smul.u32 0, 16
    %s27 = sld [smem:[#allocation5 + %s26]]
    %s28 = sadd.s32 %s26, 1
    %s29 = sld [smem:[#allocation5 + %s28]]
    %s30 = scalar_lea.vmem %s2, %s27
    %v31 = vld [vmem:[%s30] sm:$0x1]
    %vm32 = vcmask 253952
    %33 = vst.msk [vmem:[#allocation2] sm:$0x1] %vm32, %v31
    %s34 = scalar_lea.vmem %s2, %s29
    %v35 = vld [vmem:[%s34] sm:$0x1]
    %36 = vst.msk [vmem:[#allocation3] sm:$0x1] %vm32, %v35
    %s37 = sadd.s32 %s25, 1
    %s38 = smul.u32 %s37, 2
    %s39 = sld [smem:[#allocation5 + %s38]]
    %s40 = sadd.s32 %s38, 1
    %s41 = sld [smem:[#allocation5 + %s40]]
    %s42 = sadd.s32 %s39, 128
    %s43 = scalar_lea.vmem %s2, %s42
    %v44 = vld [vmem:[%s43] sm:$0x1]
    %45 = vst.msk [vmem:[#allocation2 + $0x1] sm:$0x1] %vm32, %v44
    %s46 = sadd.s32 %s41, 128
    %s47 = scalar_lea.vmem %s2, %s46
    %v48 = vld [vmem:[%s47] sm:$0x1]
    %49 = vst.msk [vmem:[#allocation3 + $0x1] sm:$0x1] %vm32, %v48
    %s50 = sadd.s32 %s25, 2
    %s51 = smul.u32 %s50, 2
    %s52 = sld [smem:[#allocation5 + %s51]]
    %s53 = sadd.s32 %s51, 1
    %s54 = sld [smem:[#allocation5 + %s53]]
    %s55 = sadd.s32 %s52, 256
    %s56 = scalar_lea.vmem %s2, %s55
    %v57 = vld [vmem:[%s56] sm:$0x1]
    %58 = vst.msk [vmem:[#allocation2 + $0x2] sm:$0x1] %vm32, %v57
    %s59 = sadd.s32 %s54, 256
    %s60 = scalar_lea.vmem %s2, %s59
    %v61 = vld [vmem:[%s60] sm:$0x1]
    %62 = vst.msk [vmem:[#allocation3 + $0x2] sm:$0x1] %vm32, %v61
    %s63 = sadd.s32 %s25, 3
    %s64 = smul.u32 %s63, 2
    %s65 = sld [smem:[#allocation5 + %s64]]
    %s66 = sadd.s32 %s64, 1
    %s67 = sld [smem:[#allocation5 + %s66]]
    %s68 = sadd.s32 %s65, 384
    %s69 = scalar_lea.vmem %s2, %s68
    %v70 = vld [vmem:[%s69] sm:$0x1]
    %71 = vst.msk [vmem:[#allocation2 + $0x3] sm:$0x1] %vm32, %v70
    %s72 = sadd.s32 %s67, 384
    %s73 = scalar_lea.vmem %s2, %s72
    %v74 = vld [vmem:[%s73] sm:$0x1]
    %75 = vst.msk [vmem:[#allocation3 + $0x3] sm:$0x1] %vm32, %v74
    %s76 = sadd.s32 %s25, 4
    %s77 = smul.u32 %s76, 2
    %s78 = sld [smem:[#allocation5 + %s77]]
    %s79 = sadd.s32 %s77, 1
    %s80 = sld [smem:[#allocation5 + %s79]]
    %s81 = sadd.s32 %s78, 512
    %s82 = scalar_lea.vmem %s2, %s81
    %v83 = vld [vmem:[%s82] sm:$0x1]
    %84 = vst.msk [vmem:[#allocation2 + $0x4] sm:$0x1] %vm32, %v83
    %s85 = sadd.s32 %s80, 512
    %s86 = scalar_lea.vmem %s2, %s85
    %v87 = vld [vmem:[%s86] sm:$0x1]
    %88 = vst.msk [vmem:[#allocation3 + $0x4] sm:$0x1] %vm32, %v87
    %s89 = sadd.s32 %s25, 5
    %s90 = smul.u32 %s89, 2
    %s91 = sld [smem:[#allocation5 + %s90]]
    %s92 = sadd.s32 %s90, 1
    %s93 = sld [smem:[#allocation5 + %s92]]
    %s94 = sadd.s32 %s91, 640
    %s95 = scalar_lea.vmem %s2, %s94
    %v96 = vld [vmem:[%s95] sm:$0x1]
    %97 = vst.msk [vmem:[#allocation2 + $0x5] sm:$0x1] %vm32, %v96
    %s98 = sadd.s32 %s93, 640
    %s99 = scalar_lea.vmem %s2, %s98
    %v100 = vld [vmem:[%s99] sm:$0x1]
    %101 = vst.msk [vmem:[#allocation3 + $0x5] sm:$0x1] %vm32, %v100
    %s102 = sadd.s32 %s25, 6
    %s103 = smul.u32 %s102, 2
    %s104 = sld [smem:[#allocation5 + %s103]]
    %s105 = sadd.s32 %s103, 1
    %s106 = sld [smem:[#allocation5 + %s105]]
    %s107 = sadd.s32 %s104, 768
    %s108 = scalar_lea.vmem %s2, %s107
    %v109 = vld [vmem:[%s108] sm:$0x1]
    %110 = vst.msk [vmem:[#allocation2 + $0x6] sm:$0x1] %vm32, %v109
    %s111 = sadd.s32 %s106, 768
    %s112 = scalar_lea.vmem %s2, %s111
    %v113 = vld [vmem:[%s112] sm:$0x1]
    %114 = vst.msk [vmem:[#allocation3 + $0x6] sm:$0x1] %vm32, %v113
    %s115 = sadd.s32 %s25, 7
    %s116 = smul.u32 %s115, 2
    %s117 = sld [smem:[#allocation5 + %s116]]
    %s118 = sadd.s32 %s116, 1
    %s119 = sld [smem:[#allocation5 + %s118]]
    %s120 = sadd.s32 %s117, 896
    %s121 = scalar_lea.vmem %s2, %s120
    %v122 = vld [vmem:[%s121] sm:$0x1]
    %123 = vst.msk [vmem:[#allocation2 + $0x7] sm:$0x1] %vm32, %v122
    %s124 = sadd.s32 %s119, 896
    %s125 = scalar_lea.vmem %s2, %s124
    %v126 = vld [vmem:[%s125] sm:$0x1]
    %127 = vst.msk [vmem:[#allocation3 + $0x7] sm:$0x1] %vm32, %v126
    %v128 = vld [vmem:[%s2] sm:$0xff]
    %v129 = vld [vmem:[%s2 + $0x8] sm:$0xff]
    %v130 = vld [vmem:[%s2 + $0x10] sm:$0xff]
    %v131 = vld [vmem:[%s2 + $0x18] sm:$0xff]
    %v132 = vld [vmem:[%s2 + $0x20] sm:$0xff]
    %v133 = vld [vmem:[%s2 + $0x28] sm:$0xff]
    %v134 = vld [vmem:[%s2 + $0x30] sm:$0xff]
    %v135 = vld [vmem:[%s2 + $0x38] sm:$0xff]
    %v136 = vld [vmem:[%s2 + $0x40] sm:$0xff]
    %v137 = vld [vmem:[%s2 + $0x48] sm:$0xff]
    %v138 = vld [vmem:[%s2 + $0x50] sm:$0xff]
    %v139 = vld [vmem:[%s2 + $0x58] sm:$0xff]
    %v140 = vld [vmem:[%s2 + $0x60] sm:$0xff]
    %v141 = vld [vmem:[%s2 + $0x68] sm:$0xff]
    %v142 = vld [vmem:[%s2 + $0x70] sm:$0xff]
    %v143 = vld [vmem:[%s2 + $0x78] sm:$0xff]
    %v144 = vld [vmem:[%s2 + $0x80] sm:$0xff]
    %v145 = vld [vmem:[%s2 + $0x88] sm:$0xff]
    %v146 = vld [vmem:[%s2 + $0x90] sm:$0xff]
    %v147 = vld [vmem:[%s2 + $0x98] sm:$0xff]
    %v148 = vld [vmem:[%s2 + $0xa0] sm:$0xff]
    %v149 = vld [vmem:[%s2 + $0xa8] sm:$0xff]
    %v150 = vld [vmem:[%s2 + $0xb0] sm:$0xff]
    %v151 = vld [vmem:[%s2 + $0xb8] sm:$0xff]
    %v152 = vld [vmem:[%s2 + $0xc0] sm:$0xff]
    %v153 = vld [vmem:[%s2 + $0xc8] sm:$0xff]
    %v154 = vld [vmem:[%s2 + $0xd0] sm:$0xff]
    %v155 = vld [vmem:[%s2 + $0xd8] sm:$0xff]
    %v156 = vld [vmem:[%s2 + $0xe0] sm:$0xff]
    %v157 = vld [vmem:[%s2 + $0xe8] sm:$0xff]
    %v158 = vld [vmem:[%s2 + $0xf0] sm:$0xff]
    %v159 = vld [vmem:[%s2 + $0xf8] sm:$0xff]
    %v160 = vld [vmem:[%s2 + $0x100] sm:$0xff]
    %v161 = vld [vmem:[%s2 + $0x108] sm:$0xff]
    %v162 = vld [vmem:[%s2 + $0x110] sm:$0xff]
    %v163 = vld [vmem:[%s2 + $0x118] sm:$0xff]
    %v164 = vld [vmem:[%s2 + $0x120] sm:$0xff]
    %v165 = vld [vmem:[%s2 + $0x128] sm:$0xff]
    %v166 = vld [vmem:[%s2 + $0x130] sm:$0xff]
    %v167 = vld [vmem:[%s2 + $0x138] sm:$0xff]
    %v168 = vld [vmem:[%s2 + $0x140] sm:$0xff]
    %v169 = vld [vmem:[%s2 + $0x148] sm:$0xff]
    %v170 = vld [vmem:[%s2 + $0x150] sm:$0xff]
    %v171 = vld [vmem:[%s2 + $0x158] sm:$0xff]
    %v172 = vld [vmem:[%s2 + $0x160] sm:$0xff]
    %v173 = vld [vmem:[%s2 + $0x168] sm:$0xff]
    %v174 = vld [vmem:[%s2 + $0x170] sm:$0xff]
    %v175 = vld [vmem:[%s2 + $0x178] sm:$0xff]
    %v176 = vld [vmem:[%s2 + $0x180] sm:$0xff]
    %v177 = vld [vmem:[%s2 + $0x188] sm:$0xff]
    %v178 = vld [vmem:[%s2 + $0x190] sm:$0xff]
    %v179 = vld [vmem:[%s2 + $0x198] sm:$0xff]
    %v180 = vld [vmem:[%s2 + $0x1a0] sm:$0xff]
    %v181 = vld [vmem:[%s2 + $0x1a8] sm:$0xff]
    %v182 = vld [vmem:[%s2 + $0x1b0] sm:$0xff]
    %v183 = vld [vmem:[%s2 + $0x1b8] sm:$0xff]
    %v184 = vld [vmem:[%s2 + $0x1c0] sm:$0xff]
    %v185 = vld [vmem:[%s2 + $0x1c8] sm:$0xff]
    %v186 = vld [vmem:[%s2 + $0x1d0] sm:$0xff]
    %v187 = vld [vmem:[%s2 + $0x1d8] sm:$0xff]
    %v188 = vld [vmem:[%s2 + $0x1e0] sm:$0xff]
    %v189 = vld [vmem:[%s2 + $0x1e8] sm:$0xff]
    %v190 = vld [vmem:[%s2 + $0x1f0] sm:$0xff]
    %v191 = vld [vmem:[%s2 + $0x1f8] sm:$0xff]
    %v192 = vld [vmem:[%s2 + $0x200] sm:$0xff]
    %v193 = vld [vmem:[%s2 + $0x208] sm:$0xff]
    %v194 = vld [vmem:[%s2 + $0x210] sm:$0xff]
    %v195 = vld [vmem:[%s2 + $0x218] sm:$0xff]
    %v196 = vld [vmem:[%s2 + $0x220] sm:$0xff]
    %v197 = vld [vmem:[%s2 + $0x228] sm:$0xff]
    %v198 = vld [vmem:[%s2 + $0x230] sm:$0xff]
    %v199 = vld [vmem:[%s2 + $0x238] sm:$0xff]
    %v200 = vld [vmem:[%s2 + $0x240] sm:$0xff]
    %v201 = vld [vmem:[%s2 + $0x248] sm:$0xff]
    %v202 = vld [vmem:[%s2 + $0x250] sm:$0xff]
    %v203 = vld [vmem:[%s2 + $0x258] sm:$0xff]
    %v204 = vld [vmem:[%s2 + $0x260] sm:$0xff]
    %v205 = vld [vmem:[%s2 + $0x268] sm:$0xff]
    %v206 = vld [vmem:[%s2 + $0x270] sm:$0xff]
    %v207 = vld [vmem:[%s2 + $0x278] sm:$0xff]
    %v208 = vld [vmem:[%s2 + $0x280] sm:$0xff]
    %v209 = vld [vmem:[%s2 + $0x288] sm:$0xff]
    %v210 = vld [vmem:[%s2 + $0x290] sm:$0xff]
    %v211 = vld [vmem:[%s2 + $0x298] sm:$0xff]
    %v212 = vld [vmem:[%s2 + $0x2a0] sm:$0xff]
    %v213 = vld [vmem:[%s2 + $0x2a8] sm:$0xff]
    %v214 = vld [vmem:[%s2 + $0x2b0] sm:$0xff]
    %v215 = vld [vmem:[%s2 + $0x2b8] sm:$0xff]
    %v216 = vld [vmem:[%s2 + $0x2c0] sm:$0xff]
    %v217 = vld [vmem:[%s2 + $0x2c8] sm:$0xff]
    %v218 = vld [vmem:[%s2 + $0x2d0] sm:$0xff]
    %v219 = vld [vmem:[%s2 + $0x2d8] sm:$0xff]
    %v220 = vld [vmem:[%s2 + $0x2e0] sm:$0xff]
    %v221 = vld [vmem:[%s2 + $0x2e8] sm:$0xff]
    %v222 = vld [vmem:[%s2 + $0x2f0] sm:$0xff]
    %v223 = vld [vmem:[%s2 + $0x2f8] sm:$0xff]
    %v224 = vld [vmem:[%s2 + $0x300] sm:$0xff]
    %v225 = vld [vmem:[%s2 + $0x308] sm:$0xff]
    %v226 = vld [vmem:[%s2 + $0x310] sm:$0xff]
    %v227 = vld [vmem:[%s2 + $0x318] sm:$0xff]
    %v228 = vld [vmem:[%s2 + $0x320] sm:$0xff]
    %v229 = vld [vmem:[%s2 + $0x328] sm:$0xff]
    %v230 = vld [vmem:[%s2 + $0x330] sm:$0xff]
    %v231 = vld [vmem:[%s2 + $0x338] sm:$0xff]
    %v232 = vld [vmem:[%s2 + $0x340] sm:$0xff]
    %v233 = vld [vmem:[%s2 + $0x348] sm:$0xff]
    %v234 = vld [vmem:[%s2 + $0x350] sm:$0xff]
    %v235 = vld [vmem:[%s2 + $0x358] sm:$0xff]
    %v236 = vld [vmem:[%s2 + $0x360] sm:$0xff]
    %v237 = vld [vmem:[%s2 + $0x368] sm:$0xff]
    %v238 = vld [vmem:[%s2 + $0x370] sm:$0xff]
    %v239 = vld [vmem:[%s2 + $0x378] sm:$0xff]
    %v240 = vld [vmem:[%s2 + $0x380] sm:$0xff]
    %v241 = vld [vmem:[%s2 + $0x388] sm:$0xff]
    %v242 = vld [vmem:[%s2 + $0x390] sm:$0xff]
    %v243 = vld [vmem:[%s2 + $0x398] sm:$0xff]
    %v244 = vld [vmem:[%s2 + $0x3a0] sm:$0xff]
    %v245 = vld [vmem:[%s2 + $0x3a8] sm:$0xff]
    %v246 = vld [vmem:[%s2 + $0x3b0] sm:$0xff]
    %v247 = vld [vmem:[%s2 + $0x3b8] sm:$0xff]
    %v248 = vld [vmem:[%s2 + $0x3c0] sm:$0xff]
    %v249 = vld [vmem:[%s2 + $0x3c8] sm:$0xff]
    %v250 = vld [vmem:[%s2 + $0x3d0] sm:$0xff]
    %v251 = vld [vmem:[%s2 + $0x3d8] sm:$0xff]
    %v252 = vld [vmem:[%s2 + $0x3e0] sm:$0xff]
    %v253 = vld [vmem:[%s2 + $0x3e8] sm:$0xff]
    %v254 = vld [vmem:[%s2 + $0x3f0] sm:$0xff]
    %v255 = vld [vmem:[%s2 + $0x3f8] sm:$0xff]
    %v256 = vld [vmem:[%s3] sm:$0xff]
    %v257 = vld [vmem:[%s4] sm:$0xff]
    %v258 = vld [vmem:[%s4 + $0x8] sm:$0xff]
    %v259 = vld [vmem:[%s4 + $0x10] sm:$0xff]
    %v260 = vld [vmem:[%s4 + $0x18] sm:$0xff]
    %v261 = vld [vmem:[%s4 + $0x20] sm:$0xff]
    %v262 = vld [vmem:[%s4 + $0x28] sm:$0xff]
    %v263 = vld [vmem:[%s4 + $0x30] sm:$0xff]
    %v264 = vld [vmem:[%s4 + $0x38] sm:$0xff]
    %v265 = vld [vmem:[%s4 + $0x40] sm:$0xff]
    %v266 = vld [vmem:[%s4 + $0x48] sm:$0xff]
    %v267 = vld [vmem:[%s4 + $0x50] sm:$0xff]
    %v268 = vld [vmem:[%s4 + $0x58] sm:$0xff]
    %v269 = vld [vmem:[%s4 + $0x60] sm:$0xff]
    %v270 = vld [vmem:[%s4 + $0x68] sm:$0xff]
    %v271 = vld [vmem:[%s4 + $0x70] sm:$0xff]
    %v272 = vld [vmem:[%s4 + $0x78] sm:$0xff]
    %v273 = vld [vmem:[%s4 + $0x80] sm:$0xff]
    %v274 = vld [vmem:[%s4 + $0x88] sm:$0xff]
    %v275 = vld [vmem:[%s4 + $0x90] sm:$0xff]
    %v276 = vld [vmem:[%s4 + $0x98] sm:$0xff]
    %v277 = vld [vmem:[%s4 + $0xa0] sm:$0xff]
    %v278 = vld [vmem:[%s4 + $0xa8] sm:$0xff]
    %v279 = vld [vmem:[%s4 + $0xb0] sm:$0xff]
    %v280 = vld [vmem:[%s4 + $0xb8] sm:$0xff]
    %v281 = vld [vmem:[%s4 + $0xc0] sm:$0xff]
    %v282 = vld [vmem:[%s4 + $0xc8] sm:$0xff]
    %v283 = vld [vmem:[%s4 + $0xd0] sm:$0xff]
    %v284 = vld [vmem:[%s4 + $0xd8] sm:$0xff]
    %v285 = vld [vmem:[%s4 + $0xe0] sm:$0xff]
    %v286 = vld [vmem:[%s4 + $0xe8] sm:$0xff]
    %v287 = vld [vmem:[%s1] sm:$0xff]
    %v288 = vld [vmem:[#allocation2] sm:$0xff]
    %v289 = vld [vmem:[#allocation3] sm:$0xff]
    %vm290 = vcmask 261120
    %v292 = vsel %vm290, %v289, 0
    %294 = vmatprep.subr.mxu0 0.0
    %295 = vmatpush1.msra.mxu0 0.0
    %296 = vmatprep.subr.mxu0 0.0
    %297 = vmatpush1.msra.mxu0 0.0
    %298 = vmatprep.subr.mxu0 0.0
    %299 = vmatpush1.msra.mxu0 0.0
    %300 = vmatprep.subr.mxu0 0.0
    %301 = vmatpush1.msra.mxu0 0.0
    %302 = vmatprep.subr.mxu0 0.0
    %303 = vmatpush1.msra.mxu0 0.0
    %304 = vmatprep.subr.mxu0 0.0
    %305 = vmatpush1.msra.mxu0 0.0
    %306 = vmatprep.subr.mxu0 0.0
    %307 = vmatpush1.msra.mxu0 0.0
    %308 = vmatprep.subr.mxu0 0.0
    %309 = vmatpush1.msra.mxu0 0.0
    %310 = vmatprep.subr.mxu0 0.0
    %311 = vmatpush1.msra.mxu0 0.0
    %312 = vmatprep.subr.mxu0 0.0
    %313 = vmatpush1.msra.mxu0 0.0
    %314 = vmatprep.subr.mxu0 0.0
    %315 = vmatpush1.msra.mxu0 0.0
    %316 = vmatprep.subr.mxu0 0.0
    %317 = vmatpush1.msra.mxu0 0.0
    %318 = vmatprep.subr.mxu0 0.0
    %319 = vmatpush1.msra.mxu0 %v264
    %320 = vmatprep.subr.mxu0 0.0
    %321 = vmatpush1.msra.mxu0 %v263
    %322 = vmatprep.subr.mxu0 0.0
    %323 = vmatpush1.msra.mxu0 %v262
    %324 = vmatprep.subr.mxu0 0.0
    %325 = vmatpush1.msra.mxu0 %v261
    %326 = vmatprep.subr.mxu0 0.0
    %327 = vmatpush2.msra.mxu0 0.0
    %328 = vmatprep.subr.mxu0 0.0
    %329 = vmatpush2.msra.mxu0 0.0
    %330 = vmatprep.subr.mxu0 0.0
    %331 = vmatpush2.msra.mxu0 0.0
    %332 = vmatprep.subr.mxu0 0.0
    %333 = vmatpush2.msra.mxu0 0.0
    %334 = vmatprep.subr.mxu0 0.0
    %335 = vmatpush2.msra.mxu0 0.0
    %336 = vmatprep.subr.mxu0 0.0
    %337 = vmatpush2.msra.mxu0 0.0
    %338 = vmatprep.subr.mxu0 0.0
    %339 = vmatpush2.msra.mxu0 0.0
    %340 = vmatprep.subr.mxu0 0.0
    %341 = vmatpush2.msra.mxu0 0.0
    %342 = vmatprep.subr.mxu0 0.0
    %343 = vmatpush2.msra.mxu0 0.0
    %344 = vmatprep.subr.mxu0 0.0
    %345 = vmatpush2.msra.mxu0 0.0
    %346 = vmatprep.subr.mxu0 0.0
    %347 = vmatpush2.msra.mxu0 0.0
    %348 = vmatprep.subr.mxu0 0.0
    %349 = vmatpush2.msra.mxu0 0.0
    %350 = vmatprep.subr.mxu0 0.0
    %351 = vmatpush2.msra.mxu0 0.0
    %352 = vmatprep.subr.mxu0 0.0
    %353 = vmatpush2.msra.mxu0 0.0
    %354 = vmatprep.subr.mxu0 0.0
    %355 = vmatpush2.msra.mxu0 0.0
    %356 = vmatprep.subr.mxu0 0.0
    %357 = vmatpush2.msra.mxu0 0.0
    %358 = vmatprep.mubr.f32.mxu0 0.0
    %359 = vmatmul.mubr.f32.gmra.mxu0 %v292
    %v360 = vpop.f32.mrf.mxu0
    %v361 = vadd.f32 0.0, %v360
    %v362 = vpop.f32.mrf.mxu0
    %363 = vdwg.mxu0
    %v365 = vsel %vm290, %v288, 0
    %367 = vmatprep.subr.mxu0 0.0
    %368 = vmatpush1.msra.mxu0 0.0
    %369 = vmatprep.subr.mxu0 0.0
    %370 = vmatpush1.msra.mxu0 0.0
    %371 = vmatprep.subr.mxu0 0.0
    %372 = vmatpush1.msra.mxu0 0.0
    %373 = vmatprep.subr.mxu0 0.0
    %374 = vmatpush1.msra.mxu0 0.0
    %375 = vmatprep.subr.mxu0 0.0
    %376 = vmatpush1.msra.mxu0 0.0
    %377 = vmatprep.subr.mxu0 0.0
    %378 = vmatpush1.msra.mxu0 0.0
    %379 = vmatprep.subr.mxu0 0.0
    %380 = vmatpush1.msra.mxu0 0.0
    %381 = vmatprep.subr.mxu0 0.0
    %382 = vmatpush1.msra.mxu0 0.0
    %383 = vmatprep.subr.mxu0 0.0
    %384 = vmatpush1.msra.mxu0 0.0
    %385 = vmatprep.subr.mxu0 0.0
    %386 = vmatpush1.msra.mxu0 0.0
    %387 = vmatprep.subr.mxu0 0.0
    %388 = vmatpush1.msra.mxu0 0.0
    %389 = vmatprep.subr.mxu0 0.0
    %390 = vmatpush1.msra.mxu0 0.0
    %391 = vmatprep.subr.mxu0 0.0
    %392 = vmatpush1.msra.mxu0 %v260
    %393 = vmatprep.subr.mxu0 0.0
    %394 = vmatpush1.msra.mxu0 %v259
    %395 = vmatprep.subr.mxu0 0.0
    %396 = vmatpush1.msra.mxu0 %v258
    %397 = vmatprep.subr.mxu0 0.0
    %398 = vmatpush1.msra.mxu0 %v257
    %399 = vmatprep.subr.mxu0 0.0
    %400 = vmatpush2.msra.mxu0 0.0
    %401 = vmatprep.subr.mxu0 0.0
    %402 = vmatpush2.msra.mxu0 0.0
    %403 = vmatprep.subr.mxu0 0.0
    %404 = vmatpush2.msra.mxu0 0.0
    %405 = vmatprep.subr.mxu0 0.0
    %406 = vmatpush2.msra.mxu0 0.0
    %407 = vmatprep.subr.mxu0 0.0
    %408 = vmatpush2.msra.mxu0 0.0
    %409 = vmatprep.subr.mxu0 0.0
    %410 = vmatpush2.msra.mxu0 0.0
    %411 = vmatprep.subr.mxu0 0.0
    %412 = vmatpush2.msra.mxu0 0.0
    %413 = vmatprep.subr.mxu0 0.0
    %414 = vmatpush2.msra.mxu0 0.0
    %415 = vmatprep.subr.mxu0 0.0
    %416 = vmatpush2.msra.mxu0 0.0
    %417 = vmatprep.subr.mxu0 0.0
    %418 = vmatpush2.msra.mxu0 0.0
    %419 = vmatprep.subr.mxu0 0.0
    %420 = vmatpush2.msra.mxu0 0.0
    %421 = vmatprep.subr.mxu0 0.0
    %422 = vmatpush2.msra.mxu0 0.0
    %423 = vmatprep.subr.mxu0 0.0
    %424 = vmatpush2.msra.mxu0 0.0
    %425 = vmatprep.subr.mxu0 0.0
    %426 = vmatpush2.msra.mxu0 0.0
    %427 = vmatprep.subr.mxu0 0.0
    %428 = vmatpush2.msra.mxu0 0.0
    %429 = vmatprep.subr.mxu0 0.0
    %430 = vmatpush2.msra.mxu0 0.0
    %431 = vmatprep.mubr.f32.mxu0 0.0
    %432 = vmatmul.mubr.f32.gmra.mxu0 %v365
    %v433 = vpop.f32.mrf.mxu0
    %v434 = vadd.f32 %v361, %v433
    %v435 = vpop.f32.mrf.mxu0
    %436 = vdwg.mxu0
    %438 = vrot.lane.b32.xlu0 %v287, 96
    %v439 = vpop.permute.xlu0 %438
    %vm440 = vcmask 64512
    %v441 = vsel %vm440, %v439, 0
    %443 = vmatprep.subr.mxu0 0.0
    %444 = vmatpush1.msra.mxu0 0.0
    %445 = vmatprep.subr.mxu0 0.0
    %446 = vmatpush1.msra.mxu0 0.0
    %447 = vmatprep.subr.mxu0 0.0
    %448 = vmatpush1.msra.mxu0 0.0
    %449 = vmatprep.subr.mxu0 0.0
    %450 = vmatpush1.msra.mxu0 0.0
    %451 = vmatprep.subr.mxu0 0.0
    %452 = vmatpush1.msra.mxu0 0.0
    %453 = vmatprep.subr.mxu0 0.0
    %454 = vmatpush1.msra.mxu0 0.0
    %455 = vmatprep.subr.mxu0 0.0
    %456 = vmatpush1.msra.mxu0 0.0
    %457 = vmatprep.subr.mxu0 0.0
    %458 = vmatpush1.msra.mxu0 0.0
    %459 = vmatprep.subr.mxu0 0.0
    %460 = vmatpush1.msra.mxu0 0.0
    %461 = vmatprep.subr.mxu0 0.0
    %462 = vmatpush1.msra.mxu0 0.0
    %463 = vmatprep.subr.mxu0 0.0
    %464 = vmatpush1.msra.mxu0 0.0
    %465 = vmatprep.subr.mxu0 0.0
    %466 = vmatpush1.msra.mxu0 0.0
    %467 = vmatprep.subr.mxu0 0.0
    %468 = vmatpush1.msra.mxu0 0.0
    %469 = vmatprep.subr.mxu0 0.0
    %470 = vmatpush1.msra.mxu0 0.0
    %471 = vmatprep.subr.mxu0 0.0
    %472 = vmatpush1.msra.mxu0 0.0
    %473 = vmatprep.subr.mxu0 0.0
    %474 = vmatpush1.msra.mxu0 %v265
    %475 = vmatprep.subr.mxu0 0.0
    %476 = vmatpush2.msra.mxu0 0.0
    %477 = vmatprep.subr.mxu0 0.0
    %478 = vmatpush2.msra.mxu0 0.0
    %479 = vmatprep.subr.mxu0 0.0
    %480 = vmatpush2.msra.mxu0 0.0
    %481 = vmatprep.subr.mxu0 0.0
    %482 = vmatpush2.msra.mxu0 0.0
    %483 = vmatprep.subr.mxu0 0.0
    %484 = vmatpush2.msra.mxu0 0.0
    %485 = vmatprep.subr.mxu0 0.0
    %486 = vmatpush2.msra.mxu0 0.0
    %487 = vmatprep.subr.mxu0 0.0
    %488 = vmatpush2.msra.mxu0 0.0
    %489 = vmatprep.subr.mxu0 0.0
    %490 = vmatpush2.msra.mxu0 0.0
    %491 = vmatprep.subr.mxu0 0.0
    %492 = vmatpush2.msra.mxu0 0.0
    %493 = vmatprep.subr.mxu0 0.0
    %494 = vmatpush2.msra.mxu0 0.0
    %495 = vmatprep.subr.mxu0 0.0
    %496 = vmatpush2.msra.mxu0 0.0
    %497 = vmatprep.subr.mxu0 0.0
    %498 = vmatpush2.msra.mxu0 0.0
    %499 = vmatprep.subr.mxu0 0.0
    %500 = vmatpush2.msra.mxu0 0.0
    %501 = vmatprep.subr.mxu0 0.0
    %502 = vmatpush2.msra.mxu0 0.0
    %503 = vmatprep.subr.mxu0 0.0
    %504 = vmatpush2.msra.mxu0 0.0
    %505 = vmatprep.subr.mxu0 0.0
    %506 = vmatpush2.msra.mxu0 0.0
    %507 = vmatprep.mubr.f32.mxu0 0.0
    %508 = vmatmul.mubr.f32.gmra.mxu0 %v441
    %v509 = vpop.f32.mrf.mxu0
    %v510 = vadd.f32 0.0, %v509
    %v511 = vpop.f32.mrf.mxu0
    %512 = vdwg.mxu0
    %v513 = vadd.f32 %v434, %v510
    %v514 = vadd.f32 %v513, %v287
    %v516 = vsel %vm290, %v514, 0
    %518 = vmatprep.subr.mxu0 0.0
    %519 = vmatpush1.msra.mxu0 0.0
    %520 = vmatprep.subr.mxu0 0.0
    %521 = vmatpush1.msra.mxu0 0.0
    %522 = vmatprep.subr.mxu0 0.0
    %523 = vmatpush1.msra.mxu0 0.0
    %524 = vmatprep.subr.mxu0 0.0
    %525 = vmatpush1.msra.mxu0 0.0
    %526 = vmatprep.subr.mxu0 0.0
    %527 = vmatpush1.msra.mxu0 0.0
    %528 = vmatprep.subr.mxu0 0.0
    %529 = vmatpush1.msra.mxu0 0.0
    %530 = vmatprep.subr.mxu0 0.0
    %531 = vmatpush1.msra.mxu0 0.0
    %532 = vmatprep.subr.mxu0 0.0
    %533 = vmatpush1.msra.mxu0 0.0
    %534 = vmatprep.subr.mxu0 0.0
    %535 = vmatpush1.msra.mxu0 0.0
    %536 = vmatprep.subr.mxu0 0.0
    %537 = vmatpush1.msra.mxu0 0.0
    %538 = vmatprep.subr.mxu0 0.0
    %539 = vmatpush1.msra.mxu0 0.0
    %540 = vmatprep.subr.mxu0 0.0
    %541 = vmatpush1.msra.mxu0 0.0
    %542 = vmatprep.subr.mxu0 0.0
    %543 = vmatpush1.msra.mxu0 %v269
    %544 = vmatprep.subr.mxu0 0.0
    %545 = vmatpush1.msra.mxu0 %v268
    %546 = vmatprep.subr.mxu0 0.0
    %547 = vmatpush1.msra.mxu0 %v267
    %548 = vmatprep.subr.mxu0 0.0
    %549 = vmatpush1.msra.mxu0 %v266
    %550 = vmatprep.subr.mxu0 0.0
    %551 = vmatpush2.msra.mxu0 0.0
    %552 = vmatprep.subr.mxu0 0.0
    %553 = vmatpush2.msra.mxu0 0.0
    %554 = vmatprep.subr.mxu0 0.0
    %555 = vmatpush2.msra.mxu0 0.0
    %556 = vmatprep.subr.mxu0 0.0
    %557 = vmatpush2.msra.mxu0 0.0
    %558 = vmatprep.subr.mxu0 0.0
    %559 = vmatpush2.msra.mxu0 0.0
    %560 = vmatprep.subr.mxu0 0.0
    %561 = vmatpush2.msra.mxu0 0.0
    %562 = vmatprep.subr.mxu0 0.0
    %563 = vmatpush2.msra.mxu0 0.0
    %564 = vmatprep.subr.mxu0 0.0
    %565 = vmatpush2.msra.mxu0 0.0
    %566 = vmatprep.subr.mxu0 0.0
    %567 = vmatpush2.msra.mxu0 0.0
    %568 = vmatprep.subr.mxu0 0.0
    %569 = vmatpush2.msra.mxu0 0.0
    %570 = vmatprep.subr.mxu0 0.0
    %571 = vmatpush2.msra.mxu0 0.0
    %572 = vmatprep.subr.mxu0 0.0
    %573 = vmatpush2.msra.mxu0 0.0
    %574 = vmatprep.subr.mxu0 0.0
    %575 = vmatpush2.msra.mxu0 0.0
    %576 = vmatprep.subr.mxu0 0.0
    %577 = vmatpush2.msra.mxu0 0.0
    %578 = vmatprep.subr.mxu0 0.0
    %579 = vmatpush2.msra.mxu0 0.0
    %580 = vmatprep.subr.mxu0 0.0
    %581 = vmatpush2.msra.mxu0 0.0
    %582 = vmatprep.mubr.f32.mxu0 0.0
    %583 = vmatmul.mubr.f32.gmra.mxu0 %v516
    %v584 = vpop.f32.mrf.mxu0
    %v585 = vadd.f32 0.0, %v584
    %v586 = vpop.f32.mrf.mxu0
    %587 = vdwg.mxu0
    %v589 = vcombine.high %v585, %v585
    %v591 = vunpack.c.l.s4 1966171168
    %v592 = vunpack.c.0.s8 %v591
    %v593 = vlaneseq
    %v594 = vshrl.u32 %v593, 7
    %v595 = vsub.s32 %v592, %v594
    %v596 = vrot.slane %v585, %v595
    %v598 = vunpack.c.l.s4 1966171168
    %v599 = vunpack.c.0.s8 %v598
    %v600 = vlaneseq
    %v601 = vshrl.u32 %v600, 7
    %v602 = vsub.s32 %v599, %v601
    %v603 = vrot.slane %v589, %v602
    %v604 = vcombine.high %v596, %v596
    %v605 = vcombine.high %v603, %v603
    %v607 = vunpack.c.l.s4 1966171168
    %v608 = vunpack.c.0.s8 %v607
    %v609 = vlaneseq
    %v610 = vshrl.u32 %v609, 7
    %v611 = vsub.s32 %v608, %v610
    %v612 = vrot.slane %v596, %v611
    %v614 = vunpack.c.l.s4 1966171168
    %v615 = vunpack.c.0.s8 %v614
    %v616 = vlaneseq
    %v617 = vshrl.u32 %v616, 7
    %v618 = vsub.s32 %v615, %v617
    %v619 = vrot.slane %v603, %v618
    %v621 = vunpack.c.l.s4 1966171168
    %v622 = vunpack.c.0.s8 %v621
    %v623 = vlaneseq
    %v624 = vshrl.u32 %v623, 7
    %v625 = vsub.s32 %v622, %v624
    %v626 = vrot.slane %v604, %v625
    %v628 = vunpack.c.l.s4 1966171168
    %v629 = vunpack.c.0.s8 %v628
    %v630 = vlaneseq
    %v631 = vshrl.u32 %v630, 7
    %v632 = vsub.s32 %v629, %v631
    %v633 = vrot.slane %v605, %v632
    %v634 = vcombine.high %v612, %v612
    %v635 = vcombine.high %v619, %v619
    %v636 = vcombine.high %v626, %v626
    %v637 = vcombine.high %v633, %v633
    %v638 = vlaneseq
    %v639 = vshrl.u32 %v638, 7
    %v640 = vsub.s32 0, %v639
    %v641 = vrot.slane %v612, %v640
    %v642 = vlaneseq
    %v643 = vshrl.u32 %v642, 7
    %v644 = vsub.s32 0, %v643
    %v645 = vrot.slane %v626, %v644
    %v646 = vlaneseq
    %v647 = vshrl.u32 %v646, 7
    %v648 = vsub.s32 0, %v647
    %v649 = vrot.slane %v634, %v648
    %v650 = vlaneseq
    %v651 = vshrl.u32 %v650, 7
    %v652 = vsub.s32 0, %v651
    %v653 = vrot.slane %v636, %v652
    %v654 = vlaneseq
    %v655 = vshrl.u32 %v654, 7
    %v656 = vsub.s32 0, %v655
    %v657 = vrot.slane %v619, %v656
    %v658 = vlaneseq
    %v659 = vshrl.u32 %v658, 7
    %v660 = vsub.s32 0, %v659
    %v661 = vrot.slane %v633, %v660
    %v662 = vlaneseq
    %v663 = vshrl.u32 %v662, 7
    %v664 = vsub.s32 0, %v663
    %v665 = vrot.slane %v635, %v664
    %v666 = vlaneseq
    %v667 = vshrl.u32 %v666, 7
    %v668 = vsub.s32 0, %v667
    %v669 = vrot.slane %v637, %v668
    %v678 = vmul.f32 %v641, %v286
    %v679 = vmul.f32 %v645, %v286
    %v680 = vmul.f32 %v649, %v286
    %v681 = vmul.f32 %v653, %v286
    %v682 = vmul.f32 %v657, %v286
    %v683 = vmul.f32 %v661, %v286
    %v684 = vmul.f32 %v665, %v286
    %v685 = vmul.f32 %v669, %v286
    %v687 = vsel %vm290, %v678, 0
    %v690 = vsel %vm290, %v679, 0
    %v693 = vsel %vm290, %v680, 0
    %v696 = vsel %vm290, %v681, 0
    %v699 = vsel %vm290, %v682, 0
    %v702 = vsel %vm290, %v683, 0
    %v705 = vsel %vm290, %v684, 0
    %v708 = vsel %vm290, %v685, 0
    %710 = vmatprep.subr.mxu0 0.0
    %711 = vmatpush1.msra.mxu0 0.0
    %712 = vmatprep.subr.mxu0 0.0
    %713 = vmatpush1.msra.mxu0 0.0
    %714 = vmatprep.subr.mxu0 0.0
    %715 = vmatpush1.msra.mxu0 0.0
    %716 = vmatprep.subr.mxu0 0.0
    %717 = vmatpush1.msra.mxu0 0.0
    %718 = vmatprep.subr.mxu0 0.0
    %719 = vmatpush1.msra.mxu0 0.0
    %720 = vmatprep.subr.mxu0 0.0
    %721 = vmatpush1.msra.mxu0 0.0
    %722 = vmatprep.subr.mxu0 0.0
    %723 = vmatpush1.msra.mxu0 0.0
    %724 = vmatprep.subr.mxu0 0.0
    %725 = vmatpush1.msra.mxu0 0.0
    %726 = vmatprep.subr.mxu0 0.0
    %727 = vmatpush1.msra.mxu0 0.0
    %728 = vmatprep.subr.mxu0 0.0
    %729 = vmatpush1.msra.mxu0 0.0
    %730 = vmatprep.subr.mxu0 0.0
    %731 = vmatpush1.msra.mxu0 0.0
    %732 = vmatprep.subr.mxu0 0.0
    %733 = vmatpush1.msra.mxu0 0.0
    %734 = vmatprep.subr.mxu0 0.0
    %735 = vmatpush1.msra.mxu0 %v273
    %736 = vmatprep.subr.mxu0 0.0
    %737 = vmatpush1.msra.mxu0 %v272
    %738 = vmatprep.subr.mxu0 0.0
    %739 = vmatpush1.msra.mxu0 %v271
    %740 = vmatprep.subr.mxu0 0.0
    %741 = vmatpush1.msra.mxu0 %v270
    %742 = vmatprep.subr.mxu0 0.0
    %743 = vmatpush2.msra.mxu0 0.0
    %744 = vmatprep.subr.mxu0 0.0
    %745 = vmatpush2.msra.mxu0 0.0
    %746 = vmatprep.subr.mxu0 0.0
    %747 = vmatpush2.msra.mxu0 0.0
    %748 = vmatprep.subr.mxu0 0.0
    %749 = vmatpush2.msra.mxu0 0.0
    %750 = vmatprep.subr.mxu0 0.0
    %751 = vmatpush2.msra.mxu0 0.0
    %752 = vmatprep.subr.mxu0 0.0
    %753 = vmatpush2.msra.mxu0 0.0
    %754 = vmatprep.subr.mxu0 0.0
    %755 = vmatpush2.msra.mxu0 0.0
    %756 = vmatprep.subr.mxu0 0.0
    %757 = vmatpush2.msra.mxu0 0.0
    %758 = vmatprep.subr.mxu0 0.0
    %759 = vmatpush2.msra.mxu0 0.0
    %760 = vmatprep.subr.mxu0 0.0
    %761 = vmatpush2.msra.mxu0 0.0
    %762 = vmatprep.subr.mxu0 0.0
    %763 = vmatpush2.msra.mxu0 0.0
    %764 = vmatprep.subr.mxu0 0.0
    %765 = vmatpush2.msra.mxu0 0.0
    %766 = vmatprep.subr.mxu0 0.0
    %767 = vmatpush2.msra.mxu0 0.0
    %768 = vmatprep.subr.mxu0 0.0
    %769 = vmatpush2.msra.mxu0 0.0
    %770 = vmatprep.subr.mxu0 0.0
    %771 = vmatpush2.msra.mxu0 0.0
    %772 = vmatprep.subr.mxu0 0.0
    %773 = vmatpush2.msra.mxu0 0.0
    %774 = vmatprep.mubr.f32.mxu0 0.0
    %775 = vmatmul.mubr.f32.gmra.mxu0 %v687
    %v776 = vpop.f32.mrf.mxu0
    %v777 = vadd.f32 0.0, %v776
    %v778 = vpop.f32.mrf.mxu0
    %779 = vmatprep.mubr.f32.mxu0 0.0
    %780 = vmatmul.mubr.f32.gmra.mxu0 %v690
    %v781 = vpop.f32.mrf.mxu0
    %v782 = vadd.f32 0.0, %v781
    %v783 = vpop.f32.mrf.mxu0
    %784 = vmatprep.mubr.f32.mxu0 0.0
    %785 = vmatmul.mubr.f32.gmra.mxu0 %v693
    %v786 = vpop.f32.mrf.mxu0
    %v787 = vadd.f32 0.0, %v786
    %v788 = vpop.f32.mrf.mxu0
    %789 = vmatprep.mubr.f32.mxu0 0.0
    %790 = vmatmul.mubr.f32.gmra.mxu0 %v696
    %v791 = vpop.f32.mrf.mxu0
    %v792 = vadd.f32 0.0, %v791
    %v793 = vpop.f32.mrf.mxu0
    %794 = vmatprep.mubr.f32.mxu0 0.0
    %795 = vmatmul.mubr.f32.gmra.mxu0 %v699
    %v796 = vpop.f32.mrf.mxu0
    %v797 = vadd.f32 0.0, %v796
    %v798 = vpop.f32.mrf.mxu0
    %799 = vmatprep.mubr.f32.mxu0 0.0
    %800 = vmatmul.mubr.f32.gmra.mxu0 %v702
    %v801 = vpop.f32.mrf.mxu0
    %v802 = vadd.f32 0.0, %v801
    %v803 = vpop.f32.mrf.mxu0
    %804 = vmatprep.mubr.f32.mxu0 0.0
    %805 = vmatmul.mubr.f32.gmra.mxu0 %v705
    %v806 = vpop.f32.mrf.mxu0
    %v807 = vadd.f32 0.0, %v806
    %v808 = vpop.f32.mrf.mxu0
    %809 = vmatprep.mubr.f32.mxu0 0.0
    %810 = vmatmul.mubr.f32.gmra.mxu0 %v708
    %v811 = vpop.f32.mrf.mxu0
    %v812 = vadd.f32 0.0, %v811
    %v813 = vpop.f32.mrf.mxu0
    %814 = vdwg.mxu0
    %v816 = vsel %vm290, %v777, 0
    %v819 = vsel %vm290, %v128, 0
    %v822 = vsel %vm290, %v129, 0
    %v825 = vsel %vm290, %v130, 0
    %v828 = vsel %vm290, %v131, 0
    %v831 = vsel %vm290, %v132, 0
    %v834 = vsel %vm290, %v133, 0
    %v837 = vsel %vm290, %v134, 0
    %v840 = vsel %vm290, %v135, 0
    %v843 = vsel %vm290, %v136, 0
    %v846 = vsel %vm290, %v137, 0
    %v849 = vsel %vm290, %v138, 0
    %v852 = vsel %vm290, %v139, 0
    %v855 = vsel %vm290, %v140, 0
    %v858 = vsel %vm290, %v141, 0
    %v861 = vsel %vm290, %v142, 0
    %v864 = vsel %vm290, %v143, 0
    %866 = vmatprep.subr.mxu0 0.0
    %867 = vmatpush1.xpose.msra.mxu0 %v864
    %868 = vmatprep.subr.mxu0 0.0
    %869 = vmatpush1.xpose.msra.mxu0 %v861
    %870 = vmatprep.subr.mxu0 0.0
    %871 = vmatpush1.xpose.msra.mxu0 %v858
    %872 = vmatprep.subr.mxu0 0.0
    %873 = vmatpush1.xpose.msra.mxu0 %v855
    %874 = vmatprep.subr.mxu0 0.0
    %875 = vmatpush1.xpose.msra.mxu0 %v852
    %876 = vmatprep.subr.mxu0 0.0
    %877 = vmatpush1.xpose.msra.mxu0 %v849
    %878 = vmatprep.subr.mxu0 0.0
    %879 = vmatpush1.xpose.msra.mxu0 %v846
    %880 = vmatprep.subr.mxu0 0.0
    %881 = vmatpush1.xpose.msra.mxu0 %v843
    %882 = vmatprep.subr.mxu0 0.0
    %883 = vmatpush1.xpose.msra.mxu0 %v840
    %884 = vmatprep.subr.mxu0 0.0
    %885 = vmatpush1.xpose.msra.mxu0 %v837
    %886 = vmatprep.subr.mxu0 0.0
    %887 = vmatpush1.xpose.msra.mxu0 %v834
    %888 = vmatprep.subr.mxu0 0.0
    %889 = vmatpush1.xpose.msra.mxu0 %v831
    %890 = vmatprep.subr.mxu0 0.0
    %891 = vmatpush1.xpose.msra.mxu0 %v828
    %892 = vmatprep.subr.mxu0 0.0
    %893 = vmatpush1.xpose.msra.mxu0 %v825
    %894 = vmatprep.subr.mxu0 0.0
    %895 = vmatpush1.xpose.msra.mxu0 %v822
    %896 = vmatprep.subr.mxu0 0.0
    %897 = vmatpush1.xpose.msra.mxu0 %v819
    %898 = vmatprep.subr.mxu0 0.0
    %899 = vmatpush2.xpose.msra.mxu0 0.0
    %900 = vmatprep.subr.mxu0 0.0
    %901 = vmatpush2.xpose.msra.mxu0 0.0
    %902 = vmatprep.subr.mxu0 0.0
    %903 = vmatpush2.xpose.msra.mxu0 0.0
    %904 = vmatprep.subr.mxu0 0.0
    %905 = vmatpush2.xpose.msra.mxu0 0.0
    %906 = vmatprep.subr.mxu0 0.0
    %907 = vmatpush2.xpose.msra.mxu0 0.0
    %908 = vmatprep.subr.mxu0 0.0
    %909 = vmatpush2.xpose.msra.mxu0 0.0
    %910 = vmatprep.subr.mxu0 0.0
    %911 = vmatpush2.xpose.msra.mxu0 0.0
    %912 = vmatprep.subr.mxu0 0.0
    %913 = vmatpush2.xpose.msra.mxu0 0.0
    %914 = vmatprep.subr.mxu0 0.0
    %915 = vmatpush2.xpose.msra.mxu0 0.0
    %916 = vmatprep.subr.mxu0 0.0
    %917 = vmatpush2.xpose.msra.mxu0 0.0
    %918 = vmatprep.subr.mxu0 0.0
    %919 = vmatpush2.xpose.msra.mxu0 0.0
    %920 = vmatprep.subr.mxu0 0.0
    %921 = vmatpush2.xpose.msra.mxu0 0.0
    %922 = vmatprep.subr.mxu0 0.0
    %923 = vmatpush2.xpose.msra.mxu0 0.0
    %924 = vmatprep.subr.mxu0 0.0
    %925 = vmatpush2.xpose.msra.mxu0 0.0
    %926 = vmatprep.subr.mxu0 0.0
    %927 = vmatpush2.xpose.msra.mxu0 0.0
    %928 = vmatprep.subr.mxu0 0.0
    %929 = vmatpush2.xpose.msra.mxu0 0.0
    %930 = vmatprep.mubr.f32.mxu0 0.0
    %931 = vmatmul.mubr.f32.gmra.mxu0 %v816
    %v932 = vpop.f32.mrf.mxu0
    %v933 = vadd.f32 0.0, %v932
    %v934 = vpop.f32.mrf.mxu0
    %935 = vdwg.mxu0
    %v937 = vsel %vm290, %v782, 0
    %v940 = vsel %vm290, %v144, 0
    %v943 = vsel %vm290, %v145, 0
    %v946 = vsel %vm290, %v146, 0
    %v949 = vsel %vm290, %v147, 0
    %v952 = vsel %vm290, %v148, 0
    %v955 = vsel %vm290, %v149, 0
    %v958 = vsel %vm290, %v150, 0
    %v961 = vsel %vm290, %v151, 0
    %v964 = vsel %vm290, %v152, 0
    %v967 = vsel %vm290, %v153, 0
    %v970 = vsel %vm290, %v154, 0
    %v973 = vsel %vm290, %v155, 0
    %v976 = vsel %vm290, %v156, 0
    %v979 = vsel %vm290, %v157, 0
    %v982 = vsel %vm290, %v158, 0
    %v985 = vsel %vm290, %v159, 0
    %987 = vmatprep.subr.mxu0 0.0
    %988 = vmatpush1.xpose.msra.mxu0 %v985
    %989 = vmatprep.subr.mxu0 0.0
    %990 = vmatpush1.xpose.msra.mxu0 %v982
    %991 = vmatprep.subr.mxu0 0.0
    %992 = vmatpush1.xpose.msra.mxu0 %v979
    %993 = vmatprep.subr.mxu0 0.0
    %994 = vmatpush1.xpose.msra.mxu0 %v976
    %995 = vmatprep.subr.mxu0 0.0
    %996 = vmatpush1.xpose.msra.mxu0 %v973
    %997 = vmatprep.subr.mxu0 0.0
    %998 = vmatpush1.xpose.msra.mxu0 %v970
    %999 = vmatprep.subr.mxu0 0.0
    %1000 = vmatpush1.xpose.msra.mxu0 %v967
    %1001 = vmatprep.subr.mxu0 0.0
    %1002 = vmatpush1.xpose.msra.mxu0 %v964
    %1003 = vmatprep.subr.mxu0 0.0
    %1004 = vmatpush1.xpose.msra.mxu0 %v961
    %1005 = vmatprep.subr.mxu0 0.0
    %1006 = vmatpush1.xpose.msra.mxu0 %v958
    %1007 = vmatprep.subr.mxu0 0.0
    %1008 = vmatpush1.xpose.msra.mxu0 %v955
    %1009 = vmatprep.subr.mxu0 0.0
    %1010 = vmatpush1.xpose.msra.mxu0 %v952
    %1011 = vmatprep.subr.mxu0 0.0
    %1012 = vmatpush1.xpose.msra.mxu0 %v949
    %1013 = vmatprep.subr.mxu0 0.0
    %1014 = vmatpush1.xpose.msra.mxu0 %v946
    %1015 = vmatprep.subr.mxu0 0.0
    %1016 = vmatpush1.xpose.msra.mxu0 %v943
    %1017 = vmatprep.subr.mxu0 0.0
    %1018 = vmatpush1.xpose.msra.mxu0 %v940
    %1019 = vmatprep.subr.mxu0 0.0
    %1020 = vmatpush2.xpose.msra.mxu0 0.0
    %1021 = vmatprep.subr.mxu0 0.0
    %1022 = vmatpush2.xpose.msra.mxu0 0.0
    %1023 = vmatprep.subr.mxu0 0.0
    %1024 = vmatpush2.xpose.msra.mxu0 0.0
    %1025 = vmatprep.subr.mxu0 0.0
    %1026 = vmatpush2.xpose.msra.mxu0 0.0
    %1027 = vmatprep.subr.mxu0 0.0
    %1028 = vmatpush2.xpose.msra.mxu0 0.0
    %1029 = vmatprep.subr.mxu0 0.0
    %1030 = vmatpush2.xpose.msra.mxu0 0.0
    %1031 = vmatprep.subr.mxu0 0.0
    %1032 = vmatpush2.xpose.msra.mxu0 0.0
    %1033 = vmatprep.subr.mxu0 0.0
    %1034 = vmatpush2.xpose.msra.mxu0 0.0
    %1035 = vmatprep.subr.mxu0 0.0
    %1036 = vmatpush2.xpose.msra.mxu0 0.0
    %1037 = vmatprep.subr.mxu0 0.0
    %1038 = vmatpush2.xpose.msra.mxu0 0.0
    %1039 = vmatprep.subr.mxu0 0.0
    %1040 = vmatpush2.xpose.msra.mxu0 0.0
    %1041 = vmatprep.subr.mxu0 0.0
    %1042 = vmatpush2.xpose.msra.mxu0 0.0
    %1043 = vmatprep.subr.mxu0 0.0
    %1044 = vmatpush2.xpose.msra.mxu0 0.0
    %1045 = vmatprep.subr.mxu0 0.0
    %1046 = vmatpush2.xpose.msra.mxu0 0.0
    %1047 = vmatprep.subr.mxu0 0.0
    %1048 = vmatpush2.xpose.msra.mxu0 0.0
    %1049 = vmatprep.subr.mxu0 0.0
    %1050 = vmatpush2.xpose.msra.mxu0 0.0
    %1051 = vmatprep.mubr.f32.mxu0 0.0
    %1052 = vmatmul.mubr.f32.gmra.mxu0 %v937
    %v1053 = vpop.f32.mrf.mxu0
    %v1054 = vadd.f32 0.0, %v1053
    %v1055 = vpop.f32.mrf.mxu0
    %1056 = vdwg.mxu0
    %v1058 = vsel %vm290, %v787, 0
    %v1061 = vsel %vm290, %v160, 0
    %v1064 = vsel %vm290, %v161, 0
    %v1067 = vsel %vm290, %v162, 0
    %v1070 = vsel %vm290, %v163, 0
    %v1073 = vsel %vm290, %v164, 0
    %v1076 = vsel %vm290, %v165, 0
    %v1079 = vsel %vm290, %v166, 0
    %v1082 = vsel %vm290, %v167, 0
    %v1085 = vsel %vm290, %v168, 0
    %v1088 = vsel %vm290, %v169, 0
    %v1091 = vsel %vm290, %v170, 0
    %v1094 = vsel %vm290, %v171, 0
    %v1097 = vsel %vm290, %v172, 0
    %v1100 = vsel %vm290, %v173, 0
    %v1103 = vsel %vm290, %v174, 0
    %v1106 = vsel %vm290, %v175, 0
    %1108 = vmatprep.subr.mxu0 0.0
    %1109 = vmatpush1.xpose.msra.mxu0 %v1106
    %1110 = vmatprep.subr.mxu0 0.0
    %1111 = vmatpush1.xpose.msra.mxu0 %v1103
    %1112 = vmatprep.subr.mxu0 0.0
    %1113 = vmatpush1.xpose.msra.mxu0 %v1100
    %1114 = vmatprep.subr.mxu0 0.0
    %1115 = vmatpush1.xpose.msra.mxu0 %v1097
    %1116 = vmatprep.subr.mxu0 0.0
    %1117 = vmatpush1.xpose.msra.mxu0 %v1094
    %1118 = vmatprep.subr.mxu0 0.0
    %1119 = vmatpush1.xpose.msra.mxu0 %v1091
    %1120 = vmatprep.subr.mxu0 0.0
    %1121 = vmatpush1.xpose.msra.mxu0 %v1088
    %1122 = vmatprep.subr.mxu0 0.0
    %1123 = vmatpush1.xpose.msra.mxu0 %v1085
    %1124 = vmatprep.subr.mxu0 0.0
    %1125 = vmatpush1.xpose.msra.mxu0 %v1082
    %1126 = vmatprep.subr.mxu0 0.0
    %1127 = vmatpush1.xpose.msra.mxu0 %v1079
    %1128 = vmatprep.subr.mxu0 0.0
    %1129 = vmatpush1.xpose.msra.mxu0 %v1076
    %1130 = vmatprep.subr.mxu0 0.0
    %1131 = vmatpush1.xpose.msra.mxu0 %v1073
    %1132 = vmatprep.subr.mxu0 0.0
    %1133 = vmatpush1.xpose.msra.mxu0 %v1070
    %1134 = vmatprep.subr.mxu0 0.0
    %1135 = vmatpush1.xpose.msra.mxu0 %v1067
    %1136 = vmatprep.subr.mxu0 0.0
    %1137 = vmatpush1.xpose.msra.mxu0 %v1064
    %1138 = vmatprep.subr.mxu0 0.0
    %1139 = vmatpush1.xpose.msra.mxu0 %v1061
    %1140 = vmatprep.subr.mxu0 0.0
    %1141 = vmatpush2.xpose.msra.mxu0 0.0
    %1142 = vmatprep.subr.mxu0 0.0
    %1143 = vmatpush2.xpose.msra.mxu0 0.0
    %1144 = vmatprep.subr.mxu0 0.0
    %1145 = vmatpush2.xpose.msra.mxu0 0.0
    %1146 = vmatprep.subr.mxu0 0.0
    %1147 = vmatpush2.xpose.msra.mxu0 0.0
    %1148 = vmatprep.subr.mxu0 0.0
    %1149 = vmatpush2.xpose.msra.mxu0 0.0
    %1150 = vmatprep.subr.mxu0 0.0
    %1151 = vmatpush2.xpose.msra.mxu0 0.0
    %1152 = vmatprep.subr.mxu0 0.0
    %1153 = vmatpush2.xpose.msra.mxu0 0.0
    %1154 = vmatprep.subr.mxu0 0.0
    %1155 = vmatpush2.xpose.msra.mxu0 0.0
    %1156 = vmatprep.subr.mxu0 0.0
    %1157 = vmatpush2.xpose.msra.mxu0 0.0
    %1158 = vmatprep.subr.mxu0 0.0
    %1159 = vmatpush2.xpose.msra.mxu0 0.0
    %1160 = vmatprep.subr.mxu0 0.0
    %1161 = vmatpush2.xpose.msra.mxu0 0.0
    %1162 = vmatprep.subr.mxu0 0.0
    %1163 = vmatpush2.xpose.msra.mxu0 0.0
    %1164 = vmatprep.subr.mxu0 0.0
    %1165 = vmatpush2.xpose.msra.mxu0 0.0
    %1166 = vmatprep.subr.mxu0 0.0
    %1167 = vmatpush2.xpose.msra.mxu0 0.0
    %1168 = vmatprep.subr.mxu0 0.0
    %1169 = vmatpush2.xpose.msra.mxu0 0.0
    %1170 = vmatprep.subr.mxu0 0.0
    %1171 = vmatpush2.xpose.msra.mxu0 0.0
    %1172 = vmatprep.mubr.f32.mxu0 0.0
    %1173 = vmatmul.mubr.f32.gmra.mxu0 %v1058
    %v1174 = vpop.f32.mrf.mxu0
    %v1175 = vadd.f32 0.0, %v1174
    %v1176 = vpop.f32.mrf.mxu0
    %1177 = vdwg.mxu0
    %v1179 = vsel %vm290, %v792, 0
    %v1182 = vsel %vm290, %v176, 0
    %v1185 = vsel %vm290, %v177, 0
    %v1188 = vsel %vm290, %v178, 0
    %v1191 = vsel %vm290, %v179, 0
    %v1194 = vsel %vm290, %v180, 0
    %v1197 = vsel %vm290, %v181, 0
    %v1200 = vsel %vm290, %v182, 0
    %v1203 = vsel %vm290, %v183, 0
    %v1206 = vsel %vm290, %v184, 0
    %v1209 = vsel %vm290, %v185, 0
    %v1212 = vsel %vm290, %v186, 0
    %v1215 = vsel %vm290, %v187, 0
    %v1218 = vsel %vm290, %v188, 0
    %v1221 = vsel %vm290, %v189, 0
    %v1224 = vsel %vm290, %v190, 0
    %v1227 = vsel %vm290, %v191, 0
    %1229 = vmatprep.subr.mxu0 0.0
    %1230 = vmatpush1.xpose.msra.mxu0 %v1227
    %1231 = vmatprep.subr.mxu0 0.0
    %1232 = vmatpush1.xpose.msra.mxu0 %v1224
    %1233 = vmatprep.subr.mxu0 0.0
    %1234 = vmatpush1.xpose.msra.mxu0 %v1221
    %1235 = vmatprep.subr.mxu0 0.0
    %1236 = vmatpush1.xpose.msra.mxu0 %v1218
    %1237 = vmatprep.subr.mxu0 0.0
    %1238 = vmatpush1.xpose.msra.mxu0 %v1215
    %1239 = vmatprep.subr.mxu0 0.0
    %1240 = vmatpush1.xpose.msra.mxu0 %v1212
    %1241 = vmatprep.subr.mxu0 0.0
    %1242 = vmatpush1.xpose.msra.mxu0 %v1209
    %1243 = vmatprep.subr.mxu0 0.0
    %1244 = vmatpush1.xpose.msra.mxu0 %v1206
    %1245 = vmatprep.subr.mxu0 0.0
    %1246 = vmatpush1.xpose.msra.mxu0 %v1203
    %1247 = vmatprep.subr.mxu0 0.0
    %1248 = vmatpush1.xpose.msra.mxu0 %v1200
    %1249 = vmatprep.subr.mxu0 0.0
    %1250 = vmatpush1.xpose.msra.mxu0 %v1197
    %1251 = vmatprep.subr.mxu0 0.0
    %1252 = vmatpush1.xpose.msra.mxu0 %v1194
    %1253 = vmatprep.subr.mxu0 0.0
    %1254 = vmatpush1.xpose.msra.mxu0 %v1191
    %1255 = vmatprep.subr.mxu0 0.0
    %1256 = vmatpush1.xpose.msra.mxu0 %v1188
    %1257 = vmatprep.subr.mxu0 0.0
    %1258 = vmatpush1.xpose.msra.mxu0 %v1185
    %1259 = vmatprep.subr.mxu0 0.0
    %1260 = vmatpush1.xpose.msra.mxu0 %v1182
    %1261 = vmatprep.subr.mxu0 0.0
    %1262 = vmatpush2.xpose.msra.mxu0 0.0
    %1263 = vmatprep.subr.mxu0 0.0
    %1264 = vmatpush2.xpose.msra.mxu0 0.0
    %1265 = vmatprep.subr.mxu0 0.0
    %1266 = vmatpush2.xpose.msra.mxu0 0.0
    %1267 = vmatprep.subr.mxu0 0.0
    %1268 = vmatpush2.xpose.msra.mxu0 0.0
    %1269 = vmatprep.subr.mxu0 0.0
    %1270 = vmatpush2.xpose.msra.mxu0 0.0
    %1271 = vmatprep.subr.mxu0 0.0
    %1272 = vmatpush2.xpose.msra.mxu0 0.0
    %1273 = vmatprep.subr.mxu0 0.0
    %1274 = vmatpush2.xpose.msra.mxu0 0.0
    %1275 = vmatprep.subr.mxu0 0.0
    %1276 = vmatpush2.xpose.msra.mxu0 0.0
    %1277 = vmatprep.subr.mxu0 0.0
    %1278 = vmatpush2.xpose.msra.mxu0 0.0
    %1279 = vmatprep.subr.mxu0 0.0
    %1280 = vmatpush2.xpose.msra.mxu0 0.0
    %1281 = vmatprep.subr.mxu0 0.0
    %1282 = vmatpush2.xpose.msra.mxu0 0.0
    %1283 = vmatprep.subr.mxu0 0.0
    %1284 = vmatpush2.xpose.msra.mxu0 0.0
    %1285 = vmatprep.subr.mxu0 0.0
    %1286 = vmatpush2.xpose.msra.mxu0 0.0
    %1287 = vmatprep.subr.mxu0 0.0
    %1288 = vmatpush2.xpose.msra.mxu0 0.0
    %1289 = vmatprep.subr.mxu0 0.0
    %1290 = vmatpush2.xpose.msra.mxu0 0.0
    %1291 = vmatprep.subr.mxu0 0.0
    %1292 = vmatpush2.xpose.msra.mxu0 0.0
    %1293 = vmatprep.mubr.f32.mxu0 0.0
    %1294 = vmatmul.mubr.f32.gmra.mxu0 %v1179
    %v1295 = vpop.f32.mrf.mxu0
    %v1296 = vadd.f32 0.0, %v1295
    %v1297 = vpop.f32.mrf.mxu0
    %1298 = vdwg.mxu0
    %v1300 = vsel %vm290, %v797, 0
    %v1303 = vsel %vm290, %v192, 0
    %v1306 = vsel %vm290, %v193, 0
    %v1309 = vsel %vm290, %v194, 0
    %v1312 = vsel %vm290, %v195, 0
    %v1315 = vsel %vm290, %v196, 0
    %v1318 = vsel %vm290, %v197, 0
    %v1321 = vsel %vm290, %v198, 0
    %v1324 = vsel %vm290, %v199, 0
    %v1327 = vsel %vm290, %v200, 0
    %v1330 = vsel %vm290, %v201, 0
    %v1333 = vsel %vm290, %v202, 0
    %v1336 = vsel %vm290, %v203, 0
    %v1339 = vsel %vm290, %v204, 0
    %v1342 = vsel %vm290, %v205, 0
    %v1345 = vsel %vm290, %v206, 0
    %v1348 = vsel %vm290, %v207, 0
    %1350 = vmatprep.subr.mxu0 0.0
    %1351 = vmatpush1.xpose.msra.mxu0 %v1348
    %1352 = vmatprep.subr.mxu0 0.0
    %1353 = vmatpush1.xpose.msra.mxu0 %v1345
    %1354 = vmatprep.subr.mxu0 0.0
    %1355 = vmatpush1.xpose.msra.mxu0 %v1342
    %1356 = vmatprep.subr.mxu0 0.0
    %1357 = vmatpush1.xpose.msra.mxu0 %v1339
    %1358 = vmatprep.subr.mxu0 0.0
    %1359 = vmatpush1.xpose.msra.mxu0 %v1336
    %1360 = vmatprep.subr.mxu0 0.0
    %1361 = vmatpush1.xpose.msra.mxu0 %v1333
    %1362 = vmatprep.subr.mxu0 0.0
    %1363 = vmatpush1.xpose.msra.mxu0 %v1330
    %1364 = vmatprep.subr.mxu0 0.0
    %1365 = vmatpush1.xpose.msra.mxu0 %v1327
    %1366 = vmatprep.subr.mxu0 0.0
    %1367 = vmatpush1.xpose.msra.mxu0 %v1324
    %1368 = vmatprep.subr.mxu0 0.0
    %1369 = vmatpush1.xpose.msra.mxu0 %v1321
    %1370 = vmatprep.subr.mxu0 0.0
    %1371 = vmatpush1.xpose.msra.mxu0 %v1318
    %1372 = vmatprep.subr.mxu0 0.0
    %1373 = vmatpush1.xpose.msra.mxu0 %v1315
    %1374 = vmatprep.subr.mxu0 0.0
    %1375 = vmatpush1.xpose.msra.mxu0 %v1312
    %1376 = vmatprep.subr.mxu0 0.0
    %1377 = vmatpush1.xpose.msra.mxu0 %v1309
    %1378 = vmatprep.subr.mxu0 0.0
    %1379 = vmatpush1.xpose.msra.mxu0 %v1306
    %1380 = vmatprep.subr.mxu0 0.0
    %1381 = vmatpush1.xpose.msra.mxu0 %v1303
    %1382 = vmatprep.subr.mxu0 0.0
    %1383 = vmatpush2.xpose.msra.mxu0 0.0
    %1384 = vmatprep.subr.mxu0 0.0
    %1385 = vmatpush2.xpose.msra.mxu0 0.0
    %1386 = vmatprep.subr.mxu0 0.0
    %1387 = vmatpush2.xpose.msra.mxu0 0.0
    %1388 = vmatprep.subr.mxu0 0.0
    %1389 = vmatpush2.xpose.msra.mxu0 0.0
    %1390 = vmatprep.subr.mxu0 0.0
    %1391 = vmatpush2.xpose.msra.mxu0 0.0
    %1392 = vmatprep.subr.mxu0 0.0
    %1393 = vmatpush2.xpose.msra.mxu0 0.0
    %1394 = vmatprep.subr.mxu0 0.0
    %1395 = vmatpush2.xpose.msra.mxu0 0.0
    %1396 = vmatprep.subr.mxu0 0.0
    %1397 = vmatpush2.xpose.msra.mxu0 0.0
    %1398 = vmatprep.subr.mxu0 0.0
    %1399 = vmatpush2.xpose.msra.mxu0 0.0
    %1400 = vmatprep.subr.mxu0 0.0
    %1401 = vmatpush2.xpose.msra.mxu0 0.0
    %1402 = vmatprep.subr.mxu0 0.0
    %1403 = vmatpush2.xpose.msra.mxu0 0.0
    %1404 = vmatprep.subr.mxu0 0.0
    %1405 = vmatpush2.xpose.msra.mxu0 0.0
    %1406 = vmatprep.subr.mxu0 0.0
    %1407 = vmatpush2.xpose.msra.mxu0 0.0
    %1408 = vmatprep.subr.mxu0 0.0
    %1409 = vmatpush2.xpose.msra.mxu0 0.0
    %1410 = vmatprep.subr.mxu0 0.0
    %1411 = vmatpush2.xpose.msra.mxu0 0.0
    %1412 = vmatprep.subr.mxu0 0.0
    %1413 = vmatpush2.xpose.msra.mxu0 0.0
    %1414 = vmatprep.mubr.f32.mxu0 0.0
    %1415 = vmatmul.mubr.f32.gmra.mxu0 %v1300
    %v1416 = vpop.f32.mrf.mxu0
    %v1417 = vadd.f32 0.0, %v1416
    %v1418 = vpop.f32.mrf.mxu0
    %1419 = vdwg.mxu0
    %v1421 = vsel %vm290, %v802, 0
    %v1424 = vsel %vm290, %v208, 0
    %v1427 = vsel %vm290, %v209, 0
    %v1430 = vsel %vm290, %v210, 0
    %v1433 = vsel %vm290, %v211, 0
    %v1436 = vsel %vm290, %v212, 0
    %v1439 = vsel %vm290, %v213, 0
    %v1442 = vsel %vm290, %v214, 0
    %v1445 = vsel %vm290, %v215, 0
    %v1448 = vsel %vm290, %v216, 0
    %v1451 = vsel %vm290, %v217, 0
    %v1454 = vsel %vm290, %v218, 0
    %v1457 = vsel %vm290, %v219, 0
    %v1460 = vsel %vm290, %v220, 0
    %v1463 = vsel %vm290, %v221, 0
    %v1466 = vsel %vm290, %v222, 0
    %v1469 = vsel %vm290, %v223, 0
    %1471 = vmatprep.subr.mxu0 0.0
    %1472 = vmatpush1.xpose.msra.mxu0 %v1469
    %1473 = vmatprep.subr.mxu0 0.0
    %1474 = vmatpush1.xpose.msra.mxu0 %v1466
    %1475 = vmatprep.subr.mxu0 0.0
    %1476 = vmatpush1.xpose.msra.mxu0 %v1463
    %1477 = vmatprep.subr.mxu0 0.0
    %1478 = vmatpush1.xpose.msra.mxu0 %v1460
    %1479 = vmatprep.subr.mxu0 0.0
    %1480 = vmatpush1.xpose.msra.mxu0 %v1457
    %1481 = vmatprep.subr.mxu0 0.0
    %1482 = vmatpush1.xpose.msra.mxu0 %v1454
    %1483 = vmatprep.subr.mxu0 0.0
    %1484 = vmatpush1.xpose.msra.mxu0 %v1451
    %1485 = vmatprep.subr.mxu0 0.0
    %1486 = vmatpush1.xpose.msra.mxu0 %v1448
    %1487 = vmatprep.subr.mxu0 0.0
    %1488 = vmatpush1.xpose.msra.mxu0 %v1445
    %1489 = vmatprep.subr.mxu0 0.0
    %1490 = vmatpush1.xpose.msra.mxu0 %v1442
    %1491 = vmatprep.subr.mxu0 0.0
    %1492 = vmatpush1.xpose.msra.mxu0 %v1439
    %1493 = vmatprep.subr.mxu0 0.0
    %1494 = vmatpush1.xpose.msra.mxu0 %v1436
    %1495 = vmatprep.subr.mxu0 0.0
    %1496 = vmatpush1.xpose.msra.mxu0 %v1433
    %1497 = vmatprep.subr.mxu0 0.0
    %1498 = vmatpush1.xpose.msra.mxu0 %v1430
    %1499 = vmatprep.subr.mxu0 0.0
    %1500 = vmatpush1.xpose.msra.mxu0 %v1427
    %1501 = vmatprep.subr.mxu0 0.0
    %1502 = vmatpush1.xpose.msra.mxu0 %v1424
    %1503 = vmatprep.subr.mxu0 0.0
    %1504 = vmatpush2.xpose.msra.mxu0 0.0
    %1505 = vmatprep.subr.mxu0 0.0
    %1506 = vmatpush2.xpose.msra.mxu0 0.0
    %1507 = vmatprep.subr.mxu0 0.0
    %1508 = vmatpush2.xpose.msra.mxu0 0.0
    %1509 = vmatprep.subr.mxu0 0.0
    %1510 = vmatpush2.xpose.msra.mxu0 0.0
    %1511 = vmatprep.subr.mxu0 0.0
    %1512 = vmatpush2.xpose.msra.mxu0 0.0
    %1513 = vmatprep.subr.mxu0 0.0
    %1514 = vmatpush2.xpose.msra.mxu0 0.0
    %1515 = vmatprep.subr.mxu0 0.0
    %1516 = vmatpush2.xpose.msra.mxu0 0.0
    %1517 = vmatprep.subr.mxu0 0.0
    %1518 = vmatpush2.xpose.msra.mxu0 0.0
    %1519 = vmatprep.subr.mxu0 0.0
    %1520 = vmatpush2.xpose.msra.mxu0 0.0
    %1521 = vmatprep.subr.mxu0 0.0
    %1522 = vmatpush2.xpose.msra.mxu0 0.0
    %1523 = vmatprep.subr.mxu0 0.0
    %1524 = vmatpush2.xpose.msra.mxu0 0.0
    %1525 = vmatprep.subr.mxu0 0.0
    %1526 = vmatpush2.xpose.msra.mxu0 0.0
    %1527 = vmatprep.subr.mxu0 0.0
    %1528 = vmatpush2.xpose.msra.mxu0 0.0
    %1529 = vmatprep.subr.mxu0 0.0
    %1530 = vmatpush2.xpose.msra.mxu0 0.0
    %1531 = vmatprep.subr.mxu0 0.0
    %1532 = vmatpush2.xpose.msra.mxu0 0.0
    %1533 = vmatprep.subr.mxu0 0.0
    %1534 = vmatpush2.xpose.msra.mxu0 0.0
    %1535 = vmatprep.mubr.f32.mxu0 0.0
    %1536 = vmatmul.mubr.f32.gmra.mxu0 %v1421
    %v1537 = vpop.f32.mrf.mxu0
    %v1538 = vadd.f32 0.0, %v1537
    %v1539 = vpop.f32.mrf.mxu0
    %1540 = vdwg.mxu0
    %v1542 = vsel %vm290, %v807, 0
    %v1545 = vsel %vm290, %v224, 0
    %v1548 = vsel %vm290, %v225, 0
    %v1551 = vsel %vm290, %v226, 0
    %v1554 = vsel %vm290, %v227, 0
    %v1557 = vsel %vm290, %v228, 0
    %v1560 = vsel %vm290, %v229, 0
    %v1563 = vsel %vm290, %v230, 0
    %v1566 = vsel %vm290, %v231, 0
    %v1569 = vsel %vm290, %v232, 0
    %v1572 = vsel %vm290, %v233, 0
    %v1575 = vsel %vm290, %v234, 0
    %v1578 = vsel %vm290, %v235, 0
    %v1581 = vsel %vm290, %v236, 0
    %v1584 = vsel %vm290, %v237, 0
    %v1587 = vsel %vm290, %v238, 0
    %v1590 = vsel %vm290, %v239, 0
    %1592 = vmatprep.subr.mxu0 0.0
    %1593 = vmatpush1.xpose.msra.mxu0 %v1590
    %1594 = vmatprep.subr.mxu0 0.0
    %1595 = vmatpush1.xpose.msra.mxu0 %v1587
    %1596 = vmatprep.subr.mxu0 0.0
    %1597 = vmatpush1.xpose.msra.mxu0 %v1584
    %1598 = vmatprep.subr.mxu0 0.0
    %1599 = vmatpush1.xpose.msra.mxu0 %v1581
    %1600 = vmatprep.subr.mxu0 0.0
    %1601 = vmatpush1.xpose.msra.mxu0 %v1578
    %1602 = vmatprep.subr.mxu0 0.0
    %1603 = vmatpush1.xpose.msra.mxu0 %v1575
    %1604 = vmatprep.subr.mxu0 0.0
    %1605 = vmatpush1.xpose.msra.mxu0 %v1572
    %1606 = vmatprep.subr.mxu0 0.0
    %1607 = vmatpush1.xpose.msra.mxu0 %v1569
    %1608 = vmatprep.subr.mxu0 0.0
    %1609 = vmatpush1.xpose.msra.mxu0 %v1566
    %1610 = vmatprep.subr.mxu0 0.0
    %1611 = vmatpush1.xpose.msra.mxu0 %v1563
    %1612 = vmatprep.subr.mxu0 0.0
    %1613 = vmatpush1.xpose.msra.mxu0 %v1560
    %1614 = vmatprep.subr.mxu0 0.0
    %1615 = vmatpush1.xpose.msra.mxu0 %v1557
    %1616 = vmatprep.subr.mxu0 0.0
    %1617 = vmatpush1.xpose.msra.mxu0 %v1554
    %1618 = vmatprep.subr.mxu0 0.0
    %1619 = vmatpush1.xpose.msra.mxu0 %v1551
    %1620 = vmatprep.subr.mxu0 0.0
    %1621 = vmatpush1.xpose.msra.mxu0 %v1548
    %1622 = vmatprep.subr.mxu0 0.0
    %1623 = vmatpush1.xpose.msra.mxu0 %v1545
    %1624 = vmatprep.subr.mxu0 0.0
    %1625 = vmatpush2.xpose.msra.mxu0 0.0
    %1626 = vmatprep.subr.mxu0 0.0
    %1627 = vmatpush2.xpose.msra.mxu0 0.0
    %1628 = vmatprep.subr.mxu0 0.0
    %1629 = vmatpush2.xpose.msra.mxu0 0.0
    %1630 = vmatprep.subr.mxu0 0.0
    %1631 = vmatpush2.xpose.msra.mxu0 0.0
    %1632 = vmatprep.subr.mxu0 0.0
    %1633 = vmatpush2.xpose.msra.mxu0 0.0
    %1634 = vmatprep.subr.mxu0 0.0
    %1635 = vmatpush2.xpose.msra.mxu0 0.0
    %1636 = vmatprep.subr.mxu0 0.0
    %1637 = vmatpush2.xpose.msra.mxu0 0.0
    %1638 = vmatprep.subr.mxu0 0.0
    %1639 = vmatpush2.xpose.msra.mxu0 0.0
    %1640 = vmatprep.subr.mxu0 0.0
    %1641 = vmatpush2.xpose.msra.mxu0 0.0
    %1642 = vmatprep.subr.mxu0 0.0
    %1643 = vmatpush2.xpose.msra.mxu0 0.0
    %1644 = vmatprep.subr.mxu0 0.0
    %1645 = vmatpush2.xpose.msra.mxu0 0.0
    %1646 = vmatprep.subr.mxu0 0.0
    %1647 = vmatpush2.xpose.msra.mxu0 0.0
    %1648 = vmatprep.subr.mxu0 0.0
    %1649 = vmatpush2.xpose.msra.mxu0 0.0
    %1650 = vmatprep.subr.mxu0 0.0
    %1651 = vmatpush2.xpose.msra.mxu0 0.0
    %1652 = vmatprep.subr.mxu0 0.0
    %1653 = vmatpush2.xpose.msra.mxu0 0.0
    %1654 = vmatprep.subr.mxu0 0.0
    %1655 = vmatpush2.xpose.msra.mxu0 0.0
    %1656 = vmatprep.mubr.f32.mxu0 0.0
    %1657 = vmatmul.mubr.f32.gmra.mxu0 %v1542
    %v1658 = vpop.f32.mrf.mxu0
    %v1659 = vadd.f32 0.0, %v1658
    %v1660 = vpop.f32.mrf.mxu0
    %1661 = vdwg.mxu0
    %v1663 = vsel %vm290, %v812, 0
    %v1666 = vsel %vm290, %v240, 0
    %v1669 = vsel %vm290, %v241, 0
    %v1672 = vsel %vm290, %v242, 0
    %v1675 = vsel %vm290, %v243, 0
    %v1678 = vsel %vm290, %v244, 0
    %v1681 = vsel %vm290, %v245, 0
    %v1684 = vsel %vm290, %v246, 0
    %v1687 = vsel %vm290, %v247, 0
    %v1690 = vsel %vm290, %v248, 0
    %v1693 = vsel %vm290, %v249, 0
    %v1696 = vsel %vm290, %v250, 0
    %v1699 = vsel %vm290, %v251, 0
    %v1702 = vsel %vm290, %v252, 0
    %v1705 = vsel %vm290, %v253, 0
    %v1708 = vsel %vm290, %v254, 0
    %v1711 = vsel %vm290, %v255, 0
    %1713 = vmatprep.subr.mxu0 0.0
    %1714 = vmatpush1.xpose.msra.mxu0 %v1711
    %1715 = vmatprep.subr.mxu0 0.0
    %1716 = vmatpush1.xpose.msra.mxu0 %v1708
    %1717 = vmatprep.subr.mxu0 0.0
    %1718 = vmatpush1.xpose.msra.mxu0 %v1705
    %1719 = vmatprep.subr.mxu0 0.0
    %1720 = vmatpush1.xpose.msra.mxu0 %v1702
    %1721 = vmatprep.subr.mxu0 0.0
    %1722 = vmatpush1.xpose.msra.mxu0 %v1699
    %1723 = vmatprep.subr.mxu0 0.0
    %1724 = vmatpush1.xpose.msra.mxu0 %v1696
    %1725 = vmatprep.subr.mxu0 0.0
    %1726 = vmatpush1.xpose.msra.mxu0 %v1693
    %1727 = vmatprep.subr.mxu0 0.0
    %1728 = vmatpush1.xpose.msra.mxu0 %v1690
    %1729 = vmatprep.subr.mxu0 0.0
    %1730 = vmatpush1.xpose.msra.mxu0 %v1687
    %1731 = vmatprep.subr.mxu0 0.0
    %1732 = vmatpush1.xpose.msra.mxu0 %v1684
    %1733 = vmatprep.subr.mxu0 0.0
    %1734 = vmatpush1.xpose.msra.mxu0 %v1681
    %1735 = vmatprep.subr.mxu0 0.0
    %1736 = vmatpush1.xpose.msra.mxu0 %v1678
    %1737 = vmatprep.subr.mxu0 0.0
    %1738 = vmatpush1.xpose.msra.mxu0 %v1675
    %1739 = vmatprep.subr.mxu0 0.0
    %1740 = vmatpush1.xpose.msra.mxu0 %v1672
    %1741 = vmatprep.subr.mxu0 0.0
    %1742 = vmatpush1.xpose.msra.mxu0 %v1669
    %1743 = vmatprep.subr.mxu0 0.0
    %1744 = vmatpush1.xpose.msra.mxu0 %v1666
    %1745 = vmatprep.subr.mxu0 0.0
    %1746 = vmatpush2.xpose.msra.mxu0 0.0
    %1747 = vmatprep.subr.mxu0 0.0
    %1748 = vmatpush2.xpose.msra.mxu0 0.0
    %1749 = vmatprep.subr.mxu0 0.0
    %1750 = vmatpush2.xpose.msra.mxu0 0.0
    %1751 = vmatprep.subr.mxu0 0.0
    %1752 = vmatpush2.xpose.msra.mxu0 0.0
    %1753 = vmatprep.subr.mxu0 0.0
    %1754 = vmatpush2.xpose.msra.mxu0 0.0
    %1755 = vmatprep.subr.mxu0 0.0
    %1756 = vmatpush2.xpose.msra.mxu0 0.0
    %1757 = vmatprep.subr.mxu0 0.0
    %1758 = vmatpush2.xpose.msra.mxu0 0.0
    %1759 = vmatprep.subr.mxu0 0.0
    %1760 = vmatpush2.xpose.msra.mxu0 0.0
    %1761 = vmatprep.subr.mxu0 0.0
    %1762 = vmatpush2.xpose.msra.mxu0 0.0
    %1763 = vmatprep.subr.mxu0 0.0
    %1764 = vmatpush2.xpose.msra.mxu0 0.0
    %1765 = vmatprep.subr.mxu0 0.0
    %1766 = vmatpush2.xpose.msra.mxu0 0.0
    %1767 = vmatprep.subr.mxu0 0.0
    %1768 = vmatpush2.xpose.msra.mxu0 0.0
    %1769 = vmatprep.subr.mxu0 0.0
    %1770 = vmatpush2.xpose.msra.mxu0 0.0
    %1771 = vmatprep.subr.mxu0 0.0
    %1772 = vmatpush2.xpose.msra.mxu0 0.0
    %1773 = vmatprep.subr.mxu0 0.0
    %1774 = vmatpush2.xpose.msra.mxu0 0.0
    %1775 = vmatprep.subr.mxu0 0.0
    %1776 = vmatpush2.xpose.msra.mxu0 0.0
    %1777 = vmatprep.mubr.f32.mxu0 0.0
    %1778 = vmatmul.mubr.f32.gmra.mxu0 %v1663
    %v1779 = vpop.f32.mrf.mxu0
    %v1780 = vadd.f32 0.0, %v1779
    %v1781 = vpop.f32.mrf.mxu0
    %1782 = vdwg.mxu0
    %v1784 = vcombine.high %v256, %v256
    %v1786 = vunpack.c.l.s4 1966171168
    %v1787 = vunpack.c.0.s8 %v1786
    %v1788 = vlaneseq
    %v1789 = vshrl.u32 %v1788, 7
    %v1790 = vsub.s32 %v1787, %v1789
    %v1791 = vrot.slane %v256, %v1790
    %v1793 = vunpack.c.l.s4 1966171168
    %v1794 = vunpack.c.0.s8 %v1793
    %v1795 = vlaneseq
    %v1796 = vshrl.u32 %v1795, 7
    %v1797 = vsub.s32 %v1794, %v1796
    %v1798 = vrot.slane %v1784, %v1797
    %v1799 = vcombine.high %v1791, %v1791
    %v1800 = vcombine.high %v1798, %v1798
    %v1802 = vunpack.c.l.s4 1966171168
    %v1803 = vunpack.c.0.s8 %v1802
    %v1804 = vlaneseq
    %v1805 = vshrl.u32 %v1804, 7
    %v1806 = vsub.s32 %v1803, %v1805
    %v1807 = vrot.slane %v1791, %v1806
    %v1809 = vunpack.c.l.s4 1966171168
    %v1810 = vunpack.c.0.s8 %v1809
    %v1811 = vlaneseq
    %v1812 = vshrl.u32 %v1811, 7
    %v1813 = vsub.s32 %v1810, %v1812
    %v1814 = vrot.slane %v1798, %v1813
    %v1816 = vunpack.c.l.s4 1966171168
    %v1817 = vunpack.c.0.s8 %v1816
    %v1818 = vlaneseq
    %v1819 = vshrl.u32 %v1818, 7
    %v1820 = vsub.s32 %v1817, %v1819
    %v1821 = vrot.slane %v1799, %v1820
    %v1823 = vunpack.c.l.s4 1966171168
    %v1824 = vunpack.c.0.s8 %v1823
    %v1825 = vlaneseq
    %v1826 = vshrl.u32 %v1825, 7
    %v1827 = vsub.s32 %v1824, %v1826
    %v1828 = vrot.slane %v1800, %v1827
    %v1829 = vcombine.high %v1807, %v1807
    %v1830 = vcombine.high %v1814, %v1814
    %v1831 = vcombine.high %v1821, %v1821
    %v1832 = vcombine.high %v1828, %v1828
    %vm1841 = vcmp.gt.f32.partialorder %v1807, 0.5
    %vm1842 = vcmp.gt.f32.partialorder %v1821, 0.5
    %vm1843 = vcmp.gt.f32.partialorder %v1829, 0.5
    %vm1844 = vcmp.gt.f32.partialorder %v1831, 0.5
    %vm1845 = vcmp.gt.f32.partialorder %v1814, 0.5
    %vm1846 = vcmp.gt.f32.partialorder %v1828, 0.5
    %vm1847 = vcmp.gt.f32.partialorder %v1830, 0.5
    %vm1848 = vcmp.gt.f32.partialorder %v1832, 0.5
    %v1849 = vsel %vm1841, 1, 0
    %v1850 = vsel %vm1842, 1, 0
    %v1851 = vsel %vm1843, 1, 0
    %v1852 = vsel %vm1844, 1, 0
    %v1853 = vsel %vm1845, 1, 0
    %v1854 = vsel %vm1846, 1, 0
    %v1855 = vsel %vm1847, 1, 0
    %v1856 = vsel %vm1848, 1, 0
    %v1857 = vlaneseq
    %v1858 = vshrl.u32 %v1857, 7
    %v1859 = vsub.s32 0, %v1858
    %v1860 = vrot.slane %v1849, %v1859
    %v1861 = vlaneseq
    %v1862 = vshrl.u32 %v1861, 7
    %v1863 = vsub.s32 0, %v1862
    %v1864 = vrot.slane %v1850, %v1863
    %v1865 = vlaneseq
    %v1866 = vshrl.u32 %v1865, 7
    %v1867 = vsub.s32 0, %v1866
    %v1868 = vrot.slane %v1851, %v1867
    %v1869 = vlaneseq
    %v1870 = vshrl.u32 %v1869, 7
    %v1871 = vsub.s32 0, %v1870
    %v1872 = vrot.slane %v1852, %v1871
    %v1873 = vlaneseq
    %v1874 = vshrl.u32 %v1873, 7
    %v1875 = vsub.s32 0, %v1874
    %v1876 = vrot.slane %v1853, %v1875
    %v1877 = vlaneseq
    %v1878 = vshrl.u32 %v1877, 7
    %v1879 = vsub.s32 0, %v1878
    %v1880 = vrot.slane %v1854, %v1879
    %v1881 = vlaneseq
    %v1882 = vshrl.u32 %v1881, 7
    %v1883 = vsub.s32 0, %v1882
    %v1884 = vrot.slane %v1855, %v1883
    %v1885 = vlaneseq
    %v1886 = vshrl.u32 %v1885, 7
    %v1887 = vsub.s32 0, %v1886
    %v1888 = vrot.slane %v1856, %v1887
    %vm1889 = vcmp.eq.s32.totalorder %v1860, 1
    %vm1890 = vcmp.eq.s32.totalorder %v1864, 1
    %vm1891 = vcmp.eq.s32.totalorder %v1868, 1
    %vm1892 = vcmp.eq.s32.totalorder %v1872, 1
    %vm1893 = vcmp.eq.s32.totalorder %v1876, 1
    %vm1894 = vcmp.eq.s32.totalorder %v1880, 1
    %vm1895 = vcmp.eq.s32.totalorder %v1884, 1
    %vm1896 = vcmp.eq.s32.totalorder %v1888, 1
    %v1897 = vsel %vm1889, -inf, %v933
    %v1898 = vsel %vm1890, -inf, %v1054
    %v1899 = vsel %vm1891, -inf, %v1175
    %v1900 = vsel %vm1892, -inf, %v1296
    %v1901 = vsel %vm1893, -inf, %v1417
    %v1902 = vsel %vm1894, -inf, %v1538
    %v1903 = vsel %vm1895, -inf, %v1659
    %v1904 = vsel %vm1896, -inf, %v1780
    %1905 = vmax.xlane.f32.xlu0 %v1897
    %v1906 = vpop.xlane.xlu0 %1905
    %1907 = vmax.xlane.f32.xlu0 %v1898
    %v1908 = vpop.xlane.xlu0 %1907
    %1909 = vmax.xlane.f32.xlu0 %v1899
    %v1910 = vpop.xlane.xlu0 %1909
    %1911 = vmax.xlane.f32.xlu0 %v1900
    %v1912 = vpop.xlane.xlu0 %1911
    %1913 = vmax.xlane.f32.xlu0 %v1901
    %v1914 = vpop.xlane.xlu0 %1913
    %1915 = vmax.xlane.f32.xlu0 %v1902
    %v1916 = vpop.xlane.xlu0 %1915
    %1917 = vmax.xlane.f32.xlu0 %v1903
    %v1918 = vpop.xlane.xlu0 %1917
    %1919 = vmax.xlane.f32.xlu0 %v1904
    %v1920 = vpop.xlane.xlu0 %1919
    %v1921 = vsub.f32 %v1897, %v1906
    %v1922 = vsub.f32 %v1898, %v1908
    %v1923 = vsub.f32 %v1899, %v1910
    %v1924 = vsub.f32 %v1900, %v1912
    %v1925 = vsub.f32 %v1901, %v1914
    %v1926 = vsub.f32 %v1902, %v1916
    %v1927 = vsub.f32 %v1903, %v1918
    %v1928 = vsub.f32 %v1904, %v1920
    %v1929 = vmul.f32 %v1921, 1.442695
    %v1930 = vpow.pop %v1929
    %v1931 = vmul.f32 %v1922, 1.442695
    %v1932 = vpow.pop %v1931
    %v1933 = vmul.f32 %v1923, 1.442695
    %v1934 = vpow.pop %v1933
    %v1935 = vmul.f32 %v1924, 1.442695
    %v1936 = vpow.pop %v1935
    %v1937 = vmul.f32 %v1925, 1.442695
    %v1938 = vpow.pop %v1937
    %v1939 = vmul.f32 %v1926, 1.442695
    %v1940 = vpow.pop %v1939
    %v1941 = vmul.f32 %v1927, 1.442695
    %v1942 = vpow.pop %v1941
    %v1943 = vmul.f32 %v1928, 1.442695
    %v1944 = vpow.pop %v1943
    %1945 = vadd.xlane.f32.xlu0 %v1930
    %v1946 = vpop.xlane.xlu0 %1945
    %1947 = vadd.xlane.f32.xlu0 %v1932
    %v1948 = vpop.xlane.xlu0 %1947
    %1949 = vadd.xlane.f32.xlu0 %v1934
    %v1950 = vpop.xlane.xlu0 %1949
    %1951 = vadd.xlane.f32.xlu0 %v1936
    %v1952 = vpop.xlane.xlu0 %1951
    %1953 = vadd.xlane.f32.xlu0 %v1938
    %v1954 = vpop.xlane.xlu0 %1953
    %1955 = vadd.xlane.f32.xlu0 %v1940
    %v1956 = vpop.xlane.xlu0 %1955
    %1957 = vadd.xlane.f32.xlu0 %v1942
    %v1958 = vpop.xlane.xlu0 %1957
    %1959 = vadd.xlane.f32.xlu0 %v1944
    %v1960 = vpop.xlane.xlu0 %1959
    %v1961 = vrcp.pop %v1946
    %v1962 = vmul.f32 %v1930, %v1961
    %v1963 = vrcp.pop %v1948
    %v1964 = vmul.f32 %v1932, %v1963
    %v1965 = vrcp.pop %v1950
    %v1966 = vmul.f32 %v1934, %v1965
    %v1967 = vrcp.pop %v1952
    %v1968 = vmul.f32 %v1936, %v1967
    %v1969 = vrcp.pop %v1954
    %v1970 = vmul.f32 %v1938, %v1969
    %v1971 = vrcp.pop %v1956
    %v1972 = vmul.f32 %v1940, %v1971
    %v1973 = vrcp.pop %v1958
    %v1974 = vmul.f32 %v1942, %v1973
    %v1975 = vrcp.pop %v1960
    %v1976 = vmul.f32 %v1944, %v1975
    %1977 = vmatprep.subr.mxu0 0.0
    %1978 = vmatpush1.msra.mxu0 %v143
    %1979 = vmatprep.subr.mxu0 0.0
    %1980 = vmatpush1.msra.mxu0 %v142
    %1981 = vmatprep.subr.mxu0 0.0
    %1982 = vmatpush1.msra.mxu0 %v141
    %1983 = vmatprep.subr.mxu0 0.0
    %1984 = vmatpush1.msra.mxu0 %v140
    %1985 = vmatprep.subr.mxu0 0.0
    %1986 = vmatpush1.msra.mxu0 %v139
    %1987 = vmatprep.subr.mxu0 0.0
    %1988 = vmatpush1.msra.mxu0 %v138
    %1989 = vmatprep.subr.mxu0 0.0
    %1990 = vmatpush1.msra.mxu0 %v137
    %1991 = vmatprep.subr.mxu0 0.0
    %1992 = vmatpush1.msra.mxu0 %v136
    %1993 = vmatprep.subr.mxu0 0.0
    %1994 = vmatpush1.msra.mxu0 %v135
    %1995 = vmatprep.subr.mxu0 0.0
    %1996 = vmatpush1.msra.mxu0 %v134
    %1997 = vmatprep.subr.mxu0 0.0
    %1998 = vmatpush1.msra.mxu0 %v133
    %1999 = vmatprep.subr.mxu0 0.0
    %2000 = vmatpush1.msra.mxu0 %v132
    %2001 = vmatprep.subr.mxu0 0.0
    %2002 = vmatpush1.msra.mxu0 %v131
    %2003 = vmatprep.subr.mxu0 0.0
    %2004 = vmatpush1.msra.mxu0 %v130
    %2005 = vmatprep.subr.mxu0 0.0
    %2006 = vmatpush1.msra.mxu0 %v129
    %2007 = vmatprep.subr.mxu0 0.0
    %2008 = vmatpush1.msra.mxu0 %v128
    %2009 = vmatprep.subr.mxu0 0.0
    %2010 = vmatpush2.msra.mxu0 0.0
    %2011 = vmatprep.subr.mxu0 0.0
    %2012 = vmatpush2.msra.mxu0 0.0
    %2013 = vmatprep.subr.mxu0 0.0
    %2014 = vmatpush2.msra.mxu0 0.0
    %2015 = vmatprep.subr.mxu0 0.0
    %2016 = vmatpush2.msra.mxu0 0.0
    %2017 = vmatprep.subr.mxu0 0.0
    %2018 = vmatpush2.msra.mxu0 0.0
    %2019 = vmatprep.subr.mxu0 0.0
    %2020 = vmatpush2.msra.mxu0 0.0
    %2021 = vmatprep.subr.mxu0 0.0
    %2022 = vmatpush2.msra.mxu0 0.0
    %2023 = vmatprep.subr.mxu0 0.0
    %2024 = vmatpush2.msra.mxu0 0.0
    %2025 = vmatprep.subr.mxu0 0.0
    %2026 = vmatpush2.msra.mxu0 0.0
    %2027 = vmatprep.subr.mxu0 0.0
    %2028 = vmatpush2.msra.mxu0 0.0
    %2029 = vmatprep.subr.mxu0 0.0
    %2030 = vmatpush2.msra.mxu0 0.0
    %2031 = vmatprep.subr.mxu0 0.0
    %2032 = vmatpush2.msra.mxu0 0.0
    %2033 = vmatprep.subr.mxu0 0.0
    %2034 = vmatpush2.msra.mxu0 0.0
    %2035 = vmatprep.subr.mxu0 0.0
    %2036 = vmatpush2.msra.mxu0 0.0
    %2037 = vmatprep.subr.mxu0 0.0
    %2038 = vmatpush2.msra.mxu0 0.0
    %2039 = vmatprep.subr.mxu0 0.0
    %2040 = vmatpush2.msra.mxu0 0.0
    %2041 = vmatprep.mubr.f32.mxu0 0.0
    %2042 = vmatmul.mubr.f32.gmra.mxu0 %v1962
    %v2043 = vpop.f32.mrf.mxu0
    %v2044 = vadd.f32 0.0, %v2043
    %v2045 = vpop.f32.mrf.mxu0
    %2046 = vdwg.mxu0
    %2047 = vmatprep.subr.mxu0 0.0
    %2048 = vmatpush1.msra.mxu0 %v159
    %2049 = vmatprep.subr.mxu0 0.0
    %2050 = vmatpush1.msra.mxu0 %v158
    %2051 = vmatprep.subr.mxu0 0.0
    %2052 = vmatpush1.msra.mxu0 %v157
    %2053 = vmatprep.subr.mxu0 0.0
    %2054 = vmatpush1.msra.mxu0 %v156
    %2055 = vmatprep.subr.mxu0 0.0
    %2056 = vmatpush1.msra.mxu0 %v155
    %2057 = vmatprep.subr.mxu0 0.0
    %2058 = vmatpush1.msra.mxu0 %v154
    %2059 = vmatprep.subr.mxu0 0.0
    %2060 = vmatpush1.msra.mxu0 %v153
    %2061 = vmatprep.subr.mxu0 0.0
    %2062 = vmatpush1.msra.mxu0 %v152
    %2063 = vmatprep.subr.mxu0 0.0
    %2064 = vmatpush1.msra.mxu0 %v151
    %2065 = vmatprep.subr.mxu0 0.0
    %2066 = vmatpush1.msra.mxu0 %v150
    %2067 = vmatprep.subr.mxu0 0.0
    %2068 = vmatpush1.msra.mxu0 %v149
    %2069 = vmatprep.subr.mxu0 0.0
    %2070 = vmatpush1.msra.mxu0 %v148
    %2071 = vmatprep.subr.mxu0 0.0
    %2072 = vmatpush1.msra.mxu0 %v147
    %2073 = vmatprep.subr.mxu0 0.0
    %2074 = vmatpush1.msra.mxu0 %v146
    %2075 = vmatprep.subr.mxu0 0.0
    %2076 = vmatpush1.msra.mxu0 %v145
    %2077 = vmatprep.subr.mxu0 0.0
    %2078 = vmatpush1.msra.mxu0 %v144
    %2079 = vmatprep.subr.mxu0 0.0
    %2080 = vmatpush2.msra.mxu0 0.0
    %2081 = vmatprep.subr.mxu0 0.0
    %2082 = vmatpush2.msra.mxu0 0.0
    %2083 = vmatprep.subr.mxu0 0.0
    %2084 = vmatpush2.msra.mxu0 0.0
    %2085 = vmatprep.subr.mxu0 0.0
    %2086 = vmatpush2.msra.mxu0 0.0
    %2087 = vmatprep.subr.mxu0 0.0
    %2088 = vmatpush2.msra.mxu0 0.0
    %2089 = vmatprep.subr.mxu0 0.0
    %2090 = vmatpush2.msra.mxu0 0.0
    %2091 = vmatprep.subr.mxu0 0.0
    %2092 = vmatpush2.msra.mxu0 0.0
    %2093 = vmatprep.subr.mxu0 0.0
    %2094 = vmatpush2.msra.mxu0 0.0
    %2095 = vmatprep.subr.mxu0 0.0
    %2096 = vmatpush2.msra.mxu0 0.0
    %2097 = vmatprep.subr.mxu0 0.0
    %2098 = vmatpush2.msra.mxu0 0.0
    %2099 = vmatprep.subr.mxu0 0.0
    %2100 = vmatpush2.msra.mxu0 0.0
    %2101 = vmatprep.subr.mxu0 0.0
    %2102 = vmatpush2.msra.mxu0 0.0
    %2103 = vmatprep.subr.mxu0 0.0
    %2104 = vmatpush2.msra.mxu0 0.0
    %2105 = vmatprep.subr.mxu0 0.0
    %2106 = vmatpush2.msra.mxu0 0.0
    %2107 = vmatprep.subr.mxu0 0.0
    %2108 = vmatpush2.msra.mxu0 0.0
    %2109 = vmatprep.subr.mxu0 0.0
    %2110 = vmatpush2.msra.mxu0 0.0
    %2111 = vmatprep.mubr.f32.mxu0 0.0
    %2112 = vmatmul.mubr.f32.gmra.mxu0 %v1964
    %v2113 = vpop.f32.mrf.mxu0
    %v2114 = vadd.f32 0.0, %v2113
    %v2115 = vpop.f32.mrf.mxu0
    %2116 = vdwg.mxu0
    %2117 = vmatprep.subr.mxu0 0.0
    %2118 = vmatpush1.msra.mxu0 %v175
    %2119 = vmatprep.subr.mxu0 0.0
    %2120 = vmatpush1.msra.mxu0 %v174
    %2121 = vmatprep.subr.mxu0 0.0
    %2122 = vmatpush1.msra.mxu0 %v173
    %2123 = vmatprep.subr.mxu0 0.0
    %2124 = vmatpush1.msra.mxu0 %v172
    %2125 = vmatprep.subr.mxu0 0.0
    %2126 = vmatpush1.msra.mxu0 %v171
    %2127 = vmatprep.subr.mxu0 0.0
    %2128 = vmatpush1.msra.mxu0 %v170
    %2129 = vmatprep.subr.mxu0 0.0
    %2130 = vmatpush1.msra.mxu0 %v169
    %2131 = vmatprep.subr.mxu0 0.0
    %2132 = vmatpush1.msra.mxu0 %v168
    %2133 = vmatprep.subr.mxu0 0.0
    %2134 = vmatpush1.msra.mxu0 %v167
    %2135 = vmatprep.subr.mxu0 0.0
    %2136 = vmatpush1.msra.mxu0 %v166
    %2137 = vmatprep.subr.mxu0 0.0
    %2138 = vmatpush1.msra.mxu0 %v165
    %2139 = vmatprep.subr.mxu0 0.0
    %2140 = vmatpush1.msra.mxu0 %v164
    %2141 = vmatprep.subr.mxu0 0.0
    %2142 = vmatpush1.msra.mxu0 %v163
    %2143 = vmatprep.subr.mxu0 0.0
    %2144 = vmatpush1.msra.mxu0 %v162
    %2145 = vmatprep.subr.mxu0 0.0
    %2146 = vmatpush1.msra.mxu0 %v161
    %2147 = vmatprep.subr.mxu0 0.0
    %2148 = vmatpush1.msra.mxu0 %v160
    %2149 = vmatprep.subr.mxu0 0.0
    %2150 = vmatpush2.msra.mxu0 0.0
    %2151 = vmatprep.subr.mxu0 0.0
    %2152 = vmatpush2.msra.mxu0 0.0
    %2153 = vmatprep.subr.mxu0 0.0
    %2154 = vmatpush2.msra.mxu0 0.0
    %2155 = vmatprep.subr.mxu0 0.0
    %2156 = vmatpush2.msra.mxu0 0.0
    %2157 = vmatprep.subr.mxu0 0.0
    %2158 = vmatpush2.msra.mxu0 0.0
    %2159 = vmatprep.subr.mxu0 0.0
    %2160 = vmatpush2.msra.mxu0 0.0
    %2161 = vmatprep.subr.mxu0 0.0
    %2162 = vmatpush2.msra.mxu0 0.0
    %2163 = vmatprep.subr.mxu0 0.0
    %2164 = vmatpush2.msra.mxu0 0.0
    %2165 = vmatprep.subr.mxu0 0.0
    %2166 = vmatpush2.msra.mxu0 0.0
    %2167 = vmatprep.subr.mxu0 0.0
    %2168 = vmatpush2.msra.mxu0 0.0
    %2169 = vmatprep.subr.mxu0 0.0
    %2170 = vmatpush2.msra.mxu0 0.0
    %2171 = vmatprep.subr.mxu0 0.0
    %2172 = vmatpush2.msra.mxu0 0.0
    %2173 = vmatprep.subr.mxu0 0.0
    %2174 = vmatpush2.msra.mxu0 0.0
    %2175 = vmatprep.subr.mxu0 0.0
    %2176 = vmatpush2.msra.mxu0 0.0
    %2177 = vmatprep.subr.mxu0 0.0
    %2178 = vmatpush2.msra.mxu0 0.0
    %2179 = vmatprep.subr.mxu0 0.0
    %2180 = vmatpush2.msra.mxu0 0.0
    %2181 = vmatprep.mubr.f32.mxu0 0.0
    %2182 = vmatmul.mubr.f32.gmra.mxu0 %v1966
    %v2183 = vpop.f32.mrf.mxu0
    %v2184 = vadd.f32 0.0, %v2183
    %v2185 = vpop.f32.mrf.mxu0
    %2186 = vdwg.mxu0
    %2187 = vmatprep.subr.mxu0 0.0
    %2188 = vmatpush1.msra.mxu0 %v191
    %2189 = vmatprep.subr.mxu0 0.0
    %2190 = vmatpush1.msra.mxu0 %v190
    %2191 = vmatprep.subr.mxu0 0.0
    %2192 = vmatpush1.msra.mxu0 %v189
    %2193 = vmatprep.subr.mxu0 0.0
    %2194 = vmatpush1.msra.mxu0 %v188
    %2195 = vmatprep.subr.mxu0 0.0
    %2196 = vmatpush1.msra.mxu0 %v187
    %2197 = vmatprep.subr.mxu0 0.0
    %2198 = vmatpush1.msra.mxu0 %v186
    %2199 = vmatprep.subr.mxu0 0.0
    %2200 = vmatpush1.msra.mxu0 %v185
    %2201 = vmatprep.subr.mxu0 0.0
    %2202 = vmatpush1.msra.mxu0 %v184
    %2203 = vmatprep.subr.mxu0 0.0
    %2204 = vmatpush1.msra.mxu0 %v183
    %2205 = vmatprep.subr.mxu0 0.0
    %2206 = vmatpush1.msra.mxu0 %v182
    %2207 = vmatprep.subr.mxu0 0.0
    %2208 = vmatpush1.msra.mxu0 %v181
    %2209 = vmatprep.subr.mxu0 0.0
    %2210 = vmatpush1.msra.mxu0 %v180
    %2211 = vmatprep.subr.mxu0 0.0
    %2212 = vmatpush1.msra.mxu0 %v179
    %2213 = vmatprep.subr.mxu0 0.0
    %2214 = vmatpush1.msra.mxu0 %v178
    %2215 = vmatprep.subr.mxu0 0.0
    %2216 = vmatpush1.msra.mxu0 %v177
    %2217 = vmatprep.subr.mxu0 0.0
    %2218 = vmatpush1.msra.mxu0 %v176
    %2219 = vmatprep.subr.mxu0 0.0
    %2220 = vmatpush2.msra.mxu0 0.0
    %2221 = vmatprep.subr.mxu0 0.0
    %2222 = vmatpush2.msra.mxu0 0.0
    %2223 = vmatprep.subr.mxu0 0.0
    %2224 = vmatpush2.msra.mxu0 0.0
    %2225 = vmatprep.subr.mxu0 0.0
    %2226 = vmatpush2.msra.mxu0 0.0
    %2227 = vmatprep.subr.mxu0 0.0
    %2228 = vmatpush2.msra.mxu0 0.0
    %2229 = vmatprep.subr.mxu0 0.0
    %2230 = vmatpush2.msra.mxu0 0.0
    %2231 = vmatprep.subr.mxu0 0.0
    %2232 = vmatpush2.msra.mxu0 0.0
    %2233 = vmatprep.subr.mxu0 0.0
    %2234 = vmatpush2.msra.mxu0 0.0
    %2235 = vmatprep.subr.mxu0 0.0
    %2236 = vmatpush2.msra.mxu0 0.0
    %2237 = vmatprep.subr.mxu0 0.0
    %2238 = vmatpush2.msra.mxu0 0.0
    %2239 = vmatprep.subr.mxu0 0.0
    %2240 = vmatpush2.msra.mxu0 0.0
    %2241 = vmatprep.subr.mxu0 0.0
    %2242 = vmatpush2.msra.mxu0 0.0
    %2243 = vmatprep.subr.mxu0 0.0
    %2244 = vmatpush2.msra.mxu0 0.0
    %2245 = vmatprep.subr.mxu0 0.0
    %2246 = vmatpush2.msra.mxu0 0.0
    %2247 = vmatprep.subr.mxu0 0.0
    %2248 = vmatpush2.msra.mxu0 0.0
    %2249 = vmatprep.subr.mxu0 0.0
    %2250 = vmatpush2.msra.mxu0 0.0
    %2251 = vmatprep.mubr.f32.mxu0 0.0
    %2252 = vmatmul.mubr.f32.gmra.mxu0 %v1968
    %v2253 = vpop.f32.mrf.mxu0
    %v2254 = vadd.f32 0.0, %v2253
    %v2255 = vpop.f32.mrf.mxu0
    %2256 = vdwg.mxu0
    %2257 = vmatprep.subr.mxu0 0.0
    %2258 = vmatpush1.msra.mxu0 %v207
    %2259 = vmatprep.subr.mxu0 0.0
    %2260 = vmatpush1.msra.mxu0 %v206
    %2261 = vmatprep.subr.mxu0 0.0
    %2262 = vmatpush1.msra.mxu0 %v205
    %2263 = vmatprep.subr.mxu0 0.0
    %2264 = vmatpush1.msra.mxu0 %v204
    %2265 = vmatprep.subr.mxu0 0.0
    %2266 = vmatpush1.msra.mxu0 %v203
    %2267 = vmatprep.subr.mxu0 0.0
    %2268 = vmatpush1.msra.mxu0 %v202
    %2269 = vmatprep.subr.mxu0 0.0
    %2270 = vmatpush1.msra.mxu0 %v201
    %2271 = vmatprep.subr.mxu0 0.0
    %2272 = vmatpush1.msra.mxu0 %v200
    %2273 = vmatprep.subr.mxu0 0.0
    %2274 = vmatpush1.msra.mxu0 %v199
    %2275 = vmatprep.subr.mxu0 0.0
    %2276 = vmatpush1.msra.mxu0 %v198
    %2277 = vmatprep.subr.mxu0 0.0
    %2278 = vmatpush1.msra.mxu0 %v197
    %2279 = vmatprep.subr.mxu0 0.0
    %2280 = vmatpush1.msra.mxu0 %v196
    %2281 = vmatprep.subr.mxu0 0.0
    %2282 = vmatpush1.msra.mxu0 %v195
    %2283 = vmatprep.subr.mxu0 0.0
    %2284 = vmatpush1.msra.mxu0 %v194
    %2285 = vmatprep.subr.mxu0 0.0
    %2286 = vmatpush1.msra.mxu0 %v193
    %2287 = vmatprep.subr.mxu0 0.0
    %2288 = vmatpush1.msra.mxu0 %v192
    %2289 = vmatprep.subr.mxu0 0.0
    %2290 = vmatpush2.msra.mxu0 0.0
    %2291 = vmatprep.subr.mxu0 0.0
    %2292 = vmatpush2.msra.mxu0 0.0
    %2293 = vmatprep.subr.mxu0 0.0
    %2294 = vmatpush2.msra.mxu0 0.0
    %2295 = vmatprep.subr.mxu0 0.0
    %2296 = vmatpush2.msra.mxu0 0.0
    %2297 = vmatprep.subr.mxu0 0.0
    %2298 = vmatpush2.msra.mxu0 0.0
    %2299 = vmatprep.subr.mxu0 0.0
    %2300 = vmatpush2.msra.mxu0 0.0
    %2301 = vmatprep.subr.mxu0 0.0
    %2302 = vmatpush2.msra.mxu0 0.0
    %2303 = vmatprep.subr.mxu0 0.0
    %2304 = vmatpush2.msra.mxu0 0.0
    %2305 = vmatprep.subr.mxu0 0.0
    %2306 = vmatpush2.msra.mxu0 0.0
    %2307 = vmatprep.subr.mxu0 0.0
    %2308 = vmatpush2.msra.mxu0 0.0
    %2309 = vmatprep.subr.mxu0 0.0
    %2310 = vmatpush2.msra.mxu0 0.0
    %2311 = vmatprep.subr.mxu0 0.0
    %2312 = vmatpush2.msra.mxu0 0.0
    %2313 = vmatprep.subr.mxu0 0.0
    %2314 = vmatpush2.msra.mxu0 0.0
    %2315 = vmatprep.subr.mxu0 0.0
    %2316 = vmatpush2.msra.mxu0 0.0
    %2317 = vmatprep.subr.mxu0 0.0
    %2318 = vmatpush2.msra.mxu0 0.0
    %2319 = vmatprep.subr.mxu0 0.0
    %2320 = vmatpush2.msra.mxu0 0.0
    %2321 = vmatprep.mubr.f32.mxu0 0.0
    %2322 = vmatmul.mubr.f32.gmra.mxu0 %v1970
    %v2323 = vpop.f32.mrf.mxu0
    %v2324 = vadd.f32 0.0, %v2323
    %v2325 = vpop.f32.mrf.mxu0
    %2326 = vdwg.mxu0
    %2327 = vmatprep.subr.mxu0 0.0
    %2328 = vmatpush1.msra.mxu0 %v223
    %2329 = vmatprep.subr.mxu0 0.0
    %2330 = vmatpush1.msra.mxu0 %v222
    %2331 = vmatprep.subr.mxu0 0.0
    %2332 = vmatpush1.msra.mxu0 %v221
    %2333 = vmatprep.subr.mxu0 0.0
    %2334 = vmatpush1.msra.mxu0 %v220
    %2335 = vmatprep.subr.mxu0 0.0
    %2336 = vmatpush1.msra.mxu0 %v219
    %2337 = vmatprep.subr.mxu0 0.0
    %2338 = vmatpush1.msra.mxu0 %v218
    %2339 = vmatprep.subr.mxu0 0.0
    %2340 = vmatpush1.msra.mxu0 %v217
    %2341 = vmatprep.subr.mxu0 0.0
    %2342 = vmatpush1.msra.mxu0 %v216
    %2343 = vmatprep.subr.mxu0 0.0
    %2344 = vmatpush1.msra.mxu0 %v215
    %2345 = vmatprep.subr.mxu0 0.0
    %2346 = vmatpush1.msra.mxu0 %v214
    %2347 = vmatprep.subr.mxu0 0.0
    %2348 = vmatpush1.msra.mxu0 %v213
    %2349 = vmatprep.subr.mxu0 0.0
    %2350 = vmatpush1.msra.mxu0 %v212
    %2351 = vmatprep.subr.mxu0 0.0
    %2352 = vmatpush1.msra.mxu0 %v211
    %2353 = vmatprep.subr.mxu0 0.0
    %2354 = vmatpush1.msra.mxu0 %v210
    %2355 = vmatprep.subr.mxu0 0.0
    %2356 = vmatpush1.msra.mxu0 %v209
    %2357 = vmatprep.subr.mxu0 0.0
    %2358 = vmatpush1.msra.mxu0 %v208
    %2359 = vmatprep.subr.mxu0 0.0
    %2360 = vmatpush2.msra.mxu0 0.0
    %2361 = vmatprep.subr.mxu0 0.0
    %2362 = vmatpush2.msra.mxu0 0.0
    %2363 = vmatprep.subr.mxu0 0.0
    %2364 = vmatpush2.msra.mxu0 0.0
    %2365 = vmatprep.subr.mxu0 0.0
    %2366 = vmatpush2.msra.mxu0 0.0
    %2367 = vmatprep.subr.mxu0 0.0
    %2368 = vmatpush2.msra.mxu0 0.0
    %2369 = vmatprep.subr.mxu0 0.0
    %2370 = vmatpush2.msra.mxu0 0.0
    %2371 = vmatprep.subr.mxu0 0.0
    %2372 = vmatpush2.msra.mxu0 0.0
    %2373 = vmatprep.subr.mxu0 0.0
    %2374 = vmatpush2.msra.mxu0 0.0
    %2375 = vmatprep.subr.mxu0 0.0
    %2376 = vmatpush2.msra.mxu0 0.0
    %2377 = vmatprep.subr.mxu0 0.0
    %2378 = vmatpush2.msra.mxu0 0.0
    %2379 = vmatprep.subr.mxu0 0.0
    %2380 = vmatpush2.msra.mxu0 0.0
    %2381 = vmatprep.subr.mxu0 0.0
    %2382 = vmatpush2.msra.mxu0 0.0
    %2383 = vmatprep.subr.mxu0 0.0
    %2384 = vmatpush2.msra.mxu0 0.0
    %2385 = vmatprep.subr.mxu0 0.0
    %2386 = vmatpush2.msra.mxu0 0.0
    %2387 = vmatprep.subr.mxu0 0.0
    %2388 = vmatpush2.msra.mxu0 0.0
    %2389 = vmatprep.subr.mxu0 0.0
    %2390 = vmatpush2.msra.mxu0 0.0
    %2391 = vmatprep.mubr.f32.mxu0 0.0
    %2392 = vmatmul.mubr.f32.gmra.mxu0 %v1972
    %v2393 = vpop.f32.mrf.mxu0
    %v2394 = vadd.f32 0.0, %v2393
    %v2395 = vpop.f32.mrf.mxu0
    %2396 = vdwg.mxu0
    %2397 = vmatprep.subr.mxu0 0.0
    %2398 = vmatpush1.msra.mxu0 %v239
    %2399 = vmatprep.subr.mxu0 0.0
    %2400 = vmatpush1.msra.mxu0 %v238
    %2401 = vmatprep.subr.mxu0 0.0
    %2402 = vmatpush1.msra.mxu0 %v237
    %2403 = vmatprep.subr.mxu0 0.0
    %2404 = vmatpush1.msra.mxu0 %v236
    %2405 = vmatprep.subr.mxu0 0.0
    %2406 = vmatpush1.msra.mxu0 %v235
    %2407 = vmatprep.subr.mxu0 0.0
    %2408 = vmatpush1.msra.mxu0 %v234
    %2409 = vmatprep.subr.mxu0 0.0
    %2410 = vmatpush1.msra.mxu0 %v233
    %2411 = vmatprep.subr.mxu0 0.0
    %2412 = vmatpush1.msra.mxu0 %v232
    %2413 = vmatprep.subr.mxu0 0.0
    %2414 = vmatpush1.msra.mxu0 %v231
    %2415 = vmatprep.subr.mxu0 0.0
    %2416 = vmatpush1.msra.mxu0 %v230
    %2417 = vmatprep.subr.mxu0 0.0
    %2418 = vmatpush1.msra.mxu0 %v229
    %2419 = vmatprep.subr.mxu0 0.0
    %2420 = vmatpush1.msra.mxu0 %v228
    %2421 = vmatprep.subr.mxu0 0.0
    %2422 = vmatpush1.msra.mxu0 %v227
    %2423 = vmatprep.subr.mxu0 0.0
    %2424 = vmatpush1.msra.mxu0 %v226
    %2425 = vmatprep.subr.mxu0 0.0
    %2426 = vmatpush1.msra.mxu0 %v225
    %2427 = vmatprep.subr.mxu0 0.0
    %2428 = vmatpush1.msra.mxu0 %v224
    %2429 = vmatprep.subr.mxu0 0.0
    %2430 = vmatpush2.msra.mxu0 0.0
    %2431 = vmatprep.subr.mxu0 0.0
    %2432 = vmatpush2.msra.mxu0 0.0
    %2433 = vmatprep.subr.mxu0 0.0
    %2434 = vmatpush2.msra.mxu0 0.0
    %2435 = vmatprep.subr.mxu0 0.0
    %2436 = vmatpush2.msra.mxu0 0.0
    %2437 = vmatprep.subr.mxu0 0.0
    %2438 = vmatpush2.msra.mxu0 0.0
    %2439 = vmatprep.subr.mxu0 0.0
    %2440 = vmatpush2.msra.mxu0 0.0
    %2441 = vmatprep.subr.mxu0 0.0
    %2442 = vmatpush2.msra.mxu0 0.0
    %2443 = vmatprep.subr.mxu0 0.0
    %2444 = vmatpush2.msra.mxu0 0.0
    %2445 = vmatprep.subr.mxu0 0.0
    %2446 = vmatpush2.msra.mxu0 0.0
    %2447 = vmatprep.subr.mxu0 0.0
    %2448 = vmatpush2.msra.mxu0 0.0
    %2449 = vmatprep.subr.mxu0 0.0
    %2450 = vmatpush2.msra.mxu0 0.0
    %2451 = vmatprep.subr.mxu0 0.0
    %2452 = vmatpush2.msra.mxu0 0.0
    %2453 = vmatprep.subr.mxu0 0.0
    %2454 = vmatpush2.msra.mxu0 0.0
    %2455 = vmatprep.subr.mxu0 0.0
    %2456 = vmatpush2.msra.mxu0 0.0
    %2457 = vmatprep.subr.mxu0 0.0
    %2458 = vmatpush2.msra.mxu0 0.0
    %2459 = vmatprep.subr.mxu0 0.0
    %2460 = vmatpush2.msra.mxu0 0.0
    %2461 = vmatprep.mubr.f32.mxu0 0.0
    %2462 = vmatmul.mubr.f32.gmra.mxu0 %v1974
    %v2463 = vpop.f32.mrf.mxu0
    %v2464 = vadd.f32 0.0, %v2463
    %v2465 = vpop.f32.mrf.mxu0
    %2466 = vdwg.mxu0
    %2467 = vmatprep.subr.mxu0 0.0
    %2468 = vmatpush1.msra.mxu0 %v255
    %2469 = vmatprep.subr.mxu0 0.0
    %2470 = vmatpush1.msra.mxu0 %v254
    %2471 = vmatprep.subr.mxu0 0.0
    %2472 = vmatpush1.msra.mxu0 %v253
    %2473 = vmatprep.subr.mxu0 0.0
    %2474 = vmatpush1.msra.mxu0 %v252
    %2475 = vmatprep.subr.mxu0 0.0
    %2476 = vmatpush1.msra.mxu0 %v251
    %2477 = vmatprep.subr.mxu0 0.0
    %2478 = vmatpush1.msra.mxu0 %v250
    %2479 = vmatprep.subr.mxu0 0.0
    %2480 = vmatpush1.msra.mxu0 %v249
    %2481 = vmatprep.subr.mxu0 0.0
    %2482 = vmatpush1.msra.mxu0 %v248
    %2483 = vmatprep.subr.mxu0 0.0
    %2484 = vmatpush1.msra.mxu0 %v247
    %2485 = vmatprep.subr.mxu0 0.0
    %2486 = vmatpush1.msra.mxu0 %v246
    %2487 = vmatprep.subr.mxu0 0.0
    %2488 = vmatpush1.msra.mxu0 %v245
    %2489 = vmatprep.subr.mxu0 0.0
    %2490 = vmatpush1.msra.mxu0 %v244
    %2491 = vmatprep.subr.mxu0 0.0
    %2492 = vmatpush1.msra.mxu0 %v243
    %2493 = vmatprep.subr.mxu0 0.0
    %2494 = vmatpush1.msra.mxu0 %v242
    %2495 = vmatprep.subr.mxu0 0.0
    %2496 = vmatpush1.msra.mxu0 %v241
    %2497 = vmatprep.subr.mxu0 0.0
    %2498 = vmatpush1.msra.mxu0 %v240
    %2499 = vmatprep.subr.mxu0 0.0
    %2500 = vmatpush2.msra.mxu0 0.0
    %2501 = vmatprep.subr.mxu0 0.0
    %2502 = vmatpush2.msra.mxu0 0.0
    %2503 = vmatprep.subr.mxu0 0.0
    %2504 = vmatpush2.msra.mxu0 0.0
    %2505 = vmatprep.subr.mxu0 0.0
    %2506 = vmatpush2.msra.mxu0 0.0
    %2507 = vmatprep.subr.mxu0 0.0
    %2508 = vmatpush2.msra.mxu0 0.0
    %2509 = vmatprep.subr.mxu0 0.0
    %2510 = vmatpush2.msra.mxu0 0.0
    %2511 = vmatprep.subr.mxu0 0.0
    %2512 = vmatpush2.msra.mxu0 0.0
    %2513 = vmatprep.subr.mxu0 0.0
    %2514 = vmatpush2.msra.mxu0 0.0
    %2515 = vmatprep.subr.mxu0 0.0
    %2516 = vmatpush2.msra.mxu0 0.0
    %2517 = vmatprep.subr.mxu0 0.0
    %2518 = vmatpush2.msra.mxu0 0.0
    %2519 = vmatprep.subr.mxu0 0.0
    %2520 = vmatpush2.msra.mxu0 0.0
    %2521 = vmatprep.subr.mxu0 0.0
    %2522 = vmatpush2.msra.mxu0 0.0
    %2523 = vmatprep.subr.mxu0 0.0
    %2524 = vmatpush2.msra.mxu0 0.0
    %2525 = vmatprep.subr.mxu0 0.0
    %2526 = vmatpush2.msra.mxu0 0.0
    %2527 = vmatprep.subr.mxu0 0.0
    %2528 = vmatpush2.msra.mxu0 0.0
    %2529 = vmatprep.subr.mxu0 0.0
    %2530 = vmatpush2.msra.mxu0 0.0
    %2531 = vmatprep.mubr.f32.mxu0 0.0
    %2532 = vmatmul.mubr.f32.gmra.mxu0 %v1976
    %v2533 = vpop.f32.mrf.mxu0
    %v2534 = vadd.f32 0.0, %v2533
    %v2535 = vpop.f32.mrf.mxu0
    %2536 = vdwg.mxu0
    %v2538 = vsel %vm290, %v2044, 0
    %v2541 = vsel %vm290, %v2114, 0
    %v2544 = vsel %vm290, %v2184, 0
    %v2547 = vsel %vm290, %v2254, 0
    %v2550 = vsel %vm290, %v2324, 0
    %v2553 = vsel %vm290, %v2394, 0
    %v2556 = vsel %vm290, %v2464, 0
    %v2559 = vsel %vm290, %v2534, 0
    %2561 = vmatprep.subr.mxu0 0.0
    %2562 = vmatpush1.msra.mxu0 0.0
    %2563 = vmatprep.subr.mxu0 0.0
    %2564 = vmatpush1.msra.mxu0 0.0
    %2565 = vmatprep.subr.mxu0 0.0
    %2566 = vmatpush1.msra.mxu0 0.0
    %2567 = vmatprep.subr.mxu0 0.0
    %2568 = vmatpush1.msra.mxu0 0.0
    %2569 = vmatprep.subr.mxu0 0.0
    %2570 = vmatpush1.msra.mxu0 0.0
    %2571 = vmatprep.subr.mxu0 0.0
    %2572 = vmatpush1.msra.mxu0 0.0
    %2573 = vmatprep.subr.mxu0 0.0
    %2574 = vmatpush1.msra.mxu0 0.0
    %2575 = vmatprep.subr.mxu0 0.0
    %2576 = vmatpush1.msra.mxu0 0.0
    %2577 = vmatprep.subr.mxu0 0.0
    %2578 = vmatpush1.msra.mxu0 0.0
    %2579 = vmatprep.subr.mxu0 0.0
    %2580 = vmatpush1.msra.mxu0 0.0
    %2581 = vmatprep.subr.mxu0 0.0
    %2582 = vmatpush1.msra.mxu0 0.0
    %2583 = vmatprep.subr.mxu0 0.0
    %2584 = vmatpush1.msra.mxu0 0.0
    %2585 = vmatprep.subr.mxu0 0.0
    %2586 = vmatpush1.msra.mxu0 %v277
    %2587 = vmatprep.subr.mxu0 0.0
    %2588 = vmatpush1.msra.mxu0 %v276
    %2589 = vmatprep.subr.mxu0 0.0
    %2590 = vmatpush1.msra.mxu0 %v275
    %2591 = vmatprep.subr.mxu0 0.0
    %2592 = vmatpush1.msra.mxu0 %v274
    %2593 = vmatprep.subr.mxu0 0.0
    %2594 = vmatpush2.msra.mxu0 0.0
    %2595 = vmatprep.subr.mxu0 0.0
    %2596 = vmatpush2.msra.mxu0 0.0
    %2597 = vmatprep.subr.mxu0 0.0
    %2598 = vmatpush2.msra.mxu0 0.0
    %2599 = vmatprep.subr.mxu0 0.0
    %2600 = vmatpush2.msra.mxu0 0.0
    %2601 = vmatprep.subr.mxu0 0.0
    %2602 = vmatpush2.msra.mxu0 0.0
    %2603 = vmatprep.subr.mxu0 0.0
    %2604 = vmatpush2.msra.mxu0 0.0
    %2605 = vmatprep.subr.mxu0 0.0
    %2606 = vmatpush2.msra.mxu0 0.0
    %2607 = vmatprep.subr.mxu0 0.0
    %2608 = vmatpush2.msra.mxu0 0.0
    %2609 = vmatprep.subr.mxu0 0.0
    %2610 = vmatpush2.msra.mxu0 0.0
    %2611 = vmatprep.subr.mxu0 0.0
    %2612 = vmatpush2.msra.mxu0 0.0
    %2613 = vmatprep.subr.mxu0 0.0
    %2614 = vmatpush2.msra.mxu0 0.0
    %2615 = vmatprep.subr.mxu0 0.0
    %2616 = vmatpush2.msra.mxu0 0.0
    %2617 = vmatprep.subr.mxu0 0.0
    %2618 = vmatpush2.msra.mxu0 0.0
    %2619 = vmatprep.subr.mxu0 0.0
    %2620 = vmatpush2.msra.mxu0 0.0
    %2621 = vmatprep.subr.mxu0 0.0
    %2622 = vmatpush2.msra.mxu0 0.0
    %2623 = vmatprep.subr.mxu0 0.0
    %2624 = vmatpush2.msra.mxu0 0.0
    %2625 = vmatprep.mubr.f32.mxu0 0.0
    %2626 = vmatmul.mubr.f32.gmra.mxu0 %v2538
    %v2627 = vpop.f32.mrf.mxu0
    %v2628 = vadd.f32 0.0, %v2627
    %v2629 = vpop.f32.mrf.mxu0
    %2630 = vmatprep.mubr.f32.mxu0 0.0
    %2631 = vmatmul.mubr.f32.gmra.mxu0 %v2541
    %v2632 = vpop.f32.mrf.mxu0
    %v2633 = vadd.f32 0.0, %v2632
    %v2634 = vpop.f32.mrf.mxu0
    %2635 = vmatprep.mubr.f32.mxu0 0.0
    %2636 = vmatmul.mubr.f32.gmra.mxu0 %v2544
    %v2637 = vpop.f32.mrf.mxu0
    %v2638 = vadd.f32 0.0, %v2637
    %v2639 = vpop.f32.mrf.mxu0
    %2640 = vmatprep.mubr.f32.mxu0 0.0
    %2641 = vmatmul.mubr.f32.gmra.mxu0 %v2547
    %v2642 = vpop.f32.mrf.mxu0
    %v2643 = vadd.f32 0.0, %v2642
    %v2644 = vpop.f32.mrf.mxu0
    %2645 = vmatprep.mubr.f32.mxu0 0.0
    %2646 = vmatmul.mubr.f32.gmra.mxu0 %v2550
    %v2647 = vpop.f32.mrf.mxu0
    %v2648 = vadd.f32 0.0, %v2647
    %v2649 = vpop.f32.mrf.mxu0
    %2650 = vmatprep.mubr.f32.mxu0 0.0
    %2651 = vmatmul.mubr.f32.gmra.mxu0 %v2553
    %v2652 = vpop.f32.mrf.mxu0
    %v2653 = vadd.f32 0.0, %v2652
    %v2654 = vpop.f32.mrf.mxu0
    %2655 = vmatprep.mubr.f32.mxu0 0.0
    %2656 = vmatmul.mubr.f32.gmra.mxu0 %v2556
    %v2657 = vpop.f32.mrf.mxu0
    %v2658 = vadd.f32 0.0, %v2657
    %v2659 = vpop.f32.mrf.mxu0
    %2660 = vmatprep.mubr.f32.mxu0 0.0
    %2661 = vmatmul.mubr.f32.gmra.mxu0 %v2559
    %v2662 = vpop.f32.mrf.mxu0
    %v2663 = vadd.f32 0.0, %v2662
    %v2664 = vpop.f32.mrf.mxu0
    %2665 = vdwg.mxu0
    %v2666 = vmul.f32 %v2628, %v286
    %v2667 = vmul.f32 %v2633, %v286
    %v2668 = vmul.f32 %v2638, %v286
    %v2669 = vmul.f32 %v2643, %v286
    %v2670 = vmul.f32 %v2648, %v286
    %v2671 = vmul.f32 %v2653, %v286
    %v2672 = vmul.f32 %v2658, %v286
    %v2673 = vmul.f32 %v2663, %v286
    %v2674 = vsel %vm290, %v2666, 0.0
    %v2675 = vrot.slane %v2674, 4
    %v2676 = vadd.f32 %v2674, %v2675
    %v2677 = vrot.slane %v2676, 2
    %v2678 = vadd.f32 %v2676, %v2677
    %v2679 = vrot.slane %v2678, 1
    %v2680 = vadd.f32 %v2678, %v2679
    %v2681 = vsel %vm290, %v2667, 0.0
    %v2682 = vrot.slane %v2681, 4
    %v2683 = vadd.f32 %v2681, %v2682
    %v2684 = vrot.slane %v2683, 2
    %v2685 = vadd.f32 %v2683, %v2684
    %v2686 = vrot.slane %v2685, 1
    %v2687 = vadd.f32 %v2685, %v2686
    %v2688 = vsel %vm290, %v2668, 0.0
    %v2689 = vrot.slane %v2688, 4
    %v2690 = vadd.f32 %v2688, %v2689
    %v2691 = vrot.slane %v2690, 2
    %v2692 = vadd.f32 %v2690, %v2691
    %v2693 = vrot.slane %v2692, 1
    %v2694 = vadd.f32 %v2692, %v2693
    %v2695 = vsel %vm290, %v2669, 0.0
    %v2696 = vrot.slane %v2695, 4
    %v2697 = vadd.f32 %v2695, %v2696
    %v2698 = vrot.slane %v2697, 2
    %v2699 = vadd.f32 %v2697, %v2698
    %v2700 = vrot.slane %v2699, 1
    %v2701 = vadd.f32 %v2699, %v2700
    %v2702 = vsel %vm290, %v2670, 0.0
    %v2703 = vrot.slane %v2702, 4
    %v2704 = vadd.f32 %v2702, %v2703
    %v2705 = vrot.slane %v2704, 2
    %v2706 = vadd.f32 %v2704, %v2705
    %v2707 = vrot.slane %v2706, 1
    %v2708 = vadd.f32 %v2706, %v2707
    %v2709 = vsel %vm290, %v2671, 0.0
    %v2710 = vrot.slane %v2709, 4
    %v2711 = vadd.f32 %v2709, %v2710
    %v2712 = vrot.slane %v2711, 2
    %v2713 = vadd.f32 %v2711, %v2712
    %v2714 = vrot.slane %v2713, 1
    %v2715 = vadd.f32 %v2713, %v2714
    %v2716 = vsel %vm290, %v2672, 0.0
    %v2717 = vrot.slane %v2716, 4
    %v2718 = vadd.f32 %v2716, %v2717
    %v2719 = vrot.slane %v2718, 2
    %v2720 = vadd.f32 %v2718, %v2719
    %v2721 = vrot.slane %v2720, 1
    %v2722 = vadd.f32 %v2720, %v2721
    %v2723 = vsel %vm290, %v2673, 0.0
    %v2724 = vrot.slane %v2723, 4
    %v2725 = vadd.f32 %v2723, %v2724
    %v2726 = vrot.slane %v2725, 2
    %v2727 = vadd.f32 %v2725, %v2726
    %v2728 = vrot.slane %v2727, 1
    %v2729 = vadd.f32 %v2727, %v2728
    %vm2738 = vcmask 1041409
    %v2739 = vsel %vm2738, %v2687, %v2680
    %vm2740 = vcmask 1042434
    %v2741 = vsel %vm2740, %v2694, %v2739
    %vm2742 = vcmask 1043459
    %v2743 = vsel %vm2742, %v2701, %v2741
    %vm2744 = vcmask 1044484
    %v2745 = vsel %vm2744, %v2708, %v2743
    %vm2746 = vcmask 1045509
    %v2747 = vsel %vm2746, %v2715, %v2745
    %vm2748 = vcmask 1046534
    %v2749 = vsel %vm2748, %v2722, %v2747
    %vm2750 = vcmask 1047559
    %v2751 = vsel %vm2750, %v2729, %v2749
    %v2752 = vsel %vm290, %v2751, 0
    %2754 = vmatprep.subr.mxu0 0.0
    %2755 = vmatpush1.msra.mxu0 0.0
    %2756 = vmatprep.subr.mxu0 0.0
    %2757 = vmatpush1.msra.mxu0 0.0
    %2758 = vmatprep.subr.mxu0 0.0
    %2759 = vmatpush1.msra.mxu0 0.0
    %2760 = vmatprep.subr.mxu0 0.0
    %2761 = vmatpush1.msra.mxu0 0.0
    %2762 = vmatprep.subr.mxu0 0.0
    %2763 = vmatpush1.msra.mxu0 0.0
    %2764 = vmatprep.subr.mxu0 0.0
    %2765 = vmatpush1.msra.mxu0 0.0
    %2766 = vmatprep.subr.mxu0 0.0
    %2767 = vmatpush1.msra.mxu0 0.0
    %2768 = vmatprep.subr.mxu0 0.0
    %2769 = vmatpush1.msra.mxu0 0.0
    %2770 = vmatprep.subr.mxu0 0.0
    %2771 = vmatpush1.msra.mxu0 0.0
    %2772 = vmatprep.subr.mxu0 0.0
    %2773 = vmatpush1.msra.mxu0 0.0
    %2774 = vmatprep.subr.mxu0 0.0
    %2775 = vmatpush1.msra.mxu0 0.0
    %2776 = vmatprep.subr.mxu0 0.0
    %2777 = vmatpush1.msra.mxu0 0.0
    %2778 = vmatprep.subr.mxu0 0.0
    %2779 = vmatpush1.msra.mxu0 %v281
    %2780 = vmatprep.subr.mxu0 0.0
    %2781 = vmatpush1.msra.mxu0 %v280
    %2782 = vmatprep.subr.mxu0 0.0
    %2783 = vmatpush1.msra.mxu0 %v279
    %2784 = vmatprep.subr.mxu0 0.0
    %2785 = vmatpush1.msra.mxu0 %v278
    %2786 = vmatprep.subr.mxu0 0.0
    %2787 = vmatpush2.msra.mxu0 0.0
    %2788 = vmatprep.subr.mxu0 0.0
    %2789 = vmatpush2.msra.mxu0 0.0
    %2790 = vmatprep.subr.mxu0 0.0
    %2791 = vmatpush2.msra.mxu0 0.0
    %2792 = vmatprep.subr.mxu0 0.0
    %2793 = vmatpush2.msra.mxu0 0.0
    %2794 = vmatprep.subr.mxu0 0.0
    %2795 = vmatpush2.msra.mxu0 0.0
    %2796 = vmatprep.subr.mxu0 0.0
    %2797 = vmatpush2.msra.mxu0 0.0
    %2798 = vmatprep.subr.mxu0 0.0
    %2799 = vmatpush2.msra.mxu0 0.0
    %2800 = vmatprep.subr.mxu0 0.0
    %2801 = vmatpush2.msra.mxu0 0.0
    %2802 = vmatprep.subr.mxu0 0.0
    %2803 = vmatpush2.msra.mxu0 0.0
    %2804 = vmatprep.subr.mxu0 0.0
    %2805 = vmatpush2.msra.mxu0 0.0
    %2806 = vmatprep.subr.mxu0 0.0
    %2807 = vmatpush2.msra.mxu0 0.0
    %2808 = vmatprep.subr.mxu0 0.0
    %2809 = vmatpush2.msra.mxu0 0.0
    %2810 = vmatprep.subr.mxu0 0.0
    %2811 = vmatpush2.msra.mxu0 0.0
    %2812 = vmatprep.subr.mxu0 0.0
    %2813 = vmatpush2.msra.mxu0 0.0
    %2814 = vmatprep.subr.mxu0 0.0
    %2815 = vmatpush2.msra.mxu0 0.0
    %2816 = vmatprep.subr.mxu0 0.0
    %2817 = vmatpush2.msra.mxu0 0.0
    %2818 = vmatprep.mubr.f32.mxu0 0.0
    %2819 = vmatmul.mubr.f32.gmra.mxu0 %v2752
    %v2820 = vpop.f32.mrf.mxu0
    %v2821 = vadd.f32 0.0, %v2820
    %v2822 = vpop.f32.mrf.mxu0
    %2823 = vdwg.mxu0
    %v2825 = vsel %vm290, %v2821, 0
    %2827 = vmatprep.subr.mxu0 0.0
    %2828 = vmatpush1.msra.mxu0 0.0
    %2829 = vmatprep.subr.mxu0 0.0
    %2830 = vmatpush1.msra.mxu0 0.0
    %2831 = vmatprep.subr.mxu0 0.0
    %2832 = vmatpush1.msra.mxu0 0.0
    %2833 = vmatprep.subr.mxu0 0.0
    %2834 = vmatpush1.msra.mxu0 0.0
    %2835 = vmatprep.subr.mxu0 0.0
    %2836 = vmatpush1.msra.mxu0 0.0
    %2837 = vmatprep.subr.mxu0 0.0
    %2838 = vmatpush1.msra.mxu0 0.0
    %2839 = vmatprep.subr.mxu0 0.0
    %2840 = vmatpush1.msra.mxu0 0.0
    %2841 = vmatprep.subr.mxu0 0.0
    %2842 = vmatpush1.msra.mxu0 0.0
    %2843 = vmatprep.subr.mxu0 0.0
    %2844 = vmatpush1.msra.mxu0 0.0
    %2845 = vmatprep.subr.mxu0 0.0
    %2846 = vmatpush1.msra.mxu0 0.0
    %2847 = vmatprep.subr.mxu0 0.0
    %2848 = vmatpush1.msra.mxu0 0.0
    %2849 = vmatprep.subr.mxu0 0.0
    %2850 = vmatpush1.msra.mxu0 0.0
    %2851 = vmatprep.subr.mxu0 0.0
    %2852 = vmatpush1.msra.mxu0 %v285
    %2853 = vmatprep.subr.mxu0 0.0
    %2854 = vmatpush1.msra.mxu0 %v284
    %2855 = vmatprep.subr.mxu0 0.0
    %2856 = vmatpush1.msra.mxu0 %v283
    %2857 = vmatprep.subr.mxu0 0.0
    %2858 = vmatpush1.msra.mxu0 %v282
    %2859 = vmatprep.subr.mxu0 0.0
    %2860 = vmatpush2.msra.mxu0 0.0
    %2861 = vmatprep.subr.mxu0 0.0
    %2862 = vmatpush2.msra.mxu0 0.0
    %2863 = vmatprep.subr.mxu0 0.0
    %2864 = vmatpush2.msra.mxu0 0.0
    %2865 = vmatprep.subr.mxu0 0.0
    %2866 = vmatpush2.msra.mxu0 0.0
    %2867 = vmatprep.subr.mxu0 0.0
    %2868 = vmatpush2.msra.mxu0 0.0
    %2869 = vmatprep.subr.mxu0 0.0
    %2870 = vmatpush2.msra.mxu0 0.0
    %2871 = vmatprep.subr.mxu0 0.0
    %2872 = vmatpush2.msra.mxu0 0.0
    %2873 = vmatprep.subr.mxu0 0.0
    %2874 = vmatpush2.msra.mxu0 0.0
    %2875 = vmatprep.subr.mxu0 0.0
    %2876 = vmatpush2.msra.mxu0 0.0
    %2877 = vmatprep.subr.mxu0 0.0
    %2878 = vmatpush2.msra.mxu0 0.0
    %2879 = vmatprep.subr.mxu0 0.0
    %2880 = vmatpush2.msra.mxu0 0.0
    %2881 = vmatprep.subr.mxu0 0.0
    %2882 = vmatpush2.msra.mxu0 0.0
    %2883 = vmatprep.subr.mxu0 0.0
    %2884 = vmatpush2.msra.mxu0 0.0
    %2885 = vmatprep.subr.mxu0 0.0
    %2886 = vmatpush2.msra.mxu0 0.0
    %2887 = vmatprep.subr.mxu0 0.0
    %2888 = vmatpush2.msra.mxu0 0.0
    %2889 = vmatprep.subr.mxu0 0.0
    %2890 = vmatpush2.msra.mxu0 0.0
    %2891 = vmatprep.mubr.f32.mxu0 0.0
    %2892 = vmatmul.mubr.f32.gmra.mxu0 %v2825
    %v2893 = vpop.f32.mrf.mxu0
    %v2894 = vadd.f32 0.0, %v2893
    %v2895 = vpop.f32.mrf.mxu0
    %2896 = vdwg.mxu0
    %v2898 = vcombine.high %v2894, %v2894
    %v2900 = vunpack.c.l.s4 1966171168
    %v2901 = vunpack.c.0.s8 %v2900
    %v2902 = vlaneseq
    %v2903 = vshrl.u32 %v2902, 7
    %v2904 = vsub.s32 %v2901, %v2903
    %v2905 = vrot.slane %v2894, %v2904
    %v2907 = vunpack.c.l.s4 1966171168
    %v2908 = vunpack.c.0.s8 %v2907
    %v2909 = vlaneseq
    %v2910 = vshrl.u32 %v2909, 7
    %v2911 = vsub.s32 %v2908, %v2910
    %v2912 = vrot.slane %v2898, %v2911
    %v2913 = vcombine.high %v2905, %v2905
    %v2914 = vcombine.high %v2912, %v2912
    %v2916 = vunpack.c.l.s4 1966171168
    %v2917 = vunpack.c.0.s8 %v2916
    %v2918 = vlaneseq
    %v2919 = vshrl.u32 %v2918, 7
    %v2920 = vsub.s32 %v2917, %v2919
    %v2921 = vrot.slane %v2905, %v2920
    %v2923 = vunpack.c.l.s4 1966171168
    %v2924 = vunpack.c.0.s8 %v2923
    %v2925 = vlaneseq
    %v2926 = vshrl.u32 %v2925, 7
    %v2927 = vsub.s32 %v2924, %v2926
    %v2928 = vrot.slane %v2912, %v2927
    %v2930 = vunpack.c.l.s4 1966171168
    %v2931 = vunpack.c.0.s8 %v2930
    %v2932 = vlaneseq
    %v2933 = vshrl.u32 %v2932, 7
    %v2934 = vsub.s32 %v2931, %v2933
    %v2935 = vrot.slane %v2913, %v2934
    %v2937 = vunpack.c.l.s4 1966171168
    %v2938 = vunpack.c.0.s8 %v2937
    %v2939 = vlaneseq
    %v2940 = vshrl.u32 %v2939, 7
    %v2941 = vsub.s32 %v2938, %v2940
    %v2942 = vrot.slane %v2914, %v2941
    %v2943 = vcombine.high %v2921, %v2921
    %v2944 = vcombine.high %v2928, %v2928
    %v2945 = vcombine.high %v2935, %v2935
    %v2946 = vcombine.high %v2942, %v2942
    %v2947 = vlaneseq
    %v2948 = vshrl.u32 %v2947, 7
    %v2949 = vsub.s32 0, %v2948
    %v2950 = vrot.slane %v2921, %v2949
    %v2951 = vlaneseq
    %v2952 = vshrl.u32 %v2951, 7
    %v2953 = vsub.s32 0, %v2952
    %v2954 = vrot.slane %v2935, %v2953
    %v2955 = vlaneseq
    %v2956 = vshrl.u32 %v2955, 7
    %v2957 = vsub.s32 0, %v2956
    %v2958 = vrot.slane %v2943, %v2957
    %v2959 = vlaneseq
    %v2960 = vshrl.u32 %v2959, 7
    %v2961 = vsub.s32 0, %v2960
    %v2962 = vrot.slane %v2945, %v2961
    %v2963 = vlaneseq
    %v2964 = vshrl.u32 %v2963, 7
    %v2965 = vsub.s32 0, %v2964
    %v2966 = vrot.slane %v2928, %v2965
    %v2967 = vlaneseq
    %v2968 = vshrl.u32 %v2967, 7
    %v2969 = vsub.s32 0, %v2968
    %v2970 = vrot.slane %v2942, %v2969
    %v2971 = vlaneseq
    %v2972 = vshrl.u32 %v2971, 7
    %v2973 = vsub.s32 0, %v2972
    %v2974 = vrot.slane %v2944, %v2973
    %v2975 = vlaneseq
    %v2976 = vshrl.u32 %v2975, 7
    %v2977 = vsub.s32 0, %v2976
    %v2978 = vrot.slane %v2946, %v2977
    %v2987 = vmul.f32 %v2950, %v128
    %v2988 = vmul.f32 %v2950, %v129
    %v2989 = vmul.f32 %v2950, %v130
    %v2990 = vmul.f32 %v2950, %v131
    %v2991 = vmul.f32 %v2950, %v132
    %v2992 = vmul.f32 %v2950, %v133
    %v2993 = vmul.f32 %v2950, %v134
    %v2994 = vmul.f32 %v2950, %v135
    %v2995 = vmul.f32 %v2950, %v136
    %v2996 = vmul.f32 %v2950, %v137
    %v2997 = vmul.f32 %v2950, %v138
    %v2998 = vmul.f32 %v2950, %v139
    %v2999 = vmul.f32 %v2950, %v140
    %v3000 = vmul.f32 %v2950, %v141
    %v3001 = vmul.f32 %v2950, %v142
    %v3002 = vmul.f32 %v2950, %v143
    %v3003 = vmul.f32 %v2954, %v144
    %v3004 = vmul.f32 %v2954, %v145
    %v3005 = vmul.f32 %v2954, %v146
    %v3006 = vmul.f32 %v2954, %v147
    %v3007 = vmul.f32 %v2954, %v148
    %v3008 = vmul.f32 %v2954, %v149
    %v3009 = vmul.f32 %v2954, %v150
    %v3010 = vmul.f32 %v2954, %v151
    %v3011 = vmul.f32 %v2954, %v152
    %v3012 = vmul.f32 %v2954, %v153
    %v3013 = vmul.f32 %v2954, %v154
    %v3014 = vmul.f32 %v2954, %v155
    %v3015 = vmul.f32 %v2954, %v156
    %v3016 = vmul.f32 %v2954, %v157
    %v3017 = vmul.f32 %v2954, %v158
    %v3018 = vmul.f32 %v2954, %v159
    %v3019 = vmul.f32 %v2958, %v160
    %v3020 = vmul.f32 %v2958, %v161
    %v3021 = vmul.f32 %v2958, %v162
    %v3022 = vmul.f32 %v2958, %v163
    %v3023 = vmul.f32 %v2958, %v164
    %v3024 = vmul.f32 %v2958, %v165
    %v3025 = vmul.f32 %v2958, %v166
    %v3026 = vmul.f32 %v2958, %v167
    %v3027 = vmul.f32 %v2958, %v168
    %v3028 = vmul.f32 %v2958, %v169
    %v3029 = vmul.f32 %v2958, %v170
    %v3030 = vmul.f32 %v2958, %v171
    %v3031 = vmul.f32 %v2958, %v172
    %v3032 = vmul.f32 %v2958, %v173
    %v3033 = vmul.f32 %v2958, %v174
    %v3034 = vmul.f32 %v2958, %v175
    %v3035 = vmul.f32 %v2962, %v176
    %v3036 = vmul.f32 %v2962, %v177
    %v3037 = vmul.f32 %v2962, %v178
    %v3038 = vmul.f32 %v2962, %v179
    %v3039 = vmul.f32 %v2962, %v180
    %v3040 = vmul.f32 %v2962, %v181
    %v3041 = vmul.f32 %v2962, %v182
    %v3042 = vmul.f32 %v2962, %v183
    %v3043 = vmul.f32 %v2962, %v184
    %v3044 = vmul.f32 %v2962, %v185
    %v3045 = vmul.f32 %v2962, %v186
    %v3046 = vmul.f32 %v2962, %v187
    %v3047 = vmul.f32 %v2962, %v188
    %v3048 = vmul.f32 %v2962, %v189
    %v3049 = vmul.f32 %v2962, %v190
    %v3050 = vmul.f32 %v2962, %v191
    %v3051 = vmul.f32 %v2966, %v192
    %v3052 = vmul.f32 %v2966, %v193
    %v3053 = vmul.f32 %v2966, %v194
    %v3054 = vmul.f32 %v2966, %v195
    %v3055 = vmul.f32 %v2966, %v196
    %v3056 = vmul.f32 %v2966, %v197
    %v3057 = vmul.f32 %v2966, %v198
    %v3058 = vmul.f32 %v2966, %v199
    %v3059 = vmul.f32 %v2966, %v200
    %v3060 = vmul.f32 %v2966, %v201
    %v3061 = vmul.f32 %v2966, %v202
    %v3062 = vmul.f32 %v2966, %v203
    %v3063 = vmul.f32 %v2966, %v204
    %v3064 = vmul.f32 %v2966, %v205
    %v3065 = vmul.f32 %v2966, %v206
    %v3066 = vmul.f32 %v2966, %v207
    %v3067 = vmul.f32 %v2970, %v208
    %v3068 = vmul.f32 %v2970, %v209
    %v3069 = vmul.f32 %v2970, %v210
    %v3070 = vmul.f32 %v2970, %v211
    %v3071 = vmul.f32 %v2970, %v212
    %v3072 = vmul.f32 %v2970, %v213
    %v3073 = vmul.f32 %v2970, %v214
    %v3074 = vmul.f32 %v2970, %v215
    %v3075 = vmul.f32 %v2970, %v216
    %v3076 = vmul.f32 %v2970, %v217
    %v3077 = vmul.f32 %v2970, %v218
    %v3078 = vmul.f32 %v2970, %v219
    %v3079 = vmul.f32 %v2970, %v220
    %v3080 = vmul.f32 %v2970, %v221
    %v3081 = vmul.f32 %v2970, %v222
    %v3082 = vmul.f32 %v2970, %v223
    %v3083 = vmul.f32 %v2974, %v224
    %v3084 = vmul.f32 %v2974, %v225
    %v3085 = vmul.f32 %v2974, %v226
    %v3086 = vmul.f32 %v2974, %v227
    %v3087 = vmul.f32 %v2974, %v228
    %v3088 = vmul.f32 %v2974, %v229
    %v3089 = vmul.f32 %v2974, %v230
    %v3090 = vmul.f32 %v2974, %v231
    %v3091 = vmul.f32 %v2974, %v232
    %v3092 = vmul.f32 %v2974, %v233
    %v3093 = vmul.f32 %v2974, %v234
    %v3094 = vmul.f32 %v2974, %v235
    %v3095 = vmul.f32 %v2974, %v236
    %v3096 = vmul.f32 %v2974, %v237
    %v3097 = vmul.f32 %v2974, %v238
    %v3098 = vmul.f32 %v2974, %v239
    %v3099 = vmul.f32 %v2978, %v240
    %v3100 = vmul.f32 %v2978, %v241
    %v3101 = vmul.f32 %v2978, %v242
    %v3102 = vmul.f32 %v2978, %v243
    %v3103 = vmul.f32 %v2978, %v244
    %v3104 = vmul.f32 %v2978, %v245
    %v3105 = vmul.f32 %v2978, %v246
    %v3106 = vmul.f32 %v2978, %v247
    %v3107 = vmul.f32 %v2978, %v248
    %v3108 = vmul.f32 %v2978, %v249
    %v3109 = vmul.f32 %v2978, %v250
    %v3110 = vmul.f32 %v2978, %v251
    %v3111 = vmul.f32 %v2978, %v252
    %v3112 = vmul.f32 %v2978, %v253
    %v3113 = vmul.f32 %v2978, %v254
    %v3114 = vmul.f32 %v2978, %v255
    %v3115 = vsel %vm290, %v2987, 0.0
    %3116 = vadd.xlane.f32.xlu0 %v3115
    %v3117 = vpop.xlane.xlu0 %3116
    %v3118 = vsel %vm290, %v2988, 0.0
    %3119 = vadd.xlane.f32.xlu0 %v3118
    %v3120 = vpop.xlane.xlu0 %3119
    %v3121 = vsel %vm290, %v2989, 0.0
    %3122 = vadd.xlane.f32.xlu0 %v3121
    %v3123 = vpop.xlane.xlu0 %3122
    %v3124 = vsel %vm290, %v2990, 0.0
    %3125 = vadd.xlane.f32.xlu0 %v3124
    %v3126 = vpop.xlane.xlu0 %3125
    %v3127 = vsel %vm290, %v2991, 0.0
    %3128 = vadd.xlane.f32.xlu0 %v3127
    %v3129 = vpop.xlane.xlu0 %3128
    %v3130 = vsel %vm290, %v2992, 0.0
    %3131 = vadd.xlane.f32.xlu0 %v3130
    %v3132 = vpop.xlane.xlu0 %3131
    %v3133 = vsel %vm290, %v2993, 0.0
    %3134 = vadd.xlane.f32.xlu0 %v3133
    %v3135 = vpop.xlane.xlu0 %3134
    %v3136 = vsel %vm290, %v2994, 0.0
    %3137 = vadd.xlane.f32.xlu0 %v3136
    %v3138 = vpop.xlane.xlu0 %3137
    %v3139 = vsel %vm290, %v2995, 0.0
    %3140 = vadd.xlane.f32.xlu0 %v3139
    %v3141 = vpop.xlane.xlu0 %3140
    %v3142 = vsel %vm290, %v2996, 0.0
    %3143 = vadd.xlane.f32.xlu0 %v3142
    %v3144 = vpop.xlane.xlu0 %3143
    %v3145 = vsel %vm290, %v2997, 0.0
    %3146 = vadd.xlane.f32.xlu0 %v3145
    %v3147 = vpop.xlane.xlu0 %3146
    %v3148 = vsel %vm290, %v2998, 0.0
    %3149 = vadd.xlane.f32.xlu0 %v3148
    %v3150 = vpop.xlane.xlu0 %3149
    %v3151 = vsel %vm290, %v2999, 0.0
    %3152 = vadd.xlane.f32.xlu0 %v3151
    %v3153 = vpop.xlane.xlu0 %3152
    %v3154 = vsel %vm290, %v3000, 0.0
    %3155 = vadd.xlane.f32.xlu0 %v3154
    %v3156 = vpop.xlane.xlu0 %3155
    %v3157 = vsel %vm290, %v3001, 0.0
    %3158 = vadd.xlane.f32.xlu0 %v3157
    %v3159 = vpop.xlane.xlu0 %3158
    %v3160 = vsel %vm290, %v3002, 0.0
    %3161 = vadd.xlane.f32.xlu0 %v3160
    %v3162 = vpop.xlane.xlu0 %3161
    %v3163 = vsel %vm290, %v3003, 0.0
    %3164 = vadd.xlane.f32.xlu0 %v3163
    %v3165 = vpop.xlane.xlu0 %3164
    %v3166 = vsel %vm290, %v3004, 0.0
    %3167 = vadd.xlane.f32.xlu0 %v3166
    %v3168 = vpop.xlane.xlu0 %3167
    %v3169 = vsel %vm290, %v3005, 0.0
    %3170 = vadd.xlane.f32.xlu0 %v3169
    %v3171 = vpop.xlane.xlu0 %3170
    %v3172 = vsel %vm290, %v3006, 0.0
    %3173 = vadd.xlane.f32.xlu0 %v3172
    %v3174 = vpop.xlane.xlu0 %3173
    %v3175 = vsel %vm290, %v3007, 0.0
    %3176 = vadd.xlane.f32.xlu0 %v3175
    %v3177 = vpop.xlane.xlu0 %3176
    %v3178 = vsel %vm290, %v3008, 0.0
    %3179 = vadd.xlane.f32.xlu0 %v3178
    %v3180 = vpop.xlane.xlu0 %3179
    %v3181 = vsel %vm290, %v3009, 0.0
    %3182 = vadd.xlane.f32.xlu0 %v3181
    %v3183 = vpop.xlane.xlu0 %3182
    %v3184 = vsel %vm290, %v3010, 0.0
    %3185 = vadd.xlane.f32.xlu0 %v3184
    %v3186 = vpop.xlane.xlu0 %3185
    %v3187 = vsel %vm290, %v3011, 0.0
    %3188 = vadd.xlane.f32.xlu0 %v3187
    %v3189 = vpop.xlane.xlu0 %3188
    %v3190 = vsel %vm290, %v3012, 0.0
    %3191 = vadd.xlane.f32.xlu0 %v3190
    %v3192 = vpop.xlane.xlu0 %3191
    %v3193 = vsel %vm290, %v3013, 0.0
    %3194 = vadd.xlane.f32.xlu0 %v3193
    %v3195 = vpop.xlane.xlu0 %3194
    %v3196 = vsel %vm290, %v3014, 0.0
    %3197 = vadd.xlane.f32.xlu0 %v3196
    %v3198 = vpop.xlane.xlu0 %3197
    %v3199 = vsel %vm290, %v3015, 0.0
    %3200 = vadd.xlane.f32.xlu0 %v3199
    %v3201 = vpop.xlane.xlu0 %3200
    %v3202 = vsel %vm290, %v3016, 0.0
    %3203 = vadd.xlane.f32.xlu0 %v3202
    %v3204 = vpop.xlane.xlu0 %3203
    %v3205 = vsel %vm290, %v3017, 0.0
    %3206 = vadd.xlane.f32.xlu0 %v3205
    %v3207 = vpop.xlane.xlu0 %3206
    %v3208 = vsel %vm290, %v3018, 0.0
    %3209 = vadd.xlane.f32.xlu0 %v3208
    %v3210 = vpop.xlane.xlu0 %3209
    %v3211 = vsel %vm290, %v3019, 0.0
    %3212 = vadd.xlane.f32.xlu0 %v3211
    %v3213 = vpop.xlane.xlu0 %3212
    %v3214 = vsel %vm290, %v3020, 0.0
    %3215 = vadd.xlane.f32.xlu0 %v3214
    %v3216 = vpop.xlane.xlu0 %3215
    %v3217 = vsel %vm290, %v3021, 0.0
    %3218 = vadd.xlane.f32.xlu0 %v3217
    %v3219 = vpop.xlane.xlu0 %3218
    %v3220 = vsel %vm290, %v3022, 0.0
    %3221 = vadd.xlane.f32.xlu0 %v3220
    %v3222 = vpop.xlane.xlu0 %3221
    %v3223 = vsel %vm290, %v3023, 0.0
    %3224 = vadd.xlane.f32.xlu0 %v3223
    %v3225 = vpop.xlane.xlu0 %3224
    %v3226 = vsel %vm290, %v3024, 0.0
    %3227 = vadd.xlane.f32.xlu0 %v3226
    %v3228 = vpop.xlane.xlu0 %3227
    %v3229 = vsel %vm290, %v3025, 0.0
    %3230 = vadd.xlane.f32.xlu0 %v3229
    %v3231 = vpop.xlane.xlu0 %3230
    %v3232 = vsel %vm290, %v3026, 0.0
    %3233 = vadd.xlane.f32.xlu0 %v3232
    %v3234 = vpop.xlane.xlu0 %3233
    %v3235 = vsel %vm290, %v3027, 0.0
    %3236 = vadd.xlane.f32.xlu0 %v3235
    %v3237 = vpop.xlane.xlu0 %3236
    %v3238 = vsel %vm290, %v3028, 0.0
    %3239 = vadd.xlane.f32.xlu0 %v3238
    %v3240 = vpop.xlane.xlu0 %3239
    %v3241 = vsel %vm290, %v3029, 0.0
    %3242 = vadd.xlane.f32.xlu0 %v3241
    %v3243 = vpop.xlane.xlu0 %3242
    %v3244 = vsel %vm290, %v3030, 0.0
    %3245 = vadd.xlane.f32.xlu0 %v3244
    %v3246 = vpop.xlane.xlu0 %3245
    %v3247 = vsel %vm290, %v3031, 0.0
    %3248 = vadd.xlane.f32.xlu0 %v3247
    %v3249 = vpop.xlane.xlu0 %3248
    %v3250 = vsel %vm290, %v3032, 0.0
    %3251 = vadd.xlane.f32.xlu0 %v3250
    %v3252 = vpop.xlane.xlu0 %3251
    %v3253 = vsel %vm290, %v3033, 0.0
    %3254 = vadd.xlane.f32.xlu0 %v3253
    %v3255 = vpop.xlane.xlu0 %3254
    %v3256 = vsel %vm290, %v3034, 0.0
    %3257 = vadd.xlane.f32.xlu0 %v3256
    %v3258 = vpop.xlane.xlu0 %3257
    %v3259 = vsel %vm290, %v3035, 0.0
    %3260 = vadd.xlane.f32.xlu0 %v3259
    %v3261 = vpop.xlane.xlu0 %3260
    %v3262 = vsel %vm290, %v3036, 0.0
    %3263 = vadd.xlane.f32.xlu0 %v3262
    %v3264 = vpop.xlane.xlu0 %3263
    %v3265 = vsel %vm290, %v3037, 0.0
    %3266 = vadd.xlane.f32.xlu0 %v3265
    %v3267 = vpop.xlane.xlu0 %3266
    %v3268 = vsel %vm290, %v3038, 0.0
    %3269 = vadd.xlane.f32.xlu0 %v3268
    %v3270 = vpop.xlane.xlu0 %3269
    %v3271 = vsel %vm290, %v3039, 0.0
    %3272 = vadd.xlane.f32.xlu0 %v3271
    %v3273 = vpop.xlane.xlu0 %3272
    %v3274 = vsel %vm290, %v3040, 0.0
    %3275 = vadd.xlane.f32.xlu0 %v3274
    %v3276 = vpop.xlane.xlu0 %3275
    %v3277 = vsel %vm290, %v3041, 0.0
    %3278 = vadd.xlane.f32.xlu0 %v3277
    %v3279 = vpop.xlane.xlu0 %3278
    %v3280 = vsel %vm290, %v3042, 0.0
    %3281 = vadd.xlane.f32.xlu0 %v3280
    %v3282 = vpop.xlane.xlu0 %3281
    %v3283 = vsel %vm290, %v3043, 0.0
    %3284 = vadd.xlane.f32.xlu0 %v3283
    %v3285 = vpop.xlane.xlu0 %3284
    %v3286 = vsel %vm290, %v3044, 0.0
    %3287 = vadd.xlane.f32.xlu0 %v3286
    %v3288 = vpop.xlane.xlu0 %3287
    %v3289 = vsel %vm290, %v3045, 0.0
    %3290 = vadd.xlane.f32.xlu0 %v3289
    %v3291 = vpop.xlane.xlu0 %3290
    %v3292 = vsel %vm290, %v3046, 0.0
    %3293 = vadd.xlane.f32.xlu0 %v3292
    %v3294 = vpop.xlane.xlu0 %3293
    %v3295 = vsel %vm290, %v3047, 0.0
    %3296 = vadd.xlane.f32.xlu0 %v3295
    %v3297 = vpop.xlane.xlu0 %3296
    %v3298 = vsel %vm290, %v3048, 0.0
    %3299 = vadd.xlane.f32.xlu0 %v3298
    %v3300 = vpop.xlane.xlu0 %3299
    %v3301 = vsel %vm290, %v3049, 0.0
    %3302 = vadd.xlane.f32.xlu0 %v3301
    %v3303 = vpop.xlane.xlu0 %3302
    %v3304 = vsel %vm290, %v3050, 0.0
    %3305 = vadd.xlane.f32.xlu0 %v3304
    %v3306 = vpop.xlane.xlu0 %3305
    %v3307 = vsel %vm290, %v3051, 0.0
    %3308 = vadd.xlane.f32.xlu0 %v3307
    %v3309 = vpop.xlane.xlu0 %3308
    %v3310 = vsel %vm290, %v3052, 0.0
    %3311 = vadd.xlane.f32.xlu0 %v3310
    %v3312 = vpop.xlane.xlu0 %3311
    %v3313 = vsel %vm290, %v3053, 0.0
    %3314 = vadd.xlane.f32.xlu0 %v3313
    %v3315 = vpop.xlane.xlu0 %3314
    %v3316 = vsel %vm290, %v3054, 0.0
    %3317 = vadd.xlane.f32.xlu0 %v3316
    %v3318 = vpop.xlane.xlu0 %3317
    %v3319 = vsel %vm290, %v3055, 0.0
    %3320 = vadd.xlane.f32.xlu0 %v3319
    %v3321 = vpop.xlane.xlu0 %3320
    %v3322 = vsel %vm290, %v3056, 0.0
    %3323 = vadd.xlane.f32.xlu0 %v3322
    %v3324 = vpop.xlane.xlu0 %3323
    %v3325 = vsel %vm290, %v3057, 0.0
    %3326 = vadd.xlane.f32.xlu0 %v3325
    %v3327 = vpop.xlane.xlu0 %3326
    %v3328 = vsel %vm290, %v3058, 0.0
    %3329 = vadd.xlane.f32.xlu0 %v3328
    %v3330 = vpop.xlane.xlu0 %3329
    %v3331 = vsel %vm290, %v3059, 0.0
    %3332 = vadd.xlane.f32.xlu0 %v3331
    %v3333 = vpop.xlane.xlu0 %3332
    %v3334 = vsel %vm290, %v3060, 0.0
    %3335 = vadd.xlane.f32.xlu0 %v3334
    %v3336 = vpop.xlane.xlu0 %3335
    %v3337 = vsel %vm290, %v3061, 0.0
    %3338 = vadd.xlane.f32.xlu0 %v3337
    %v3339 = vpop.xlane.xlu0 %3338
    %v3340 = vsel %vm290, %v3062, 0.0
    %3341 = vadd.xlane.f32.xlu0 %v3340
    %v3342 = vpop.xlane.xlu0 %3341
    %v3343 = vsel %vm290, %v3063, 0.0
    %3344 = vadd.xlane.f32.xlu0 %v3343
    %v3345 = vpop.xlane.xlu0 %3344
    %v3346 = vsel %vm290, %v3064, 0.0
    %3347 = vadd.xlane.f32.xlu0 %v3346
    %v3348 = vpop.xlane.xlu0 %3347
    %v3349 = vsel %vm290, %v3065, 0.0
    %3350 = vadd.xlane.f32.xlu0 %v3349
    %v3351 = vpop.xlane.xlu0 %3350
    %v3352 = vsel %vm290, %v3066, 0.0
    %3353 = vadd.xlane.f32.xlu0 %v3352
    %v3354 = vpop.xlane.xlu0 %3353
    %v3355 = vsel %vm290, %v3067, 0.0
    %3356 = vadd.xlane.f32.xlu0 %v3355
    %v3357 = vpop.xlane.xlu0 %3356
    %v3358 = vsel %vm290, %v3068, 0.0
    %3359 = vadd.xlane.f32.xlu0 %v3358
    %v3360 = vpop.xlane.xlu0 %3359
    %v3361 = vsel %vm290, %v3069, 0.0
    %3362 = vadd.xlane.f32.xlu0 %v3361
    %v3363 = vpop.xlane.xlu0 %3362
    %v3364 = vsel %vm290, %v3070, 0.0
    %3365 = vadd.xlane.f32.xlu0 %v3364
    %v3366 = vpop.xlane.xlu0 %3365
    %v3367 = vsel %vm290, %v3071, 0.0
    %3368 = vadd.xlane.f32.xlu0 %v3367
    %v3369 = vpop.xlane.xlu0 %3368
    %v3370 = vsel %vm290, %v3072, 0.0
    %3371 = vadd.xlane.f32.xlu0 %v3370
    %v3372 = vpop.xlane.xlu0 %3371
    %v3373 = vsel %vm290, %v3073, 0.0
    %3374 = vadd.xlane.f32.xlu0 %v3373
    %v3375 = vpop.xlane.xlu0 %3374
    %v3376 = vsel %vm290, %v3074, 0.0
    %3377 = vadd.xlane.f32.xlu0 %v3376
    %v3378 = vpop.xlane.xlu0 %3377
    %v3379 = vsel %vm290, %v3075, 0.0
    %3380 = vadd.xlane.f32.xlu0 %v3379
    %v3381 = vpop.xlane.xlu0 %3380
    %v3382 = vsel %vm290, %v3076, 0.0
    %3383 = vadd.xlane.f32.xlu0 %v3382
    %v3384 = vpop.xlane.xlu0 %3383
    %v3385 = vsel %vm290, %v3077, 0.0
    %3386 = vadd.xlane.f32.xlu0 %v3385
    %v3387 = vpop.xlane.xlu0 %3386
    %v3388 = vsel %vm290, %v3078, 0.0
    %3389 = vadd.xlane.f32.xlu0 %v3388
    %v3390 = vpop.xlane.xlu0 %3389
    %v3391 = vsel %vm290, %v3079, 0.0
    %3392 = vadd.xlane.f32.xlu0 %v3391
    %v3393 = vpop.xlane.xlu0 %3392
    %v3394 = vsel %vm290, %v3080, 0.0
    %3395 = vadd.xlane.f32.xlu0 %v3394
    %v3396 = vpop.xlane.xlu0 %3395
    %v3397 = vsel %vm290, %v3081, 0.0
    %3398 = vadd.xlane.f32.xlu0 %v3397
    %v3399 = vpop.xlane.xlu0 %3398
    %v3400 = vsel %vm290, %v3082, 0.0
    %3401 = vadd.xlane.f32.xlu0 %v3400
    %v3402 = vpop.xlane.xlu0 %3401
    %v3403 = vsel %vm290, %v3083, 0.0
    %3404 = vadd.xlane.f32.xlu0 %v3403
    %v3405 = vpop.xlane.xlu0 %3404
    %v3406 = vsel %vm290, %v3084, 0.0
    %3407 = vadd.xlane.f32.xlu0 %v3406
    %v3408 = vpop.xlane.xlu0 %3407
    %v3409 = vsel %vm290, %v3085, 0.0
    %3410 = vadd.xlane.f32.xlu0 %v3409
    %v3411 = vpop.xlane.xlu0 %3410
    %v3412 = vsel %vm290, %v3086, 0.0
    %3413 = vadd.xlane.f32.xlu0 %v3412
    %v3414 = vpop.xlane.xlu0 %3413
    %v3415 = vsel %vm290, %v3087, 0.0
    %3416 = vadd.xlane.f32.xlu0 %v3415
    %v3417 = vpop.xlane.xlu0 %3416
    %v3418 = vsel %vm290, %v3088, 0.0
    %3419 = vadd.xlane.f32.xlu0 %v3418
    %v3420 = vpop.xlane.xlu0 %3419
    %v3421 = vsel %vm290, %v3089, 0.0
    %3422 = vadd.xlane.f32.xlu0 %v3421
    %v3423 = vpop.xlane.xlu0 %3422
    %v3424 = vsel %vm290, %v3090, 0.0
    %3425 = vadd.xlane.f32.xlu0 %v3424
    %v3426 = vpop.xlane.xlu0 %3425
    %v3427 = vsel %vm290, %v3091, 0.0
    %3428 = vadd.xlane.f32.xlu0 %v3427
    %v3429 = vpop.xlane.xlu0 %3428
    %v3430 = vsel %vm290, %v3092, 0.0
    %3431 = vadd.xlane.f32.xlu0 %v3430
    %v3432 = vpop.xlane.xlu0 %3431
    %v3433 = vsel %vm290, %v3093, 0.0
    %3434 = vadd.xlane.f32.xlu0 %v3433
    %v3435 = vpop.xlane.xlu0 %3434
    %v3436 = vsel %vm290, %v3094, 0.0
    %3437 = vadd.xlane.f32.xlu0 %v3436
    %v3438 = vpop.xlane.xlu0 %3437
    %v3439 = vsel %vm290, %v3095, 0.0
    %3440 = vadd.xlane.f32.xlu0 %v3439
    %v3441 = vpop.xlane.xlu0 %3440
    %v3442 = vsel %vm290, %v3096, 0.0
    %3443 = vadd.xlane.f32.xlu0 %v3442
    %v3444 = vpop.xlane.xlu0 %3443
    %v3445 = vsel %vm290, %v3097, 0.0
    %3446 = vadd.xlane.f32.xlu0 %v3445
    %v3447 = vpop.xlane.xlu0 %3446
    %v3448 = vsel %vm290, %v3098, 0.0
    %3449 = vadd.xlane.f32.xlu0 %v3448
    %v3450 = vpop.xlane.xlu0 %3449
    %v3451 = vsel %vm290, %v3099, 0.0
    %3452 = vadd.xlane.f32.xlu0 %v3451
    %v3453 = vpop.xlane.xlu0 %3452
    %v3454 = vsel %vm290, %v3100, 0.0
    %3455 = vadd.xlane.f32.xlu0 %v3454
    %v3456 = vpop.xlane.xlu0 %3455
    %v3457 = vsel %vm290, %v3101, 0.0
    %3458 = vadd.xlane.f32.xlu0 %v3457
    %v3459 = vpop.xlane.xlu0 %3458
    %v3460 = vsel %vm290, %v3102, 0.0
    %3461 = vadd.xlane.f32.xlu0 %v3460
    %v3462 = vpop.xlane.xlu0 %3461
    %v3463 = vsel %vm290, %v3103, 0.0
    %3464 = vadd.xlane.f32.xlu0 %v3463
    %v3465 = vpop.xlane.xlu0 %3464
    %v3466 = vsel %vm290, %v3104, 0.0
    %3467 = vadd.xlane.f32.xlu0 %v3466
    %v3468 = vpop.xlane.xlu0 %3467
    %v3469 = vsel %vm290, %v3105, 0.0
    %3470 = vadd.xlane.f32.xlu0 %v3469
    %v3471 = vpop.xlane.xlu0 %3470
    %v3472 = vsel %vm290, %v3106, 0.0
    %3473 = vadd.xlane.f32.xlu0 %v3472
    %v3474 = vpop.xlane.xlu0 %3473
    %v3475 = vsel %vm290, %v3107, 0.0
    %3476 = vadd.xlane.f32.xlu0 %v3475
    %v3477 = vpop.xlane.xlu0 %3476
    %v3478 = vsel %vm290, %v3108, 0.0
    %3479 = vadd.xlane.f32.xlu0 %v3478
    %v3480 = vpop.xlane.xlu0 %3479
    %v3481 = vsel %vm290, %v3109, 0.0
    %3482 = vadd.xlane.f32.xlu0 %v3481
    %v3483 = vpop.xlane.xlu0 %3482
    %v3484 = vsel %vm290, %v3110, 0.0
    %3485 = vadd.xlane.f32.xlu0 %v3484
    %v3486 = vpop.xlane.xlu0 %3485
    %v3487 = vsel %vm290, %v3111, 0.0
    %3488 = vadd.xlane.f32.xlu0 %v3487
    %v3489 = vpop.xlane.xlu0 %3488
    %v3490 = vsel %vm290, %v3112, 0.0
    %3491 = vadd.xlane.f32.xlu0 %v3490
    %v3492 = vpop.xlane.xlu0 %3491
    %v3493 = vsel %vm290, %v3113, 0.0
    %3494 = vadd.xlane.f32.xlu0 %v3493
    %v3495 = vpop.xlane.xlu0 %3494
    %v3496 = vsel %vm290, %v3114, 0.0
    %3497 = vadd.xlane.f32.xlu0 %v3496
    %v3498 = vpop.xlane.xlu0 %3497
    %v3499 = vtanh.pop %v3117
    %v3500 = vtanh.pop %v3120
    %v3501 = vtanh.pop %v3123
    %v3502 = vtanh.pop %v3126
    %v3503 = vtanh.pop %v3129
    %v3504 = vtanh.pop %v3132
    %v3505 = vtanh.pop %v3135
    %v3506 = vtanh.pop %v3138
    %v3507 = vtanh.pop %v3141
    %v3508 = vtanh.pop %v3144
    %v3509 = vtanh.pop %v3147
    %v3510 = vtanh.pop %v3150
    %v3511 = vtanh.pop %v3153
    %v3512 = vtanh.pop %v3156
    %v3513 = vtanh.pop %v3159
    %v3514 = vtanh.pop %v3162
    %v3515 = vtanh.pop %v3165
    %v3516 = vtanh.pop %v3168
    %v3517 = vtanh.pop %v3171
    %v3518 = vtanh.pop %v3174
    %v3519 = vtanh.pop %v3177
    %v3520 = vtanh.pop %v3180
    %v3521 = vtanh.pop %v3183
    %v3522 = vtanh.pop %v3186
    %v3523 = vtanh.pop %v3189
    %v3524 = vtanh.pop %v3192
    %v3525 = vtanh.pop %v3195
    %v3526 = vtanh.pop %v3198
    %v3527 = vtanh.pop %v3201
    %v3528 = vtanh.pop %v3204
    %v3529 = vtanh.pop %v3207
    %v3530 = vtanh.pop %v3210
    %v3531 = vtanh.pop %v3213
    %v3532 = vtanh.pop %v3216
    %v3533 = vtanh.pop %v3219
    %v3534 = vtanh.pop %v3222
    %v3535 = vtanh.pop %v3225
    %v3536 = vtanh.pop %v3228
    %v3537 = vtanh.pop %v3231
    %v3538 = vtanh.pop %v3234
    %v3539 = vtanh.pop %v3237
    %v3540 = vtanh.pop %v3240
    %v3541 = vtanh.pop %v3243
    %v3542 = vtanh.pop %v3246
    %v3543 = vtanh.pop %v3249
    %v3544 = vtanh.pop %v3252
    %v3545 = vtanh.pop %v3255
    %v3546 = vtanh.pop %v3258
    %v3547 = vtanh.pop %v3261
    %v3548 = vtanh.pop %v3264
    %v3549 = vtanh.pop %v3267
    %v3550 = vtanh.pop %v3270
    %v3551 = vtanh.pop %v3273
    %v3552 = vtanh.pop %v3276
    %v3553 = vtanh.pop %v3279
    %v3554 = vtanh.pop %v3282
    %v3555 = vtanh.pop %v3285
    %v3556 = vtanh.pop %v3288
    %v3557 = vtanh.pop %v3291
    %v3558 = vtanh.pop %v3294
    %v3559 = vtanh.pop %v3297
    %v3560 = vtanh.pop %v3300
    %v3561 = vtanh.pop %v3303
    %v3562 = vtanh.pop %v3306
    %v3563 = vtanh.pop %v3309
    %v3564 = vtanh.pop %v3312
    %v3565 = vtanh.pop %v3315
    %v3566 = vtanh.pop %v3318
    %v3567 = vtanh.pop %v3321
    %v3568 = vtanh.pop %v3324
    %v3569 = vtanh.pop %v3327
    %v3570 = vtanh.pop %v3330
    %v3571 = vtanh.pop %v3333
    %v3572 = vtanh.pop %v3336
    %v3573 = vtanh.pop %v3339
    %v3574 = vtanh.pop %v3342
    %v3575 = vtanh.pop %v3345
    %v3576 = vtanh.pop %v3348
    %v3577 = vtanh.pop %v3351
    %v3578 = vtanh.pop %v3354
    %v3579 = vtanh.pop %v3357
    %v3580 = vtanh.pop %v3360
    %v3581 = vtanh.pop %v3363
    %v3582 = vtanh.pop %v3366
    %v3583 = vtanh.pop %v3369
    %v3584 = vtanh.pop %v3372
    %v3585 = vtanh.pop %v3375
    %v3586 = vtanh.pop %v3378
    %v3587 = vtanh.pop %v3381
    %v3588 = vtanh.pop %v3384
    %v3589 = vtanh.pop %v3387
    %v3590 = vtanh.pop %v3390
    %v3591 = vtanh.pop %v3393
    %v3592 = vtanh.pop %v3396
    %v3593 = vtanh.pop %v3399
    %v3594 = vtanh.pop %v3402
    %v3595 = vtanh.pop %v3405
    %v3596 = vtanh.pop %v3408
    %v3597 = vtanh.pop %v3411
    %v3598 = vtanh.pop %v3414
    %v3599 = vtanh.pop %v3417
    %v3600 = vtanh.pop %v3420
    %v3601 = vtanh.pop %v3423
    %v3602 = vtanh.pop %v3426
    %v3603 = vtanh.pop %v3429
    %v3604 = vtanh.pop %v3432
    %v3605 = vtanh.pop %v3435
    %v3606 = vtanh.pop %v3438
    %v3607 = vtanh.pop %v3441
    %v3608 = vtanh.pop %v3444
    %v3609 = vtanh.pop %v3447
    %v3610 = vtanh.pop %v3450
    %v3611 = vtanh.pop %v3453
    %v3612 = vtanh.pop %v3456
    %v3613 = vtanh.pop %v3459
    %v3614 = vtanh.pop %v3462
    %v3615 = vtanh.pop %v3465
    %v3616 = vtanh.pop %v3468
    %v3617 = vtanh.pop %v3471
    %v3618 = vtanh.pop %v3474
    %v3619 = vtanh.pop %v3477
    %v3620 = vtanh.pop %v3480
    %v3621 = vtanh.pop %v3483
    %v3622 = vtanh.pop %v3486
    %v3623 = vtanh.pop %v3489
    %v3624 = vtanh.pop %v3492
    %v3625 = vtanh.pop %v3495
    %v3626 = vtanh.pop %v3498
    %v3627 = vmul.f32 %v3499, 10.0
    %v3628 = vmul.f32 %v3500, 10.0
    %v3629 = vmul.f32 %v3501, 10.0
    %v3630 = vmul.f32 %v3502, 10.0
    %v3631 = vmul.f32 %v3503, 10.0
    %v3632 = vmul.f32 %v3504, 10.0
    %v3633 = vmul.f32 %v3505, 10.0
    %v3634 = vmul.f32 %v3506, 10.0
    %v3635 = vmul.f32 %v3507, 10.0
    %v3636 = vmul.f32 %v3508, 10.0
    %v3637 = vmul.f32 %v3509, 10.0
    %v3638 = vmul.f32 %v3510, 10.0
    %v3639 = vmul.f32 %v3511, 10.0
    %v3640 = vmul.f32 %v3512, 10.0
    %v3641 = vmul.f32 %v3513, 10.0
    %v3642 = vmul.f32 %v3514, 10.0
    %v3643 = vmul.f32 %v3515, 10.0
    %v3644 = vmul.f32 %v3516, 10.0
    %v3645 = vmul.f32 %v3517, 10.0
    %v3646 = vmul.f32 %v3518, 10.0
    %v3647 = vmul.f32 %v3519, 10.0
    %v3648 = vmul.f32 %v3520, 10.0
    %v3649 = vmul.f32 %v3521, 10.0
    %v3650 = vmul.f32 %v3522, 10.0
    %v3651 = vmul.f32 %v3523, 10.0
    %v3652 = vmul.f32 %v3524, 10.0
    %v3653 = vmul.f32 %v3525, 10.0
    %v3654 = vmul.f32 %v3526, 10.0
    %v3655 = vmul.f32 %v3527, 10.0
    %v3656 = vmul.f32 %v3528, 10.0
    %v3657 = vmul.f32 %v3529, 10.0
    %v3658 = vmul.f32 %v3530, 10.0
    %v3659 = vmul.f32 %v3531, 10.0
    %v3660 = vmul.f32 %v3532, 10.0
    %v3661 = vmul.f32 %v3533, 10.0
    %v3662 = vmul.f32 %v3534, 10.0
    %v3663 = vmul.f32 %v3535, 10.0
    %v3664 = vmul.f32 %v3536, 10.0
    %v3665 = vmul.f32 %v3537, 10.0
    %v3666 = vmul.f32 %v3538, 10.0
    %v3667 = vmul.f32 %v3539, 10.0
    %v3668 = vmul.f32 %v3540, 10.0
    %v3669 = vmul.f32 %v3541, 10.0
    %v3670 = vmul.f32 %v3542, 10.0
    %v3671 = vmul.f32 %v3543, 10.0
    %v3672 = vmul.f32 %v3544, 10.0
    %v3673 = vmul.f32 %v3545, 10.0
    %v3674 = vmul.f32 %v3546, 10.0
    %v3675 = vmul.f32 %v3547, 10.0
    %v3676 = vmul.f32 %v3548, 10.0
    %v3677 = vmul.f32 %v3549, 10.0
    %v3678 = vmul.f32 %v3550, 10.0
    %v3679 = vmul.f32 %v3551, 10.0
    %v3680 = vmul.f32 %v3552, 10.0
    %v3681 = vmul.f32 %v3553, 10.0
    %v3682 = vmul.f32 %v3554, 10.0
    %v3683 = vmul.f32 %v3555, 10.0
    %v3684 = vmul.f32 %v3556, 10.0
    %v3685 = vmul.f32 %v3557, 10.0
    %v3686 = vmul.f32 %v3558, 10.0
    %v3687 = vmul.f32 %v3559, 10.0
    %v3688 = vmul.f32 %v3560, 10.0
    %v3689 = vmul.f32 %v3561, 10.0
    %v3690 = vmul.f32 %v3562, 10.0
    %v3691 = vmul.f32 %v3563, 10.0
    %v3692 = vmul.f32 %v3564, 10.0
    %v3693 = vmul.f32 %v3565, 10.0
    %v3694 = vmul.f32 %v3566, 10.0
    %v3695 = vmul.f32 %v3567, 10.0
    %v3696 = vmul.f32 %v3568, 10.0
    %v3697 = vmul.f32 %v3569, 10.0
    %v3698 = vmul.f32 %v3570, 10.0
    %v3699 = vmul.f32 %v3571, 10.0
    %v3700 = vmul.f32 %v3572, 10.0
    %v3701 = vmul.f32 %v3573, 10.0
    %v3702 = vmul.f32 %v3574, 10.0
    %v3703 = vmul.f32 %v3575, 10.0
    %v3704 = vmul.f32 %v3576, 10.0
    %v3705 = vmul.f32 %v3577, 10.0
    %v3706 = vmul.f32 %v3578, 10.0
    %v3707 = vmul.f32 %v3579, 10.0
    %v3708 = vmul.f32 %v3580, 10.0
    %v3709 = vmul.f32 %v3581, 10.0
    %v3710 = vmul.f32 %v3582, 10.0
    %v3711 = vmul.f32 %v3583, 10.0
    %v3712 = vmul.f32 %v3584, 10.0
    %v3713 = vmul.f32 %v3585, 10.0
    %v3714 = vmul.f32 %v3586, 10.0
    %v3715 = vmul.f32 %v3587, 10.0
    %v3716 = vmul.f32 %v3588, 10.0
    %v3717 = vmul.f32 %v3589, 10.0
    %v3718 = vmul.f32 %v3590, 10.0
    %v3719 = vmul.f32 %v3591, 10.0
    %v3720 = vmul.f32 %v3592, 10.0
    %v3721 = vmul.f32 %v3593, 10.0
    %v3722 = vmul.f32 %v3594, 10.0
    %v3723 = vmul.f32 %v3595, 10.0
    %v3724 = vmul.f32 %v3596, 10.0
    %v3725 = vmul.f32 %v3597, 10.0
    %v3726 = vmul.f32 %v3598, 10.0
    %v3727 = vmul.f32 %v3599, 10.0
    %v3728 = vmul.f32 %v3600, 10.0
    %v3729 = vmul.f32 %v3601, 10.0
    %v3730 = vmul.f32 %v3602, 10.0
    %v3731 = vmul.f32 %v3603, 10.0
    %v3732 = vmul.f32 %v3604, 10.0
    %v3733 = vmul.f32 %v3605, 10.0
    %v3734 = vmul.f32 %v3606, 10.0
    %v3735 = vmul.f32 %v3607, 10.0
    %v3736 = vmul.f32 %v3608, 10.0
    %v3737 = vmul.f32 %v3609, 10.0
    %v3738 = vmul.f32 %v3610, 10.0
    %v3739 = vmul.f32 %v3611, 10.0
    %v3740 = vmul.f32 %v3612, 10.0
    %v3741 = vmul.f32 %v3613, 10.0
    %v3742 = vmul.f32 %v3614, 10.0
    %v3743 = vmul.f32 %v3615, 10.0
    %v3744 = vmul.f32 %v3616, 10.0
    %v3745 = vmul.f32 %v3617, 10.0
    %v3746 = vmul.f32 %v3618, 10.0
    %v3747 = vmul.f32 %v3619, 10.0
    %v3748 = vmul.f32 %v3620, 10.0
    %v3749 = vmul.f32 %v3621, 10.0
    %v3750 = vmul.f32 %v3622, 10.0
    %v3751 = vmul.f32 %v3623, 10.0
    %v3752 = vmul.f32 %v3624, 10.0
    %v3753 = vmul.f32 %v3625, 10.0
    %v3754 = vmul.f32 %v3626, 10.0
    %vm3755 = vcmp.gt.f32.partialorder %v256, 0.5
    %v3884 = vlaneseq
    %v3885 = vand.u32 %v3884, 127
    %v3886 = vlaneseq
    %v3887 = vshrl.u32 %v3886, 7
    %v3888 = vsub.s32 %v3885, %v3887
    %v3889 = vrot.slane %v3627, %v3888
    %v3890 = vadd.s32 %v3885, 4294967288
    %v3891 = vlaneseq
    %v3892 = vshrl.u32 %v3891, 7
    %v3893 = vsub.s32 %v3890, %v3892
    %v3894 = vrot.slane %v3628, %v3893
    %vm3895 = vcmask 130112
    %v3896 = vsel %vm3895, %v3894, %v3889
    %v3897 = vadd.s32 %v3885, 4294967280
    %v3898 = vlaneseq
    %v3899 = vshrl.u32 %v3898, 7
    %v3900 = vsub.s32 %v3897, %v3899
    %v3901 = vrot.slane %v3629, %v3900
    %vm3902 = vcmask 195712
    %v3903 = vsel %vm3902, %v3901, %v3896
    %v3904 = vadd.s32 %v3885, 4294967272
    %v3905 = vlaneseq
    %v3906 = vshrl.u32 %v3905, 7
    %v3907 = vsub.s32 %v3904, %v3906
    %v3908 = vrot.slane %v3630, %v3907
    %vm3909 = vcmask 261312
    %v3910 = vsel %vm3909, %v3908, %v3903
    %v3911 = vadd.s32 %v3885, 4294967264
    %v3912 = vlaneseq
    %v3913 = vshrl.u32 %v3912, 7
    %v3914 = vsub.s32 %v3911, %v3913
    %v3915 = vrot.slane %v3631, %v3914
    %vm3916 = vcmask 326912
    %v3917 = vsel %vm3916, %v3915, %v3910
    %v3918 = vadd.s32 %v3885, 4294967256
    %v3919 = vlaneseq
    %v3920 = vshrl.u32 %v3919, 7
    %v3921 = vsub.s32 %v3918, %v3920
    %v3922 = vrot.slane %v3632, %v3921
    %vm3923 = vcmask 392512
    %v3924 = vsel %vm3923, %v3922, %v3917
    %v3925 = vadd.s32 %v3885, 4294967248
    %v3926 = vlaneseq
    %v3927 = vshrl.u32 %v3926, 7
    %v3928 = vsub.s32 %v3925, %v3927
    %v3929 = vrot.slane %v3633, %v3928
    %vm3930 = vcmask 458112
    %v3931 = vsel %vm3930, %v3929, %v3924
    %v3932 = vadd.s32 %v3885, 4294967240
    %v3933 = vlaneseq
    %v3934 = vshrl.u32 %v3933, 7
    %v3935 = vsub.s32 %v3932, %v3934
    %v3936 = vrot.slane %v3634, %v3935
    %vm3937 = vcmask 523712
    %v3938 = vsel %vm3937, %v3936, %v3931
    %v3939 = vadd.s32 %v3885, 4294967232
    %v3940 = vlaneseq
    %v3941 = vshrl.u32 %v3940, 7
    %v3942 = vsub.s32 %v3939, %v3941
    %v3943 = vrot.slane %v3635, %v3942
    %vm3944 = vcmask 589312
    %v3945 = vsel %vm3944, %v3943, %v3938
    %v3946 = vadd.s32 %v3885, 4294967224
    %v3947 = vlaneseq
    %v3948 = vshrl.u32 %v3947, 7
    %v3949 = vsub.s32 %v3946, %v3948
    %v3950 = vrot.slane %v3636, %v3949
    %vm3951 = vcmask 654912
    %v3952 = vsel %vm3951, %v3950, %v3945
    %v3953 = vadd.s32 %v3885, 4294967216
    %v3954 = vlaneseq
    %v3955 = vshrl.u32 %v3954, 7
    %v3956 = vsub.s32 %v3953, %v3955
    %v3957 = vrot.slane %v3637, %v3956
    %vm3958 = vcmask 720512
    %v3959 = vsel %vm3958, %v3957, %v3952
    %v3960 = vadd.s32 %v3885, 4294967208
    %v3961 = vlaneseq
    %v3962 = vshrl.u32 %v3961, 7
    %v3963 = vsub.s32 %v3960, %v3962
    %v3964 = vrot.slane %v3638, %v3963
    %vm3965 = vcmask 786112
    %v3966 = vsel %vm3965, %v3964, %v3959
    %v3967 = vadd.s32 %v3885, 4294967200
    %v3968 = vlaneseq
    %v3969 = vshrl.u32 %v3968, 7
    %v3970 = vsub.s32 %v3967, %v3969
    %v3971 = vrot.slane %v3639, %v3970
    %vm3972 = vcmask 851712
    %v3973 = vsel %vm3972, %v3971, %v3966
    %v3974 = vadd.s32 %v3885, 4294967192
    %v3975 = vlaneseq
    %v3976 = vshrl.u32 %v3975, 7
    %v3977 = vsub.s32 %v3974, %v3976
    %v3978 = vrot.slane %v3640, %v3977
    %vm3979 = vcmask 917312
    %v3980 = vsel %vm3979, %v3978, %v3973
    %v3981 = vadd.s32 %v3885, 4294967184
    %v3982 = vlaneseq
    %v3983 = vshrl.u32 %v3982, 7
    %v3984 = vsub.s32 %v3981, %v3983
    %v3985 = vrot.slane %v3641, %v3984
    %vm3986 = vcmask 982912
    %v3987 = vsel %vm3986, %v3985, %v3980
    %v3988 = vadd.s32 %v3885, 4294967176
    %v3989 = vlaneseq
    %v3990 = vshrl.u32 %v3989, 7
    %v3991 = vsub.s32 %v3988, %v3990
    %v3992 = vrot.slane %v3642, %v3991
    %vm3993 = vcmask 1048512
    %v3994 = vsel %vm3993, %v3992, %v3987
    %v3995 = vlaneseq
    %v3996 = vshrl.u32 %v3995, 7
    %v3997 = vsub.s32 %v3885, %v3996
    %v3998 = vrot.slane %v3643, %v3997
    %v3999 = vlaneseq
    %v4000 = vshrl.u32 %v3999, 7
    %v4001 = vsub.s32 %v3890, %v4000
    %v4002 = vrot.slane %v3644, %v4001
    %v4003 = vsel %vm3895, %v4002, %v3998
    %v4004 = vlaneseq
    %v4005 = vshrl.u32 %v4004, 7
    %v4006 = vsub.s32 %v3897, %v4005
    %v4007 = vrot.slane %v3645, %v4006
    %v4008 = vsel %vm3902, %v4007, %v4003
    %v4009 = vlaneseq
    %v4010 = vshrl.u32 %v4009, 7
    %v4011 = vsub.s32 %v3904, %v4010
    %v4012 = vrot.slane %v3646, %v4011
    %v4013 = vsel %vm3909, %v4012, %v4008
    %v4014 = vlaneseq
    %v4015 = vshrl.u32 %v4014, 7
    %v4016 = vsub.s32 %v3911, %v4015
    %v4017 = vrot.slane %v3647, %v4016
    %v4018 = vsel %vm3916, %v4017, %v4013
    %v4019 = vlaneseq
    %v4020 = vshrl.u32 %v4019, 7
    %v4021 = vsub.s32 %v3918, %v4020
    %v4022 = vrot.slane %v3648, %v4021
    %v4023 = vsel %vm3923, %v4022, %v4018
    %v4024 = vlaneseq
    %v4025 = vshrl.u32 %v4024, 7
    %v4026 = vsub.s32 %v3925, %v4025
    %v4027 = vrot.slane %v3649, %v4026
    %v4028 = vsel %vm3930, %v4027, %v4023
    %v4029 = vlaneseq
    %v4030 = vshrl.u32 %v4029, 7
    %v4031 = vsub.s32 %v3932, %v4030
    %v4032 = vrot.slane %v3650, %v4031
    %v4033 = vsel %vm3937, %v4032, %v4028
    %v4034 = vlaneseq
    %v4035 = vshrl.u32 %v4034, 7
    %v4036 = vsub.s32 %v3939, %v4035
    %v4037 = vrot.slane %v3651, %v4036
    %v4038 = vsel %vm3944, %v4037, %v4033
    %v4039 = vlaneseq
    %v4040 = vshrl.u32 %v4039, 7
    %v4041 = vsub.s32 %v3946, %v4040
    %v4042 = vrot.slane %v3652, %v4041
    %v4043 = vsel %vm3951, %v4042, %v4038
    %v4044 = vlaneseq
    %v4045 = vshrl.u32 %v4044, 7
    %v4046 = vsub.s32 %v3953, %v4045
    %v4047 = vrot.slane %v3653, %v4046
    %v4048 = vsel %vm3958, %v4047, %v4043
    %v4049 = vlaneseq
    %v4050 = vshrl.u32 %v4049, 7
    %v4051 = vsub.s32 %v3960, %v4050
    %v4052 = vrot.slane %v3654, %v4051
    %v4053 = vsel %vm3965, %v4052, %v4048
    %v4054 = vlaneseq
    %v4055 = vshrl.u32 %v4054, 7
    %v4056 = vsub.s32 %v3967, %v4055
    %v4057 = vrot.slane %v3655, %v4056
    %v4058 = vsel %vm3972, %v4057, %v4053
    %v4059 = vlaneseq
    %v4060 = vshrl.u32 %v4059, 7
    %v4061 = vsub.s32 %v3974, %v4060
    %v4062 = vrot.slane %v3656, %v4061
    %v4063 = vsel %vm3979, %v4062, %v4058
    %v4064 = vlaneseq
    %v4065 = vshrl.u32 %v4064, 7
    %v4066 = vsub.s32 %v3981, %v4065
    %v4067 = vrot.slane %v3657, %v4066
    %v4068 = vsel %vm3986, %v4067, %v4063
    %v4069 = vlaneseq
    %v4070 = vshrl.u32 %v4069, 7
    %v4071 = vsub.s32 %v3988, %v4070
    %v4072 = vrot.slane %v3658, %v4071
    %v4073 = vsel %vm3993, %v4072, %v4068
    %v4074 = vlaneseq
    %v4075 = vshrl.u32 %v4074, 7
    %v4076 = vsub.s32 %v3885, %v4075
    %v4077 = vrot.slane %v3659, %v4076
    %v4078 = vlaneseq
    %v4079 = vshrl.u32 %v4078, 7
    %v4080 = vsub.s32 %v3890, %v4079
    %v4081 = vrot.slane %v3660, %v4080
    %v4082 = vsel %vm3895, %v4081, %v4077
    %v4083 = vlaneseq
    %v4084 = vshrl.u32 %v4083, 7
    %v4085 = vsub.s32 %v3897, %v4084
    %v4086 = vrot.slane %v3661, %v4085
    %v4087 = vsel %vm3902, %v4086, %v4082
    %v4088 = vlaneseq
    %v4089 = vshrl.u32 %v4088, 7
    %v4090 = vsub.s32 %v3904, %v4089
    %v4091 = vrot.slane %v3662, %v4090
    %v4092 = vsel %vm3909, %v4091, %v4087
    %v4093 = vlaneseq
    %v4094 = vshrl.u32 %v4093, 7
    %v4095 = vsub.s32 %v3911, %v4094
    %v4096 = vrot.slane %v3663, %v4095
    %v4097 = vsel %vm3916, %v4096, %v4092
    %v4098 = vlaneseq
    %v4099 = vshrl.u32 %v4098, 7
    %v4100 = vsub.s32 %v3918, %v4099
    %v4101 = vrot.slane %v3664, %v4100
    %v4102 = vsel %vm3923, %v4101, %v4097
    %v4103 = vlaneseq
    %v4104 = vshrl.u32 %v4103, 7
    %v4105 = vsub.s32 %v3925, %v4104
    %v4106 = vrot.slane %v3665, %v4105
    %v4107 = vsel %vm3930, %v4106, %v4102
    %v4108 = vlaneseq
    %v4109 = vshrl.u32 %v4108, 7
    %v4110 = vsub.s32 %v3932, %v4109
    %v4111 = vrot.slane %v3666, %v4110
    %v4112 = vsel %vm3937, %v4111, %v4107
    %v4113 = vlaneseq
    %v4114 = vshrl.u32 %v4113, 7
    %v4115 = vsub.s32 %v3939, %v4114
    %v4116 = vrot.slane %v3667, %v4115
    %v4117 = vsel %vm3944, %v4116, %v4112
    %v4118 = vlaneseq
    %v4119 = vshrl.u32 %v4118, 7
    %v4120 = vsub.s32 %v3946, %v4119
    %v4121 = vrot.slane %v3668, %v4120
    %v4122 = vsel %vm3951, %v4121, %v4117
    %v4123 = vlaneseq
    %v4124 = vshrl.u32 %v4123, 7
    %v4125 = vsub.s32 %v3953, %v4124
    %v4126 = vrot.slane %v3669, %v4125
    %v4127 = vsel %vm3958, %v4126, %v4122
    %v4128 = vlaneseq
    %v4129 = vshrl.u32 %v4128, 7
    %v4130 = vsub.s32 %v3960, %v4129
    %v4131 = vrot.slane %v3670, %v4130
    %v4132 = vsel %vm3965, %v4131, %v4127
    %v4133 = vlaneseq
    %v4134 = vshrl.u32 %v4133, 7
    %v4135 = vsub.s32 %v3967, %v4134
    %v4136 = vrot.slane %v3671, %v4135
    %v4137 = vsel %vm3972, %v4136, %v4132
    %v4138 = vlaneseq
    %v4139 = vshrl.u32 %v4138, 7
    %v4140 = vsub.s32 %v3974, %v4139
    %v4141 = vrot.slane %v3672, %v4140
    %v4142 = vsel %vm3979, %v4141, %v4137
    %v4143 = vlaneseq
    %v4144 = vshrl.u32 %v4143, 7
    %v4145 = vsub.s32 %v3981, %v4144
    %v4146 = vrot.slane %v3673, %v4145
    %v4147 = vsel %vm3986, %v4146, %v4142
    %v4148 = vlaneseq
    %v4149 = vshrl.u32 %v4148, 7
    %v4150 = vsub.s32 %v3988, %v4149
    %v4151 = vrot.slane %v3674, %v4150
    %v4152 = vsel %vm3993, %v4151, %v4147
    %v4153 = vlaneseq
    %v4154 = vshrl.u32 %v4153, 7
    %v4155 = vsub.s32 %v3885, %v4154
    %v4156 = vrot.slane %v3675, %v4155
    %v4157 = vlaneseq
    %v4158 = vshrl.u32 %v4157, 7
    %v4159 = vsub.s32 %v3890, %v4158
    %v4160 = vrot.slane %v3676, %v4159
    %v4161 = vsel %vm3895, %v4160, %v4156
    %v4162 = vlaneseq
    %v4163 = vshrl.u32 %v4162, 7
    %v4164 = vsub.s32 %v3897, %v4163
    %v4165 = vrot.slane %v3677, %v4164
    %v4166 = vsel %vm3902, %v4165, %v4161
    %v4167 = vlaneseq
    %v4168 = vshrl.u32 %v4167, 7
    %v4169 = vsub.s32 %v3904, %v4168
    %v4170 = vrot.slane %v3678, %v4169
    %v4171 = vsel %vm3909, %v4170, %v4166
    %v4172 = vlaneseq
    %v4173 = vshrl.u32 %v4172, 7
    %v4174 = vsub.s32 %v3911, %v4173
    %v4175 = vrot.slane %v3679, %v4174
    %v4176 = vsel %vm3916, %v4175, %v4171
    %v4177 = vlaneseq
    %v4178 = vshrl.u32 %v4177, 7
    %v4179 = vsub.s32 %v3918, %v4178
    %v4180 = vrot.slane %v3680, %v4179
    %v4181 = vsel %vm3923, %v4180, %v4176
    %v4182 = vlaneseq
    %v4183 = vshrl.u32 %v4182, 7
    %v4184 = vsub.s32 %v3925, %v4183
    %v4185 = vrot.slane %v3681, %v4184
    %v4186 = vsel %vm3930, %v4185, %v4181
    %v4187 = vlaneseq
    %v4188 = vshrl.u32 %v4187, 7
    %v4189 = vsub.s32 %v3932, %v4188
    %v4190 = vrot.slane %v3682, %v4189
    %v4191 = vsel %vm3937, %v4190, %v4186
    %v4192 = vlaneseq
    %v4193 = vshrl.u32 %v4192, 7
    %v4194 = vsub.s32 %v3939, %v4193
    %v4195 = vrot.slane %v3683, %v4194
    %v4196 = vsel %vm3944, %v4195, %v4191
    %v4197 = vlaneseq
    %v4198 = vshrl.u32 %v4197, 7
    %v4199 = vsub.s32 %v3946, %v4198
    %v4200 = vrot.slane %v3684, %v4199
    %v4201 = vsel %vm3951, %v4200, %v4196
    %v4202 = vlaneseq
    %v4203 = vshrl.u32 %v4202, 7
    %v4204 = vsub.s32 %v3953, %v4203
    %v4205 = vrot.slane %v3685, %v4204
    %v4206 = vsel %vm3958, %v4205, %v4201
    %v4207 = vlaneseq
    %v4208 = vshrl.u32 %v4207, 7
    %v4209 = vsub.s32 %v3960, %v4208
    %v4210 = vrot.slane %v3686, %v4209
    %v4211 = vsel %vm3965, %v4210, %v4206
    %v4212 = vlaneseq
    %v4213 = vshrl.u32 %v4212, 7
    %v4214 = vsub.s32 %v3967, %v4213
    %v4215 = vrot.slane %v3687, %v4214
    %v4216 = vsel %vm3972, %v4215, %v4211
    %v4217 = vlaneseq
    %v4218 = vshrl.u32 %v4217, 7
    %v4219 = vsub.s32 %v3974, %v4218
    %v4220 = vrot.slane %v3688, %v4219
    %v4221 = vsel %vm3979, %v4220, %v4216
    %v4222 = vlaneseq
    %v4223 = vshrl.u32 %v4222, 7
    %v4224 = vsub.s32 %v3981, %v4223
    %v4225 = vrot.slane %v3689, %v4224
    %v4226 = vsel %vm3986, %v4225, %v4221
    %v4227 = vlaneseq
    %v4228 = vshrl.u32 %v4227, 7
    %v4229 = vsub.s32 %v3988, %v4228
    %v4230 = vrot.slane %v3690, %v4229
    %v4231 = vsel %vm3993, %v4230, %v4226
    %v4232 = vlaneseq
    %v4233 = vshrl.u32 %v4232, 7
    %v4234 = vsub.s32 %v3885, %v4233
    %v4235 = vrot.slane %v3691, %v4234
    %v4236 = vlaneseq
    %v4237 = vshrl.u32 %v4236, 7
    %v4238 = vsub.s32 %v3890, %v4237
    %v4239 = vrot.slane %v3692, %v4238
    %v4240 = vsel %vm3895, %v4239, %v4235
    %v4241 = vlaneseq
    %v4242 = vshrl.u32 %v4241, 7
    %v4243 = vsub.s32 %v3897, %v4242
    %v4244 = vrot.slane %v3693, %v4243
    %v4245 = vsel %vm3902, %v4244, %v4240
    %v4246 = vlaneseq
    %v4247 = vshrl.u32 %v4246, 7
    %v4248 = vsub.s32 %v3904, %v4247
    %v4249 = vrot.slane %v3694, %v4248
    %v4250 = vsel %vm3909, %v4249, %v4245
    %v4251 = vlaneseq
    %v4252 = vshrl.u32 %v4251, 7
    %v4253 = vsub.s32 %v3911, %v4252
    %v4254 = vrot.slane %v3695, %v4253
    %v4255 = vsel %vm3916, %v4254, %v4250
    %v4256 = vlaneseq
    %v4257 = vshrl.u32 %v4256, 7
    %v4258 = vsub.s32 %v3918, %v4257
    %v4259 = vrot.slane %v3696, %v4258
    %v4260 = vsel %vm3923, %v4259, %v4255
    %v4261 = vlaneseq
    %v4262 = vshrl.u32 %v4261, 7
    %v4263 = vsub.s32 %v3925, %v4262
    %v4264 = vrot.slane %v3697, %v4263
    %v4265 = vsel %vm3930, %v4264, %v4260
    %v4266 = vlaneseq
    %v4267 = vshrl.u32 %v4266, 7
    %v4268 = vsub.s32 %v3932, %v4267
    %v4269 = vrot.slane %v3698, %v4268
    %v4270 = vsel %vm3937, %v4269, %v4265
    %v4271 = vlaneseq
    %v4272 = vshrl.u32 %v4271, 7
    %v4273 = vsub.s32 %v3939, %v4272
    %v4274 = vrot.slane %v3699, %v4273
    %v4275 = vsel %vm3944, %v4274, %v4270
    %v4276 = vlaneseq
    %v4277 = vshrl.u32 %v4276, 7
    %v4278 = vsub.s32 %v3946, %v4277
    %v4279 = vrot.slane %v3700, %v4278
    %v4280 = vsel %vm3951, %v4279, %v4275
    %v4281 = vlaneseq
    %v4282 = vshrl.u32 %v4281, 7
    %v4283 = vsub.s32 %v3953, %v4282
    %v4284 = vrot.slane %v3701, %v4283
    %v4285 = vsel %vm3958, %v4284, %v4280
    %v4286 = vlaneseq
    %v4287 = vshrl.u32 %v4286, 7
    %v4288 = vsub.s32 %v3960, %v4287
    %v4289 = vrot.slane %v3702, %v4288
    %v4290 = vsel %vm3965, %v4289, %v4285
    %v4291 = vlaneseq
    %v4292 = vshrl.u32 %v4291, 7
    %v4293 = vsub.s32 %v3967, %v4292
    %v4294 = vrot.slane %v3703, %v4293
    %v4295 = vsel %vm3972, %v4294, %v4290
    %v4296 = vlaneseq
    %v4297 = vshrl.u32 %v4296, 7
    %v4298 = vsub.s32 %v3974, %v4297
    %v4299 = vrot.slane %v3704, %v4298
    %v4300 = vsel %vm3979, %v4299, %v4295
    %v4301 = vlaneseq
    %v4302 = vshrl.u32 %v4301, 7
    %v4303 = vsub.s32 %v3981, %v4302
    %v4304 = vrot.slane %v3705, %v4303
    %v4305 = vsel %vm3986, %v4304, %v4300
    %v4306 = vlaneseq
    %v4307 = vshrl.u32 %v4306, 7
    %v4308 = vsub.s32 %v3988, %v4307
    %v4309 = vrot.slane %v3706, %v4308
    %v4310 = vsel %vm3993, %v4309, %v4305
    %v4311 = vlaneseq
    %v4312 = vshrl.u32 %v4311, 7
    %v4313 = vsub.s32 %v3885, %v4312
    %v4314 = vrot.slane %v3707, %v4313
    %v4315 = vlaneseq
    %v4316 = vshrl.u32 %v4315, 7
    %v4317 = vsub.s32 %v3890, %v4316
    %v4318 = vrot.slane %v3708, %v4317
    %v4319 = vsel %vm3895, %v4318, %v4314
    %v4320 = vlaneseq
    %v4321 = vshrl.u32 %v4320, 7
    %v4322 = vsub.s32 %v3897, %v4321
    %v4323 = vrot.slane %v3709, %v4322
    %v4324 = vsel %vm3902, %v4323, %v4319
    %v4325 = vlaneseq
    %v4326 = vshrl.u32 %v4325, 7
    %v4327 = vsub.s32 %v3904, %v4326
    %v4328 = vrot.slane %v3710, %v4327
    %v4329 = vsel %vm3909, %v4328, %v4324
    %v4330 = vlaneseq
    %v4331 = vshrl.u32 %v4330, 7
    %v4332 = vsub.s32 %v3911, %v4331
    %v4333 = vrot.slane %v3711, %v4332
    %v4334 = vsel %vm3916, %v4333, %v4329
    %v4335 = vlaneseq
    %v4336 = vshrl.u32 %v4335, 7
    %v4337 = vsub.s32 %v3918, %v4336
    %v4338 = vrot.slane %v3712, %v4337
    %v4339 = vsel %vm3923, %v4338, %v4334
    %v4340 = vlaneseq
    %v4341 = vshrl.u32 %v4340, 7
    %v4342 = vsub.s32 %v3925, %v4341
    %v4343 = vrot.slane %v3713, %v4342
    %v4344 = vsel %vm3930, %v4343, %v4339
    %v4345 = vlaneseq
    %v4346 = vshrl.u32 %v4345, 7
    %v4347 = vsub.s32 %v3932, %v4346
    %v4348 = vrot.slane %v3714, %v4347
    %v4349 = vsel %vm3937, %v4348, %v4344
    %v4350 = vlaneseq
    %v4351 = vshrl.u32 %v4350, 7
    %v4352 = vsub.s32 %v3939, %v4351
    %v4353 = vrot.slane %v3715, %v4352
    %v4354 = vsel %vm3944, %v4353, %v4349
    %v4355 = vlaneseq
    %v4356 = vshrl.u32 %v4355, 7
    %v4357 = vsub.s32 %v3946, %v4356
    %v4358 = vrot.slane %v3716, %v4357
    %v4359 = vsel %vm3951, %v4358, %v4354
    %v4360 = vlaneseq
    %v4361 = vshrl.u32 %v4360, 7
    %v4362 = vsub.s32 %v3953, %v4361
    %v4363 = vrot.slane %v3717, %v4362
    %v4364 = vsel %vm3958, %v4363, %v4359
    %v4365 = vlaneseq
    %v4366 = vshrl.u32 %v4365, 7
    %v4367 = vsub.s32 %v3960, %v4366
    %v4368 = vrot.slane %v3718, %v4367
    %v4369 = vsel %vm3965, %v4368, %v4364
    %v4370 = vlaneseq
    %v4371 = vshrl.u32 %v4370, 7
    %v4372 = vsub.s32 %v3967, %v4371
    %v4373 = vrot.slane %v3719, %v4372
    %v4374 = vsel %vm3972, %v4373, %v4369
    %v4375 = vlaneseq
    %v4376 = vshrl.u32 %v4375, 7
    %v4377 = vsub.s32 %v3974, %v4376
    %v4378 = vrot.slane %v3720, %v4377
    %v4379 = vsel %vm3979, %v4378, %v4374
    %v4380 = vlaneseq
    %v4381 = vshrl.u32 %v4380, 7
    %v4382 = vsub.s32 %v3981, %v4381
    %v4383 = vrot.slane %v3721, %v4382
    %v4384 = vsel %vm3986, %v4383, %v4379
    %v4385 = vlaneseq
    %v4386 = vshrl.u32 %v4385, 7
    %v4387 = vsub.s32 %v3988, %v4386
    %v4388 = vrot.slane %v3722, %v4387
    %v4389 = vsel %vm3993, %v4388, %v4384
    %v4390 = vlaneseq
    %v4391 = vshrl.u32 %v4390, 7
    %v4392 = vsub.s32 %v3885, %v4391
    %v4393 = vrot.slane %v3723, %v4392
    %v4394 = vlaneseq
    %v4395 = vshrl.u32 %v4394, 7
    %v4396 = vsub.s32 %v3890, %v4395
    %v4397 = vrot.slane %v3724, %v4396
    %v4398 = vsel %vm3895, %v4397, %v4393
    %v4399 = vlaneseq
    %v4400 = vshrl.u32 %v4399, 7
    %v4401 = vsub.s32 %v3897, %v4400
    %v4402 = vrot.slane %v3725, %v4401
    %v4403 = vsel %vm3902, %v4402, %v4398
    %v4404 = vlaneseq
    %v4405 = vshrl.u32 %v4404, 7
    %v4406 = vsub.s32 %v3904, %v4405
    %v4407 = vrot.slane %v3726, %v4406
    %v4408 = vsel %vm3909, %v4407, %v4403
    %v4409 = vlaneseq
    %v4410 = vshrl.u32 %v4409, 7
    %v4411 = vsub.s32 %v3911, %v4410
    %v4412 = vrot.slane %v3727, %v4411
    %v4413 = vsel %vm3916, %v4412, %v4408
    %v4414 = vlaneseq
    %v4415 = vshrl.u32 %v4414, 7
    %v4416 = vsub.s32 %v3918, %v4415
    %v4417 = vrot.slane %v3728, %v4416
    %v4418 = vsel %vm3923, %v4417, %v4413
    %v4419 = vlaneseq
    %v4420 = vshrl.u32 %v4419, 7
    %v4421 = vsub.s32 %v3925, %v4420
    %v4422 = vrot.slane %v3729, %v4421
    %v4423 = vsel %vm3930, %v4422, %v4418
    %v4424 = vlaneseq
    %v4425 = vshrl.u32 %v4424, 7
    %v4426 = vsub.s32 %v3932, %v4425
    %v4427 = vrot.slane %v3730, %v4426
    %v4428 = vsel %vm3937, %v4427, %v4423
    %v4429 = vlaneseq
    %v4430 = vshrl.u32 %v4429, 7
    %v4431 = vsub.s32 %v3939, %v4430
    %v4432 = vrot.slane %v3731, %v4431
    %v4433 = vsel %vm3944, %v4432, %v4428
    %v4434 = vlaneseq
    %v4435 = vshrl.u32 %v4434, 7
    %v4436 = vsub.s32 %v3946, %v4435
    %v4437 = vrot.slane %v3732, %v4436
    %v4438 = vsel %vm3951, %v4437, %v4433
    %v4439 = vlaneseq
    %v4440 = vshrl.u32 %v4439, 7
    %v4441 = vsub.s32 %v3953, %v4440
    %v4442 = vrot.slane %v3733, %v4441
    %v4443 = vsel %vm3958, %v4442, %v4438
    %v4444 = vlaneseq
    %v4445 = vshrl.u32 %v4444, 7
    %v4446 = vsub.s32 %v3960, %v4445
    %v4447 = vrot.slane %v3734, %v4446
    %v4448 = vsel %vm3965, %v4447, %v4443
    %v4449 = vlaneseq
    %v4450 = vshrl.u32 %v4449, 7
    %v4451 = vsub.s32 %v3967, %v4450
    %v4452 = vrot.slane %v3735, %v4451
    %v4453 = vsel %vm3972, %v4452, %v4448
    %v4454 = vlaneseq
    %v4455 = vshrl.u32 %v4454, 7
    %v4456 = vsub.s32 %v3974, %v4455
    %v4457 = vrot.slane %v3736, %v4456
    %v4458 = vsel %vm3979, %v4457, %v4453
    %v4459 = vlaneseq
    %v4460 = vshrl.u32 %v4459, 7
    %v4461 = vsub.s32 %v3981, %v4460
    %v4462 = vrot.slane %v3737, %v4461
    %v4463 = vsel %vm3986, %v4462, %v4458
    %v4464 = vlaneseq
    %v4465 = vshrl.u32 %v4464, 7
    %v4466 = vsub.s32 %v3988, %v4465
    %v4467 = vrot.slane %v3738, %v4466
    %v4468 = vsel %vm3993, %v4467, %v4463
    %v4469 = vlaneseq
    %v4470 = vshrl.u32 %v4469, 7
    %v4471 = vsub.s32 %v3885, %v4470
    %v4472 = vrot.slane %v3739, %v4471
    %v4473 = vlaneseq
    %v4474 = vshrl.u32 %v4473, 7
    %v4475 = vsub.s32 %v3890, %v4474
    %v4476 = vrot.slane %v3740, %v4475
    %v4477 = vsel %vm3895, %v4476, %v4472
    %v4478 = vlaneseq
    %v4479 = vshrl.u32 %v4478, 7
    %v4480 = vsub.s32 %v3897, %v4479
    %v4481 = vrot.slane %v3741, %v4480
    %v4482 = vsel %vm3902, %v4481, %v4477
    %v4483 = vlaneseq
    %v4484 = vshrl.u32 %v4483, 7
    %v4485 = vsub.s32 %v3904, %v4484
    %v4486 = vrot.slane %v3742, %v4485
    %v4487 = vsel %vm3909, %v4486, %v4482
    %v4488 = vlaneseq
    %v4489 = vshrl.u32 %v4488, 7
    %v4490 = vsub.s32 %v3911, %v4489
    %v4491 = vrot.slane %v3743, %v4490
    %v4492 = vsel %vm3916, %v4491, %v4487
    %v4493 = vlaneseq
    %v4494 = vshrl.u32 %v4493, 7
    %v4495 = vsub.s32 %v3918, %v4494
    %v4496 = vrot.slane %v3744, %v4495
    %v4497 = vsel %vm3923, %v4496, %v4492
    %v4498 = vlaneseq
    %v4499 = vshrl.u32 %v4498, 7
    %v4500 = vsub.s32 %v3925, %v4499
    %v4501 = vrot.slane %v3745, %v4500
    %v4502 = vsel %vm3930, %v4501, %v4497
    %v4503 = vlaneseq
    %v4504 = vshrl.u32 %v4503, 7
    %v4505 = vsub.s32 %v3932, %v4504
    %v4506 = vrot.slane %v3746, %v4505
    %v4507 = vsel %vm3937, %v4506, %v4502
    %v4508 = vlaneseq
    %v4509 = vshrl.u32 %v4508, 7
    %v4510 = vsub.s32 %v3939, %v4509
    %v4511 = vrot.slane %v3747, %v4510
    %v4512 = vsel %vm3944, %v4511, %v4507
    %v4513 = vlaneseq
    %v4514 = vshrl.u32 %v4513, 7
    %v4515 = vsub.s32 %v3946, %v4514
    %v4516 = vrot.slane %v3748, %v4515
    %v4517 = vsel %vm3951, %v4516, %v4512
    %v4518 = vlaneseq
    %v4519 = vshrl.u32 %v4518, 7
    %v4520 = vsub.s32 %v3953, %v4519
    %v4521 = vrot.slane %v3749, %v4520
    %v4522 = vsel %vm3958, %v4521, %v4517
    %v4523 = vlaneseq
    %v4524 = vshrl.u32 %v4523, 7
    %v4525 = vsub.s32 %v3960, %v4524
    %v4526 = vrot.slane %v3750, %v4525
    %v4527 = vsel %vm3965, %v4526, %v4522
    %v4528 = vlaneseq
    %v4529 = vshrl.u32 %v4528, 7
    %v4530 = vsub.s32 %v3967, %v4529
    %v4531 = vrot.slane %v3751, %v4530
    %v4532 = vsel %vm3972, %v4531, %v4527
    %v4533 = vlaneseq
    %v4534 = vshrl.u32 %v4533, 7
    %v4535 = vsub.s32 %v3974, %v4534
    %v4536 = vrot.slane %v3752, %v4535
    %v4537 = vsel %vm3979, %v4536, %v4532
    %v4538 = vlaneseq
    %v4539 = vshrl.u32 %v4538, 7
    %v4540 = vsub.s32 %v3981, %v4539
    %v4541 = vrot.slane %v3753, %v4540
    %v4542 = vsel %vm3986, %v4541, %v4537
    %v4543 = vlaneseq
    %v4544 = vshrl.u32 %v4543, 7
    %v4545 = vsub.s32 %v3988, %v4544
    %v4546 = vrot.slane %v3754, %v4545
    %v4547 = vsel %vm3993, %v4546, %v4542
    %v4548 = vsel %vm2738, %v4073, %v3994
    %v4549 = vsel %vm2740, %v4152, %v4548
    %v4550 = vsel %vm2742, %v4231, %v4549
    %v4551 = vsel %vm2744, %v4310, %v4550
    %v4552 = vsel %vm2746, %v4389, %v4551
    %v4553 = vsel %vm2748, %v4468, %v4552
    %v4554 = vsel %vm2750, %v4547, %v4553
    %v4556 = vsel %vm3755, -inf, %v4554
    %4557 = vst [vmem:[#allocation6] sm:$0xff] %v4556
    // Predicated region
    $region18: #{tpu_custom_call.1} parent=1 // pred_check
      _
    $region19: #{tpu_custom_call.1} parent=1 // pred_check_branch
      %4559 = sbr.rel (0) target = $region21
    $region20: #{tpu_custom_call.1} parent=1 // pred_region
      %s4561 = ssub.s32 128, 128
      %4562 = vsyncadd [#allocation7], %s4561
      %s4564 = sshll.u32 [#allocation6], 4
      %s4565 = int_to_ptr.vmem [resolvable:$true] %s4564
      %4567 = dma.vmem_to_hbm [thread:$0]  %s4565, 128, %s5, [#allocation7]
    $region21: #{tpu_custom_call.1} parent=1 // pred_fallthru
      _
    // Predicated region
    $region22: #{tpu_custom_call.1} parent=1 // pred_check
      _
    $region23: #{tpu_custom_call.1} parent=1 // pred_check_branch
      %4569 = sbr.rel (0) target = $region25
    $region24: #{tpu_custom_call.1} parent=1 // pred_region
      %4570 = dma.done [#allocation7], 128
    $region25: #{tpu_custom_call.1} parent=1 // pred_fallthru
      _
    %4571 = vsyncpa [#allocation7], 1

</llo_original>
